<compile_context>
chip_gen: v7x
topology: tpu7x:2x2x1
jax: 0.10.0
libtpu: 0.0.40
codegen_flags: <defaults>
</compile_context>

<pallas_src>
import functools
import math

import jax
import jax.numpy as jnp
from jax import lax
from jax.experimental import pallas as pl
from jax.experimental.pallas import tpu as pltpu


def _silu(x):
    return x * jax.nn.sigmoid(x)


def _dot(a, b):
    return jnp.dot(a, b, preferred_element_type=jnp.float32)


def dynamics_kernel(
    # initial recurrent state (per batch tile)
    prev_h_ref, prev_s_ref,
    # streamed per-step terms, time-major blocks (TT, TB, F)
    psa_ref,        # bf16 (TT, TB, H)   : action proj for state_action (+bias)
    phao_ref,       # bf16 (TT, TB, 2H)  : [action proj | obs proj] (+biases)
    notdone_ref,    # f32  (TT, TB, 1)
    eps_ref,        # bf16 (TT, TB, 2S)  : [prior noise | posterior noise]
    # recurrent weights (bf16) / biases (f32)
    w_sa_s_ref,                                   # (S, H)
    w_i_all_ref, w_h_ref,                         # (H, L*3H), (L, H, 3H)
    b_rz_ref, b_in_ref, b_hn_ref,                 # (L,1,2H), (L,1,H), (L,1,H)
    w_hh_ref,                                     # (H, 2H)  [prior | post] proj
    w_pr_ref, b_pr_ref, w_po_ref, b_po_ref,       # heads (H,2S)/(1,2S)
    # packed output slab, time-major
    out_ref,                                      # (TT, TB, W_pad) f32
    # VMEM scratch: recurrent carry across time chunks
    h_scr, s_scr,
    *, time_tile, rnn_layers, H, S, pad_cols,
):
    TB = prev_h_ref.shape[0]
    bf16 = jnp.bfloat16
    tchunk = pl.program_id(1)

    # (re)initialize the carry at the first time chunk of every batch tile
    @pl.when(tchunk == 0)
    def _():
        h_scr[...] = prev_h_ref[...]
        s_scr[...] = prev_s_ref[...]

    # Hoist weights and pre-broadcast biases ONCE (outside the recurrent loop;
    # JAX does not CSE broadcast_in_dim inside the loop body).
    w_sa_s = w_sa_s_ref[...]
    w_i_all = w_i_all_ref[...]
    w_hh = w_hh_ref[...]
    w_pr = w_pr_ref[...]
    w_po = w_po_ref[...]
    b_pr = jnp.broadcast_to(b_pr_ref[...], (TB, 2 * S))
    b_po = jnp.broadcast_to(b_po_ref[...], (TB, 2 * S))

    gru = []
    for l in range(rnn_layers):                    # static unroll over layers
        gru.append((
            w_h_ref[l],
            jnp.broadcast_to(b_rz_ref[l], (TB, 2 * H)),   # folded b_i+b_h (r,z)
            jnp.broadcast_to(b_in_ref[l], (TB, H)),
            jnp.broadcast_to(b_hn_ref[l], (TB, H)),
        ))
    zpad = jnp.zeros((TB, pad_cols), jnp.float32) if pad_cols else None

    def step(t, carry):
        h, s = carry                               # f32 carries
        s = s * notdone_ref[t]                     # done masking

        # state_action = SiLU(state @ W_s + [action @ W_a + b]  (precomputed))
        x = _silu(_dot(s.astype(bf16), w_sa_s) + psa_ref[t])

        # input-side gates for ALL layers in one MXU push (x is layer-invariant)
        gi_all = _dot(x.astype(bf16), w_i_all)     # (TB, L*3H): [r|z|n] per layer
        for l, (w_hl, b_rz, b_inl, b_hnl) in enumerate(gru):
            gi = gi_all[:, l * 3 * H:(l + 1) * 3 * H]
            gh = _dot(h.astype(bf16), w_hl)        # (TB, 3H)
            rz = jax.nn.sigmoid(gi[:, :2 * H] + gh[:, :2 * H] + b_rz)
            r = rz[:, :H]
            z = rz[:, H:]
            n = jnp.tanh(gi[:, 2 * H:] + b_inl + r * (gh[:, 2 * H:] + b_hnl))
            h = (1.0 - z) * n + z * h

        # fused prior|posterior hidden projections: one (H,2H) matmul + SiLU
        hh = _silu(_dot(h.astype(bf16), w_hh) + phao_ref[t])   # (TB, 2H)
        pr = _dot(hh[:, :H].astype(bf16), w_pr) + b_pr         # (TB,2S) [mu|lv]
        po = _dot(hh[:, H:].astype(bf16), w_po) + b_po

        # exp(softplus(x)) == 1 + exp(x)  (exact)
        eps = eps_ref[t]
        prior_state = pr[:, :S] + (1.0 + jnp.exp(pr[:, S:])) * eps[:, :S]
        post_state = po[:, :S] + (1.0 + jnp.exp(po[:, S:])) * eps[:, S:]

        # single lane-dense packed store per step
        pieces = [h, pr, po, prior_state, post_state]
        if zpad is not None:
            pieces.append(zpad)
        out_ref[t] = jnp.concatenate(pieces, axis=-1)
        return h, post_state                       # next step uses posterior

    unroll = time_tile if time_tile <= 8 else 2
    h_fin, s_fin = lax.fori_loop(0, time_tile, step,
                                 (h_scr[...], s_scr[...]), unroll=unroll)
    h_scr[...] = h_fin                             # carry to next time chunk
    s_scr[...] = s_fin
    # TODO(synk): observations=None / dones=None branches of the torch forward
    # are not implemented; this kernel covers the (obs, dones) path only.


def init_params(key, hidden_dim, state_dim, embedding_dim, action_dim, rnn_layers):
    """Synthetic weights (PyTorch-style uniform), rounded to bf16-representable
    values since the kernel carries weights in bfloat16."""
    keys = iter(jax.random.split(key, 64))

    def u(shape, fan_in):
        bound = 1.0 / math.sqrt(fan_in)
        w = jax.random.uniform(next(keys), shape, jnp.float32, -bound, bound)
        return w.astype(jnp.bfloat16).astype(jnp.float32)

    H, S, E, A = hidden_dim, state_dim, embedding_dim, action_dim
    w_sa_s = u((S, H), S + A); w_sa_a = u((A, H), S + A); b_sa = u((1, H), S + A)
    gw = lambda: u((rnn_layers, H, H), H)
    gb = lambda: u((rnn_layers, 1, H), H)
    w_ir, w_iz, w_in = gw(), gw(), gw()
    w_hr, w_hz, w_hn = gw(), gw(), gw()
    b_ir, b_iz, b_in = gb(), gb(), gb()
    b_hr, b_hz, b_hn = gb(), gb(), gb()
    w_ha_h = u((H, H), A + H); w_ha_a = u((A, H), A + H); b_ha = u((1, H), A + H)
    w_pr_m = u((H, S), H); w_pr_lv = u((H, S), H)
    b_pr_m = u((1, S), H); b_pr_lv = u((1, S), H)
    w_ho_h = u((H, H), H + E); w_ho_e = u((E, H), H + E); b_ho = u((1, H), H + E)
    w_po_m = u((H, S), H); w_po_lv = u((H, S), H)
    b_po_m = u((1, S), H); b_po_lv = u((1, S), H)

    return (w_sa_s, w_sa_a, b_sa,
            w_ir, w_iz, w_in, w_hr, w_hz, w_hn,
            b_ir, b_iz, b_in, b_hr, b_hz, b_hn,
            w_ha_h, w_ha_a, b_ha,
            w_pr_m, w_pr_lv, b_pr_m, b_pr_lv,
            w_ho_h, w_ho_e, b_ho,
            w_po_m, w_po_lv, b_po_m, b_po_lv)


def dynamics_predictor(prev_hidden, prev_state, actions, observations, dones,
                       eps_prior, eps_post, params, rnn_layers=1,
                       batch_tile=None, time_tile=None):
    (w_sa_s, w_sa_a, b_sa,
     w_ir, w_iz, w_in, w_hr, w_hz, w_hn,
     b_ir, b_iz, b_in, b_hr, b_hz, b_hn,
     w_ha_h, w_ha_a, b_ha,
     w_pr_m, w_pr_lv, b_pr_m, b_pr_lv,
     w_ho_h, w_ho_e, b_ho,
     w_po_m, w_po_lv, b_po_m, b_po_lv) = params

    B, T, _ = actions.shape
    H = prev_hidden.shape[-1]
    S = prev_state.shape[-1]
    n_steps = T - 1
    f32, bf16 = jnp.float32, jnp.bfloat16

    # ---- tiling -----------------------------------------------------------
    # batch_tile: set to B//2 (multiple of 8) on v7x to use both TensorCores.
    TB = B if batch_tile is None else batch_tile
    assert B % TB == 0 and (TB == B or TB % 8 == 0), "bad batch tile"
    nbt = B // TB
    TT = n_steps if time_tile is None else min(time_tile, n_steps)
    n_tc = pl.cdiv(n_steps, TT)
    n_steps_pad = n_tc * TT                        # time padded; dropped later

    # packed output layout [h | prior params | post params | prior s | post s]
    W = H + 6 * S
    W_pad = -(-W // 128) * 128                     # lane-dense (128-multiple)
    pad_cols = W_pad - W

    # ---- hoist non-recurrent projections off the serial critical path ------
    acts = actions[:, :n_steps, :].astype(f32)
    obs = observations[:, :n_steps, :].astype(f32)
    psa = jnp.einsum('bta,ah->bth', acts, w_sa_a) + b_sa            # (B,T-1,H)
    pha = jnp.einsum('bta,ah->bth', acts, w_ha_a) + b_ha
    pho = jnp.einsum('bte,eh->bth', obs, w_ho_e) + b_ho
    phao = jnp.concatenate([pha, pho], axis=-1)                     # (B,T-1,2H)
    eps = jnp.concatenate([eps_prior[:, :n_steps, :],
                           eps_post[:, :n_steps, :]], axis=-1)      # (B,T-1,2S)
    notdone = 1.0 - dones[:, :n_steps, :].astype(f32)

    tmaj = lambda x: jnp.transpose(x, (1, 0, 2))                    # time-major

    def pad_t(x):
        if n_steps_pad == n_steps:
            return x
        return jnp.pad(x, ((0, n_steps_pad - n_steps), (0, 0), (0, 0)))

    # streamed sequence inputs in bf16 (halved DMA bytes); f32 accumulation
    psa_t = pad_t(tmaj(psa).astype(bf16))
    phao_t = pad_t(tmaj(phao).astype(bf16))
    eps_t = pad_t(tmaj(eps).astype(bf16))
    notdone_t = pad_t(tmaj(notdone))

    # ---- fuse GRU gates / heads, fold r,z biases, cast weights to bf16 -----
    w_i_all = jnp.concatenate(
        [jnp.concatenate([w_ir[l], w_iz[l], w_in[l]], axis=-1)
         for l in range(rnn_layers)], axis=-1).astype(bf16)          # (H,L*3H)
    w_h = jnp.concatenate([w_hr, w_hz, w_hn], axis=-1).astype(bf16)  # (L,H,3H)
    b_rz = jnp.concatenate([b_ir + b_hr, b_iz + b_hz], axis=-1).astype(f32)
    b_in_f = b_in.astype(f32)
    b_hn_f = b_hn.astype(f32)
    w_hh = jnp.concatenate([w_ha_h, w_ho_h], axis=-1).astype(bf16)   # (H,2H)
    w_pr = jnp.concatenate([w_pr_m, w_pr_lv], axis=-1).astype(bf16)  # (H,2S)
    b_pr = jnp.concatenate([b_pr_m, b_pr_lv], axis=-1).astype(f32)
    w_po = jnp.concatenate([w_po_m, w_po_lv], axis=-1).astype(bf16)
    b_po = jnp.concatenate([b_po_m, b_po_lv], axis=-1).astype(f32)
    w_sa_s_b = w_sa_s.astype(bf16)

    # ---- BlockSpecs ---------------------------------------------------------
    def seq_spec(f):
        return pl.BlockSpec((TT, TB, f), lambda b, tc: (tc, b, 0))

    def full_spec(arr):
        nd = arr.ndim
        return pl.BlockSpec(arr.shape, lambda b, tc, _nd=nd: (0,) * _nd)

    in_specs = [
        pl.BlockSpec((TB, H), lambda b, tc: (b, 0)),
        pl.BlockSpec((TB, S), lambda b, tc: (b, 0)),
        seq_spec(H), seq_spec(2 * H), seq_spec(1), seq_spec(2 * S),
        full_spec(w_sa_s_b),
        full_spec(w_i_all), full_spec(w_h),
        full_spec(b_rz), full_spec(b_in_f), full_spec(b_hn_f),
        full_spec(w_hh), full_spec(w_pr), full_spec(b_pr),
        full_spec(w_po), full_spec(b_po),
    ]
    out_shape = jax.ShapeDtypeStruct((n_steps_pad, B, W_pad), f32)
    out_specs = seq_spec(W_pad)
    scratch = [pltpu.VMEM((TB, H), f32), pltpu.VMEM((TB, S), f32)]

    kernel = functools.partial(dynamics_kernel, time_tile=TT,
                               rnn_layers=rnn_layers, H=H, S=S,
                               pad_cols=pad_cols)
    out = pl.pallas_call(
        kernel,
        out_shape=out_shape,
        grid_spec=pltpu.PrefetchScalarGridSpec(
            num_scalar_prefetch=0, grid=(nbt, n_tc),
            in_specs=in_specs, out_specs=out_specs,
            scratch_shapes=scratch),
        compiler_params=pltpu.CompilerParams(
            dimension_semantics=("parallel", "arbitrary"),
            vmem_limit_bytes=48 * 1024 * 1024),   # safe for v7x's 64 MiB/TC
    )(prev_hidden.astype(f32), prev_state.astype(f32),
      psa_t, phao_t, notdone_t, eps_t,
      w_sa_s_b, w_i_all, w_h, b_rz, b_in_f, b_hn_f,
      w_hh, w_pr, b_pr, w_po, b_po)

    # ---- unpack the lane-dense slab ----------------------------------------
    out = jnp.transpose(out[:n_steps], (1, 0, 2))   # (B, T-1, W_pad) batch-major
    h_seq = out[..., :H]
    pr_seq = out[..., H:H + 2 * S]
    po_seq = out[..., H + 2 * S:H + 4 * S]
    ps_seq = out[..., H + 4 * S:H + 5 * S]
    qs_seq = out[..., H + 5 * S:H + 6 * S]
    pm, plv = pr_seq[..., :S], pr_seq[..., S:]
    qm, qlv = po_seq[..., :S], po_seq[..., S:]

    prev_h0 = prev_hidden.astype(f32)[:, None, :]
    prev_s0 = prev_state.astype(f32)[:, None, :]
    hiddens = jnp.concatenate([prev_h0, h_seq], axis=1)
    prior_states = jnp.concatenate([prev_s0, ps_seq], axis=1)
    post_states = jnp.concatenate([prev_s0, qs_seq], axis=1)
    return hiddens, prior_states, post_states, pm, plv, qm, qlv


def reference_forward(prev_hidden, prev_state, actions, observations, dones,
                      eps_prior, eps_post, params, rnn_layers=1):
    """Pure-JAX (f32) re-implementation of the PyTorch forward for validation."""
    (w_sa_s, w_sa_a, b_sa,
     w_ir, w_iz, w_in, w_hr, w_hz, w_hn,
     b_ir, b_iz, b_in, b_hr, b_hz, b_hn,
     w_ha_h, w_ha_a, b_ha,
     w_pr_m, w_pr_lv, b_pr_m, b_pr_lv,
     w_ho_h, w_ho_e, b_ho,
     w_po_m, w_po_lv, b_po_m, b_po_lv) = params
    B, T, _ = actions.shape
    h, s = prev_hidden, prev_state
    hiddens = [prev_hidden]; prior_states = [prev_state]; post_states = [prev_state]
    pr_m, pr_lv, po_m, po_lv = [], [], [], []
    dones_f = dones.astype(jnp.float32)
    for t in range(T - 1):
        a_t = actions[:, t, :]; o_t = observations[:, t, :]
        st = s * (1.0 - dones_f[:, t, :])
        x = _silu(st @ w_sa_s + a_t @ w_sa_a + b_sa)
        for l in range(rnn_layers):
            r = jax.nn.sigmoid(x @ w_ir[l] + b_ir[l] + h @ w_hr[l] + b_hr[l])
            z = jax.nn.sigmoid(x @ w_iz[l] + b_iz[l] + h @ w_hz[l] + b_hz[l])
            n = jnp.tanh(x @ w_in[l] + b_in[l] + r * (h @ w_hn[l] + b_hn[l]))
            h = (1.0 - z) * n + z * h
        ha = _silu(h @ w_ha_h + a_t @ w_ha_a + b_ha)
        pm = ha @ w_pr_m + b_pr_m
        plv = ha @ w_pr_lv + b_pr_lv
        ps = pm + jnp.exp(jax.nn.softplus(plv)) * eps_prior[:, t, :]
        ho = _silu(h @ w_ho_h + o_t @ w_ho_e + b_ho)
        qm = ho @ w_po_m + b_po_m
        qlv = ho @ w_po_lv + b_po_lv
        qs = qm + jnp.exp(jax.nn.softplus(qlv)) * eps_post[:, t, :]
        hiddens.append(h); prior_states.append(ps); post_states.append(qs)
        pr_m.append(pm); pr_lv.append(plv); po_m.append(qm); po_lv.append(qlv)
        s = qs
    stack = lambda lst: jnp.stack(lst, axis=1)
    return (stack(hiddens), stack(prior_states), stack(post_states),
            stack(pr_m), stack(pr_lv), stack(po_m), stack(po_lv))


if __name__ == "__main__":
    B, T = 2, 8
    hidden_dim, state_dim, embedding_dim, action_dim = 32, 16, 24, 6
    rnn_layers = 1

    key = jax.random.PRNGKey(0)
    kp, kh, ks, ka, ko, kd, ke1, ke2 = jax.random.split(key, 8)

    params = init_params(kp, hidden_dim, state_dim, embedding_dim, action_dim,
                         rnn_layers)

    prev_hidden = jax.random.normal(kh, (B, hidden_dim), jnp.float32)
    prev_state = jax.random.normal(ks, (B, state_dim), jnp.float32)
    act_idx = jax.random.randint(ka, (B, T), 0, action_dim)
    actions = jax.nn.one_hot(act_idx, action_dim, dtype=jnp.float32)  # one-hot
    observations = jax.random.normal(ko, (B, T, embedding_dim), jnp.float32)
    dones = jax.random.uniform(kd, (B, T, 1)) < 0.1
    eps_prior = jax.random.normal(ke1, (B, T - 1, state_dim), jnp.float32)
    eps_post = jax.random.normal(ke2, (B, T - 1, state_dim), jnp.float32)

    # time_tile=4 exercises the chunked-time grid + carry-in-scratch path
    outs = dynamics_predictor(prev_hidden, prev_state, actions, observations,
                              dones, eps_prior, eps_post, params, rnn_layers,
                              time_tile=4)
    outs = jax.block_until_ready(outs)

    refs = reference_forward(prev_hidden, prev_state, actions, observations,
                             dones, eps_prior, eps_post, params, rnn_layers)

    names = ["hiddens", "prior_states", "posterior_states", "prior_means",
             "prior_log_vars", "posterior_means", "posterior_log_vars"]
    for name, got, want in zip(names, outs, refs):
        assert got.shape == want.shape, (name, got.shape, want.shape)
        assert jnp.allclose(got, want, atol=2e-2, rtol=2e-2), (
            f"{name} mismatch, max abs diff "
            f"{float(jnp.max(jnp.abs(got - want)))}")

    print("KERNEL_OK")
</pallas_src>

<mosaic_0001>
module attributes {stable_mosaic.version = 11 : i64} {
  func.func @dynamics_kernel(%arg0: i32, %arg1: i32, %arg2: memref<2x32xf32, #tpu.memory_space<vmem>>, %arg3: memref<2x16xf32, #tpu.memory_space<vmem>>, %arg4: memref<4x2x32xbf16, #tpu.memory_space<vmem>>, %arg5: memref<4x2x64xbf16, #tpu.memory_space<vmem>>, %arg6: memref<4x2x1xf32, #tpu.memory_space<vmem>>, %arg7: memref<4x2x32xbf16, #tpu.memory_space<vmem>>, %arg8: memref<16x32xbf16, #tpu.memory_space<vmem>>, %arg9: memref<32x96xbf16, #tpu.memory_space<vmem>>, %arg10: memref<1x32x96xbf16, #tpu.memory_space<vmem>>, %arg11: memref<1x1x64xf32, #tpu.memory_space<vmem>>, %arg12: memref<1x1x32xf32, #tpu.memory_space<vmem>>, %arg13: memref<1x1x32xf32, #tpu.memory_space<vmem>>, %arg14: memref<32x64xbf16, #tpu.memory_space<vmem>>, %arg15: memref<32x32xbf16, #tpu.memory_space<vmem>>, %arg16: memref<1x32xf32, #tpu.memory_space<vmem>>, %arg17: memref<32x32xbf16, #tpu.memory_space<vmem>>, %arg18: memref<1x32xf32, #tpu.memory_space<vmem>>, %arg19: memref<4x2x128xf32, #tpu.memory_space<vmem>>, %arg20: memref<2x32xf32, #tpu.memory_space<vmem>>, %arg21: memref<2x16xf32, #tpu.memory_space<vmem>>) attributes {dimension_semantics = [#tpu.dimension_semantics<parallel>, #tpu.dimension_semantics<arbitrary>], iteration_bounds = array<i64: 1, 2>, scalar_prefetch = 0 : i64, scratch_operands = 2 : i64, tpu.core_type = #tpu.core_type<tc>, window_params = [{transform_indices = @transform_0, window_bounds = array<i64: 2, 32>}, {transform_indices = @transform_1, window_bounds = array<i64: 2, 16>}, {transform_indices = @transform_2, window_bounds = array<i64: 4, 2, 32>}, {transform_indices = @transform_3, window_bounds = array<i64: 4, 2, 64>}, {transform_indices = @transform_4, window_bounds = array<i64: 4, 2, 1>}, {transform_indices = @transform_5, window_bounds = array<i64: 4, 2, 32>}, {pipeline_mode = #tpu.pipeline_mode<synchronous>, transform_indices = @transform_6, window_bounds = array<i64: 16, 32>}, {pipeline_mode = #tpu.pipeline_mode<synchronous>, transform_indices = @transform_7, window_bounds = array<i64: 32, 96>}, {pipeline_mode = #tpu.pipeline_mode<synchronous>, transform_indices = @transform_8, window_bounds = array<i64: 1, 32, 96>}, {pipeline_mode = #tpu.pipeline_mode<synchronous>, transform_indices = @transform_9, window_bounds = array<i64: 1, 1, 64>}, {pipeline_mode = #tpu.pipeline_mode<synchronous>, transform_indices = @transform_10, window_bounds = array<i64: 1, 1, 32>}, {pipeline_mode = #tpu.pipeline_mode<synchronous>, transform_indices = @transform_11, window_bounds = array<i64: 1, 1, 32>}, {pipeline_mode = #tpu.pipeline_mode<synchronous>, transform_indices = @transform_12, window_bounds = array<i64: 32, 64>}, {pipeline_mode = #tpu.pipeline_mode<synchronous>, transform_indices = @transform_13, window_bounds = array<i64: 32, 32>}, {pipeline_mode = #tpu.pipeline_mode<synchronous>, transform_indices = @transform_14, window_bounds = array<i64: 1, 32>}, {pipeline_mode = #tpu.pipeline_mode<synchronous>, transform_indices = @transform_15, window_bounds = array<i64: 32, 32>}, {pipeline_mode = #tpu.pipeline_mode<synchronous>, transform_indices = @transform_16, window_bounds = array<i64: 1, 32>}, {transform_indices = @transform_17, window_bounds = array<i64: 4, 2, 128>}]} {
    %c0_i32 = arith.constant 0 : i32
    %0 = arith.cmpi eq, %arg1, %c0_i32 : i32
    %1 = arith.extui %0 : i1 to i32
    %c0_i32_0 = arith.constant 0 : i32
    %2 = arith.cmpi ne, %1, %c0_i32_0 : i32
    scf.if %2 {
      %c0_122 = arith.constant 0 : index
      %c0_123 = arith.constant 0 : index
      %400 = vector.load %arg2[%c0_122, %c0_123] : memref<2x32xf32, #tpu.memory_space<vmem>>, vector<2x32xf32>
      %c0_124 = arith.constant 0 : index
      %c0_125 = arith.constant 0 : index
      %401 = vector.load %arg20[%c0_124, %c0_125] : memref<2x32xf32, #tpu.memory_space<vmem>>, vector<2x32xf32>
      tpu.vector_store %arg20[%c0_124, %c0_125], %400 {strides = array<i32>} : memref<2x32xf32, #tpu.memory_space<vmem>>, vector<2x32xf32>,
      %c0_126 = arith.constant 0 : index
      %c0_127 = arith.constant 0 : index
      %402 = vector.load %arg3[%c0_126, %c0_127] : memref<2x16xf32, #tpu.memory_space<vmem>>, vector<2x16xf32>
      %c0_128 = arith.constant 0 : index
      %c0_129 = arith.constant 0 : index
      %403 = vector.load %arg21[%c0_128, %c0_129] : memref<2x16xf32, #tpu.memory_space<vmem>>, vector<2x16xf32>
      tpu.vector_store %arg21[%c0_128, %c0_129], %402 {strides = array<i32>} : memref<2x16xf32, #tpu.memory_space<vmem>>, vector<2x16xf32>,
    } else {
    }
    %c0 = arith.constant 0 : index
    %c0_1 = arith.constant 0 : index
    %3 = vector.load %arg8[%c0, %c0_1] : memref<16x32xbf16, #tpu.memory_space<vmem>>, vector<16x32xbf16>
    %c0_2 = arith.constant 0 : index
    %c0_3 = arith.constant 0 : index
    %4 = vector.load %arg9[%c0_2, %c0_3] : memref<32x96xbf16, #tpu.memory_space<vmem>>, vector<32x96xbf16>
    %c0_4 = arith.constant 0 : index
    %c0_5 = arith.constant 0 : index
    %5 = vector.load %arg14[%c0_4, %c0_5] : memref<32x64xbf16, #tpu.memory_space<vmem>>, vector<32x64xbf16>
    %c0_6 = arith.constant 0 : index
    %c0_7 = arith.constant 0 : index
    %6 = vector.load %arg15[%c0_6, %c0_7] : memref<32x32xbf16, #tpu.memory_space<vmem>>, vector<32x32xbf16>
    %c0_8 = arith.constant 0 : index
    %c0_9 = arith.constant 0 : index
    %7 = vector.load %arg17[%c0_8, %c0_9] : memref<32x32xbf16, #tpu.memory_space<vmem>>, vector<32x32xbf16>
    %c0_10 = arith.constant 0 : index
    %c0_11 = arith.constant 0 : index
    %8 = vector.load %arg16[%c0_10, %c0_11] : memref<1x32xf32, #tpu.memory_space<vmem>>, vector<1x32xf32>
    %9 = vector.shape_cast %8 : vector<1x32xf32> to vector<1x32xf32>
    %10 = vector.broadcast %9 : vector<1x32xf32> to vector<2x32xf32>
    %c0_12 = arith.constant 0 : index
    %c0_13 = arith.constant 0 : index
    %11 = vector.load %arg18[%c0_12, %c0_13] : memref<1x32xf32, #tpu.memory_space<vmem>>, vector<1x32xf32>
    %12 = vector.shape_cast %11 : vector<1x32xf32> to vector<1x32xf32>
    %13 = vector.broadcast %12 : vector<1x32xf32> to vector<2x32xf32>
    %c0_14 = arith.constant 0 : index
    %c0_15 = arith.constant 0 : index
    %c0_16 = arith.constant 0 : index
    %14 = vector.load %arg10[%c0_14, %c0_15, %c0_16] : memref<1x32x96xbf16, #tpu.memory_space<vmem>>, vector<1x32x96xbf16>
    %15 = vector.shape_cast %14 : vector<1x32x96xbf16> to vector<32x96xbf16>
    %c0_17 = arith.constant 0 : index
    %c0_18 = arith.constant 0 : index
    %c0_19 = arith.constant 0 : index
    %16 = vector.load %arg11[%c0_17, %c0_18, %c0_19] : memref<1x1x64xf32, #tpu.memory_space<vmem>>, vector<1x1x64xf32>
    %17 = vector.shape_cast %16 : vector<1x1x64xf32> to vector<1x64xf32>
    %18 = vector.shape_cast %17 : vector<1x64xf32> to vector<1x64xf32>
    %19 = vector.broadcast %18 : vector<1x64xf32> to vector<2x64xf32>
    %c0_20 = arith.constant 0 : index
    %c0_21 = arith.constant 0 : index
    %c0_22 = arith.constant 0 : index
    %20 = vector.load %arg12[%c0_20, %c0_21, %c0_22] : memref<1x1x32xf32, #tpu.memory_space<vmem>>, vector<1x1x32xf32>
    %21 = vector.shape_cast %20 : vector<1x1x32xf32> to vector<1x32xf32>
    %22 = vector.shape_cast %21 : vector<1x32xf32> to vector<1x32xf32>
    %23 = vector.broadcast %22 : vector<1x32xf32> to vector<2x32xf32>
    %c0_23 = arith.constant 0 : index
    %c0_24 = arith.constant 0 : index
    %c0_25 = arith.constant 0 : index
    %24 = vector.load %arg13[%c0_23, %c0_24, %c0_25] : memref<1x1x32xf32, #tpu.memory_space<vmem>>, vector<1x1x32xf32>
    %25 = vector.shape_cast %24 : vector<1x1x32xf32> to vector<1x32xf32>
    %26 = vector.shape_cast %25 : vector<1x32xf32> to vector<1x32xf32>
    %27 = vector.broadcast %26 : vector<1x32xf32> to vector<2x32xf32>
    %c0_26 = arith.constant 0 : index
    %c0_27 = arith.constant 0 : index
    %28 = vector.load %arg20[%c0_26, %c0_27] : memref<2x32xf32, #tpu.memory_space<vmem>>, vector<2x32xf32>
    %c0_28 = arith.constant 0 : index
    %c0_29 = arith.constant 0 : index
    %29 = vector.load %arg21[%c0_28, %c0_29] : memref<2x16xf32, #tpu.memory_space<vmem>>, vector<2x16xf32>
    %c0_i32_30 = arith.constant 0 : i32
    %30 = arith.index_cast %c0_i32_30 : i32 to index
    %c0_31 = arith.constant 0 : index
    %c0_32 = arith.constant 0 : index
    %31 = vector.load %arg6[%30, %c0_31, %c0_32] : memref<4x2x1xf32, #tpu.memory_space<vmem>>, vector<1x2x1xf32>
    %32 = vector.shape_cast %31 : vector<1x2x1xf32> to vector<2x1xf32>
    %33 = vector.broadcast %32 : vector<2x1xf32> to vector<2x16xf32>
    %34 = arith.mulf %29, %33 : vector<2x16xf32>
    %35 = arith.truncf %34 : vector<2x16xf32> to vector<2x16xbf16>
    %cst = arith.constant dense<0.000000e+00> : vector<2x32xf32>
    %36 = tpu.matmul %35, %3, %cst {dimension_numbers = #tpu.dot_dimension_numbers<[1], [0], [0], [1], [0, 0, 1, 1], [], []>} : vector<2x16xbf16>, vector<16x32xbf16>, vector<2x32xf32> -> vector<2x32xf32>
    %37 = arith.index_cast %c0_i32_30 : i32 to index
    %c0_33 = arith.constant 0 : index
    %c0_34 = arith.constant 0 : index
    %38 = vector.load %arg4[%37, %c0_33, %c0_34] : memref<4x2x32xbf16, #tpu.memory_space<vmem>>, vector<1x2x32xbf16>
    %39 = vector.shape_cast %38 : vector<1x2x32xbf16> to vector<2x32xbf16>
    %40 = arith.extf %39 : vector<2x32xbf16> to vector<2x32xf32>
    %41 = arith.addf %36, %40 : vector<2x32xf32>
    %42 = arith.negf %41 : vector<2x32xf32>
    %43 = math.exp %42 : vector<2x32xf32>
    %cst_35 = arith.constant 1.000000e+00 : f32
    %44 = vector.broadcast %cst_35 : f32 to vector<2x32xf32>
    %45 = arith.addf %44, %43 : vector<2x32xf32>
    %46 = arith.divf %44, %45 : vector<2x32xf32>
    %47 = arith.mulf %41, %46 : vector<2x32xf32>
    %48 = arith.truncf %47 : vector<2x32xf32> to vector<2x32xbf16>
    %cst_36 = arith.constant dense<0.000000e+00> : vector<2x96xf32>
    %49 = tpu.matmul %48, %4, %cst_36 {dimension_numbers = #tpu.dot_dimension_numbers<[1], [0], [0], [1], [0, 0, 1, 1], [], []>} : vector<2x32xbf16>, vector<32x96xbf16>, vector<2x96xf32> -> vector<2x96xf32>
    %50 = arith.truncf %28 : vector<2x32xf32> to vector<2x32xbf16>
    %cst_37 = arith.constant dense<0.000000e+00> : vector<2x96xf32>
    %51 = tpu.matmul %50, %15, %cst_37 {dimension_numbers = #tpu.dot_dimension_numbers<[1], [0], [0], [1], [0, 0, 1, 1], [], []>} : vector<2x32xbf16>, vector<32x96xbf16>, vector<2x96xf32> -> vector<2x96xf32>
    %52 = vector.extract_strided_slice %49 {offsets = [0, 0], sizes = [2, 64], strides = [1, 1]} : vector<2x96xf32> to vector<2x64xf32>
    %53 = vector.extract_strided_slice %51 {offsets = [0, 0], sizes = [2, 64], strides = [1, 1]} : vector<2x96xf32> to vector<2x64xf32>
    %54 = arith.addf %52, %53 : vector<2x64xf32>
    %55 = arith.addf %54, %19 : vector<2x64xf32>
    %56 = arith.negf %55 : vector<2x64xf32>
    %57 = math.exp %56 : vector<2x64xf32>
    %cst_38 = arith.constant 1.000000e+00 : f32
    %58 = vector.broadcast %cst_38 : f32 to vector<2x64xf32>
    %59 = arith.addf %58, %57 : vector<2x64xf32>
    %60 = arith.divf %58, %59 : vector<2x64xf32>
    %61 = vector.extract_strided_slice %60 {offsets = [0, 0], sizes = [2, 32], strides = [1, 1]} : vector<2x64xf32> to vector<2x32xf32>
    %62 = vector.extract_strided_slice %60 {offsets = [0, 32], sizes = [2, 32], strides = [1, 1]} : vector<2x64xf32> to vector<2x32xf32>
    %63 = vector.extract_strided_slice %49 {offsets = [0, 64], sizes = [2, 32], strides = [1, 1]} : vector<2x96xf32> to vector<2x32xf32>
    %64 = arith.addf %63, %23 : vector<2x32xf32>
    %65 = vector.extract_strided_slice %51 {offsets = [0, 64], sizes = [2, 32], strides = [1, 1]} : vector<2x96xf32> to vector<2x32xf32>
    %66 = arith.addf %65, %27 : vector<2x32xf32>
    %67 = arith.mulf %61, %66 : vector<2x32xf32>
    %68 = arith.addf %64, %67 : vector<2x32xf32>
    %69 = math.tanh %68 : vector<2x32xf32>
    %cst_39 = arith.constant 1.000000e+00 : f32
    %70 = vector.broadcast %cst_39 : f32 to vector<2x32xf32>
    %71 = arith.subf %70, %62 : vector<2x32xf32>
    %72 = arith.mulf %71, %69 : vector<2x32xf32>
    %73 = arith.mulf %62, %28 : vector<2x32xf32>
    %74 = arith.addf %72, %73 : vector<2x32xf32>
    %75 = arith.truncf %74 : vector<2x32xf32> to vector<2x32xbf16>
    %cst_40 = arith.constant dense<0.000000e+00> : vector<2x64xf32>
    %76 = tpu.matmul %75, %5, %cst_40 {dimension_numbers = #tpu.dot_dimension_numbers<[1], [0], [0], [1], [0, 0, 1, 1], [], []>} : vector<2x32xbf16>, vector<32x64xbf16>, vector<2x64xf32> -> vector<2x64xf32>
    %77 = arith.index_cast %c0_i32_30 : i32 to index
    %c0_41 = arith.constant 0 : index
    %c0_42 = arith.constant 0 : index
    %78 = vector.load %arg5[%77, %c0_41, %c0_42] : memref<4x2x64xbf16, #tpu.memory_space<vmem>>, vector<1x2x64xbf16>
    %79 = vector.shape_cast %78 : vector<1x2x64xbf16> to vector<2x64xbf16>
    %80 = arith.extf %79 : vector<2x64xbf16> to vector<2x64xf32>
    %81 = arith.addf %76, %80 : vector<2x64xf32>
    %82 = arith.negf %81 : vector<2x64xf32>
    %83 = math.exp %82 : vector<2x64xf32>
    %cst_43 = arith.constant 1.000000e+00 : f32
    %84 = vector.broadcast %cst_43 : f32 to vector<2x64xf32>
    %85 = arith.addf %84, %83 : vector<2x64xf32>
    %86 = arith.divf %84, %85 : vector<2x64xf32>
    %87 = arith.mulf %81, %86 : vector<2x64xf32>
    %88 = vector.extract_strided_slice %87 {offsets = [0, 0], sizes = [2, 32], strides = [1, 1]} : vector<2x64xf32> to vector<2x32xf32>
    %89 = arith.truncf %88 : vector<2x32xf32> to vector<2x32xbf16>
    %cst_44 = arith.constant dense<0.000000e+00> : vector<2x32xf32>
    %90 = tpu.matmul %89, %6, %cst_44 {dimension_numbers = #tpu.dot_dimension_numbers<[1], [0], [0], [1], [0, 0, 1, 1], [], []>} : vector<2x32xbf16>, vector<32x32xbf16>, vector<2x32xf32> -> vector<2x32xf32>
    %91 = arith.addf %90, %10 : vector<2x32xf32>
    %92 = vector.extract_strided_slice %87 {offsets = [0, 32], sizes = [2, 32], strides = [1, 1]} : vector<2x64xf32> to vector<2x32xf32>
    %93 = arith.truncf %92 : vector<2x32xf32> to vector<2x32xbf16>
    %cst_45 = arith.constant dense<0.000000e+00> : vector<2x32xf32>
    %94 = tpu.matmul %93, %7, %cst_45 {dimension_numbers = #tpu.dot_dimension_numbers<[1], [0], [0], [1], [0, 0, 1, 1], [], []>} : vector<2x32xbf16>, vector<32x32xbf16>, vector<2x32xf32> -> vector<2x32xf32>
    %95 = arith.addf %94, %13 : vector<2x32xf32>
    %96 = arith.index_cast %c0_i32_30 : i32 to index
    %c0_46 = arith.constant 0 : index
    %c0_47 = arith.constant 0 : index
    %97 = vector.load %arg7[%96, %c0_46, %c0_47] : memref<4x2x32xbf16, #tpu.memory_space<vmem>>, vector<1x2x32xbf16>
    %98 = vector.shape_cast %97 : vector<1x2x32xbf16> to vector<2x32xbf16>
    %99 = vector.extract_strided_slice %91 {offsets = [0, 0], sizes = [2, 16], strides = [1, 1]} : vector<2x32xf32> to vector<2x16xf32>
    %100 = vector.extract_strided_slice %91 {offsets = [0, 16], sizes = [2, 16], strides = [1, 1]} : vector<2x32xf32> to vector<2x16xf32>
    %101 = math.exp %100 : vector<2x16xf32>
    %cst_48 = arith.constant 1.000000e+00 : f32
    %102 = vector.broadcast %cst_48 : f32 to vector<2x16xf32>
    %103 = arith.addf %102, %101 : vector<2x16xf32>
    %104 = vector.extract_strided_slice %98 {offsets = [0, 0], sizes = [2, 16], strides = [1, 1]} : vector<2x32xbf16> to vector<2x16xbf16>
    %105 = arith.extf %104 : vector<2x16xbf16> to vector<2x16xf32>
    %106 = arith.mulf %103, %105 : vector<2x16xf32>
    %107 = arith.addf %99, %106 : vector<2x16xf32>
    %108 = vector.extract_strided_slice %95 {offsets = [0, 0], sizes = [2, 16], strides = [1, 1]} : vector<2x32xf32> to vector<2x16xf32>
    %109 = vector.extract_strided_slice %95 {offsets = [0, 16], sizes = [2, 16], strides = [1, 1]} : vector<2x32xf32> to vector<2x16xf32>
    %110 = math.exp %109 : vector<2x16xf32>
    %cst_49 = arith.constant 1.000000e+00 : f32
    %111 = vector.broadcast %cst_49 : f32 to vector<2x16xf32>
    %112 = arith.addf %111, %110 : vector<2x16xf32>
    %113 = vector.extract_strided_slice %98 {offsets = [0, 16], sizes = [2, 16], strides = [1, 1]} : vector<2x32xbf16> to vector<2x16xbf16>
    %114 = arith.extf %113 : vector<2x16xbf16> to vector<2x16xf32>
    %115 = arith.mulf %112, %114 : vector<2x16xf32>
    %116 = arith.addf %108, %115 : vector<2x16xf32>
    %117 = tpu.concatenate %74, %91, %95, %107, %116 in 1 : vector<2x32xf32>, vector<2x32xf32>, vector<2x32xf32>, vector<2x16xf32>, vector<2x16xf32> -> vector<2x128xf32>
    %118 = arith.index_cast %c0_i32_30 : i32 to index
    %c0_50 = arith.constant 0 : index
    %c0_51 = arith.constant 0 : index
    %119 = vector.load %arg19[%118, %c0_50, %c0_51] : memref<4x2x128xf32, #tpu.memory_space<vmem>>, vector<1x2x128xf32>
    %120 = vector.shape_cast %119 : vector<1x2x128xf32> to vector<2x128xf32>
    %121 = vector.shape_cast %117 : vector<2x128xf32> to vector<1x2x128xf32>
    tpu.vector_store %arg19[%118, %c0_50, %c0_51], %121 {strides = array<i32>} : memref<4x2x128xf32, #tpu.memory_space<vmem>>, vector<1x2x128xf32>,
    %c1_i32 = arith.constant 1 : i32
    %122 = arith.index_cast %c1_i32 : i32 to index
    %c0_52 = arith.constant 0 : index
    %c0_53 = arith.constant 0 : index
    %123 = vector.load %arg6[%122, %c0_52, %c0_53] : memref<4x2x1xf32, #tpu.memory_space<vmem>>, vector<1x2x1xf32>
    %124 = vector.shape_cast %123 : vector<1x2x1xf32> to vector<2x1xf32>
    %125 = vector.broadcast %124 : vector<2x1xf32> to vector<2x16xf32>
    %126 = arith.mulf %116, %125 : vector<2x16xf32>
    %127 = arith.truncf %126 : vector<2x16xf32> to vector<2x16xbf16>
    %cst_54 = arith.constant dense<0.000000e+00> : vector<2x32xf32>
    %128 = tpu.matmul %127, %3, %cst_54 {dimension_numbers = #tpu.dot_dimension_numbers<[1], [0], [0], [1], [0, 0, 1, 1], [], []>} : vector<2x16xbf16>, vector<16x32xbf16>, vector<2x32xf32> -> vector<2x32xf32>
    %129 = arith.index_cast %c1_i32 : i32 to index
    %c0_55 = arith.constant 0 : index
    %c0_56 = arith.constant 0 : index
    %130 = vector.load %arg4[%129, %c0_55, %c0_56] : memref<4x2x32xbf16, #tpu.memory_space<vmem>>, vector<1x2x32xbf16>
    %131 = vector.shape_cast %130 : vector<1x2x32xbf16> to vector<2x32xbf16>
    %132 = arith.extf %131 : vector<2x32xbf16> to vector<2x32xf32>
    %133 = arith.addf %128, %132 : vector<2x32xf32>
    %134 = arith.negf %133 : vector<2x32xf32>
    %135 = math.exp %134 : vector<2x32xf32>
    %cst_57 = arith.constant 1.000000e+00 : f32
    %136 = vector.broadcast %cst_57 : f32 to vector<2x32xf32>
    %137 = arith.addf %136, %135 : vector<2x32xf32>
    %138 = arith.divf %136, %137 : vector<2x32xf32>
    %139 = arith.mulf %133, %138 : vector<2x32xf32>
    %140 = arith.truncf %139 : vector<2x32xf32> to vector<2x32xbf16>
    %cst_58 = arith.constant dense<0.000000e+00> : vector<2x96xf32>
    %141 = tpu.matmul %140, %4, %cst_58 {dimension_numbers = #tpu.dot_dimension_numbers<[1], [0], [0], [1], [0, 0, 1, 1], [], []>} : vector<2x32xbf16>, vector<32x96xbf16>, vector<2x96xf32> -> vector<2x96xf32>
    %142 = arith.truncf %74 : vector<2x32xf32> to vector<2x32xbf16>
    %cst_59 = arith.constant dense<0.000000e+00> : vector<2x96xf32>
    %143 = tpu.matmul %142, %15, %cst_59 {dimension_numbers = #tpu.dot_dimension_numbers<[1], [0], [0], [1], [0, 0, 1, 1], [], []>} : vector<2x32xbf16>, vector<32x96xbf16>, vector<2x96xf32> -> vector<2x96xf32>
    %144 = vector.extract_strided_slice %141 {offsets = [0, 0], sizes = [2, 64], strides = [1, 1]} : vector<2x96xf32> to vector<2x64xf32>
    %145 = vector.extract_strided_slice %143 {offsets = [0, 0], sizes = [2, 64], strides = [1, 1]} : vector<2x96xf32> to vector<2x64xf32>
    %146 = arith.addf %144, %145 : vector<2x64xf32>
    %147 = arith.addf %146, %19 : vector<2x64xf32>
    %148 = arith.negf %147 : vector<2x64xf32>
    %149 = math.exp %148 : vector<2x64xf32>
    %cst_60 = arith.constant 1.000000e+00 : f32
    %150 = vector.broadcast %cst_60 : f32 to vector<2x64xf32>
    %151 = arith.addf %150, %149 : vector<2x64xf32>
    %152 = arith.divf %150, %151 : vector<2x64xf32>
    %153 = vector.extract_strided_slice %152 {offsets = [0, 0], sizes = [2, 32], strides = [1, 1]} : vector<2x64xf32> to vector<2x32xf32>
    %154 = vector.extract_strided_slice %152 {offsets = [0, 32], sizes = [2, 32], strides = [1, 1]} : vector<2x64xf32> to vector<2x32xf32>
    %155 = vector.extract_strided_slice %141 {offsets = [0, 64], sizes = [2, 32], strides = [1, 1]} : vector<2x96xf32> to vector<2x32xf32>
    %156 = arith.addf %155, %23 : vector<2x32xf32>
    %157 = vector.extract_strided_slice %143 {offsets = [0, 64], sizes = [2, 32], strides = [1, 1]} : vector<2x96xf32> to vector<2x32xf32>
    %158 = arith.addf %157, %27 : vector<2x32xf32>
    %159 = arith.mulf %153, %158 : vector<2x32xf32>
    %160 = arith.addf %156, %159 : vector<2x32xf32>
    %161 = math.tanh %160 : vector<2x32xf32>
    %cst_61 = arith.constant 1.000000e+00 : f32
    %162 = vector.broadcast %cst_61 : f32 to vector<2x32xf32>
    %163 = arith.subf %162, %154 : vector<2x32xf32>
    %164 = arith.mulf %163, %161 : vector<2x32xf32>
    %165 = arith.mulf %154, %74 : vector<2x32xf32>
    %166 = arith.addf %164, %165 : vector<2x32xf32>
    %167 = arith.truncf %166 : vector<2x32xf32> to vector<2x32xbf16>
    %cst_62 = arith.constant dense<0.000000e+00> : vector<2x64xf32>
    %168 = tpu.matmul %167, %5, %cst_62 {dimension_numbers = #tpu.dot_dimension_numbers<[1], [0], [0], [1], [0, 0, 1, 1], [], []>} : vector<2x32xbf16>, vector<32x64xbf16>, vector<2x64xf32> -> vector<2x64xf32>
    %169 = arith.index_cast %c1_i32 : i32 to index
    %c0_63 = arith.constant 0 : index
    %c0_64 = arith.constant 0 : index
    %170 = vector.load %arg5[%169, %c0_63, %c0_64] : memref<4x2x64xbf16, #tpu.memory_space<vmem>>, vector<1x2x64xbf16>
    %171 = vector.shape_cast %170 : vector<1x2x64xbf16> to vector<2x64xbf16>
    %172 = arith.extf %171 : vector<2x64xbf16> to vector<2x64xf32>
    %173 = arith.addf %168, %172 : vector<2x64xf32>
    %174 = arith.negf %173 : vector<2x64xf32>
    %175 = math.exp %174 : vector<2x64xf32>
    %cst_65 = arith.constant 1.000000e+00 : f32
    %176 = vector.broadcast %cst_65 : f32 to vector<2x64xf32>
    %177 = arith.addf %176, %175 : vector<2x64xf32>
    %178 = arith.divf %176, %177 : vector<2x64xf32>
    %179 = arith.mulf %173, %178 : vector<2x64xf32>
    %180 = vector.extract_strided_slice %179 {offsets = [0, 0], sizes = [2, 32], strides = [1, 1]} : vector<2x64xf32> to vector<2x32xf32>
    %181 = arith.truncf %180 : vector<2x32xf32> to vector<2x32xbf16>
    %cst_66 = arith.constant dense<0.000000e+00> : vector<2x32xf32>
    %182 = tpu.matmul %181, %6, %cst_66 {dimension_numbers = #tpu.dot_dimension_numbers<[1], [0], [0], [1], [0, 0, 1, 1], [], []>} : vector<2x32xbf16>, vector<32x32xbf16>, vector<2x32xf32> -> vector<2x32xf32>
    %183 = arith.addf %182, %10 : vector<2x32xf32>
    %184 = vector.extract_strided_slice %179 {offsets = [0, 32], sizes = [2, 32], strides = [1, 1]} : vector<2x64xf32> to vector<2x32xf32>
    %185 = arith.truncf %184 : vector<2x32xf32> to vector<2x32xbf16>
    %cst_67 = arith.constant dense<0.000000e+00> : vector<2x32xf32>
    %186 = tpu.matmul %185, %7, %cst_67 {dimension_numbers = #tpu.dot_dimension_numbers<[1], [0], [0], [1], [0, 0, 1, 1], [], []>} : vector<2x32xbf16>, vector<32x32xbf16>, vector<2x32xf32> -> vector<2x32xf32>
    %187 = arith.addf %186, %13 : vector<2x32xf32>
    %188 = arith.index_cast %c1_i32 : i32 to index
    %c0_68 = arith.constant 0 : index
    %c0_69 = arith.constant 0 : index
    %189 = vector.load %arg7[%188, %c0_68, %c0_69] : memref<4x2x32xbf16, #tpu.memory_space<vmem>>, vector<1x2x32xbf16>
    %190 = vector.shape_cast %189 : vector<1x2x32xbf16> to vector<2x32xbf16>
    %191 = vector.extract_strided_slice %183 {offsets = [0, 0], sizes = [2, 16], strides = [1, 1]} : vector<2x32xf32> to vector<2x16xf32>
    %192 = vector.extract_strided_slice %183 {offsets = [0, 16], sizes = [2, 16], strides = [1, 1]} : vector<2x32xf32> to vector<2x16xf32>
    %193 = math.exp %192 : vector<2x16xf32>
    %cst_70 = arith.constant 1.000000e+00 : f32
    %194 = vector.broadcast %cst_70 : f32 to vector<2x16xf32>
    %195 = arith.addf %194, %193 : vector<2x16xf32>
    %196 = vector.extract_strided_slice %190 {offsets = [0, 0], sizes = [2, 16], strides = [1, 1]} : vector<2x32xbf16> to vector<2x16xbf16>
    %197 = arith.extf %196 : vector<2x16xbf16> to vector<2x16xf32>
    %198 = arith.mulf %195, %197 : vector<2x16xf32>
    %199 = arith.addf %191, %198 : vector<2x16xf32>
    %200 = vector.extract_strided_slice %187 {offsets = [0, 0], sizes = [2, 16], strides = [1, 1]} : vector<2x32xf32> to vector<2x16xf32>
    %201 = vector.extract_strided_slice %187 {offsets = [0, 16], sizes = [2, 16], strides = [1, 1]} : vector<2x32xf32> to vector<2x16xf32>
    %202 = math.exp %201 : vector<2x16xf32>
    %cst_71 = arith.constant 1.000000e+00 : f32
    %203 = vector.broadcast %cst_71 : f32 to vector<2x16xf32>
    %204 = arith.addf %203, %202 : vector<2x16xf32>
    %205 = vector.extract_strided_slice %190 {offsets = [0, 16], sizes = [2, 16], strides = [1, 1]} : vector<2x32xbf16> to vector<2x16xbf16>
    %206 = arith.extf %205 : vector<2x16xbf16> to vector<2x16xf32>
    %207 = arith.mulf %204, %206 : vector<2x16xf32>
    %208 = arith.addf %200, %207 : vector<2x16xf32>
    %209 = tpu.concatenate %166, %183, %187, %199, %208 in 1 : vector<2x32xf32>, vector<2x32xf32>, vector<2x32xf32>, vector<2x16xf32>, vector<2x16xf32> -> vector<2x128xf32>
    %210 = arith.index_cast %c1_i32 : i32 to index
    %c0_72 = arith.constant 0 : index
    %c0_73 = arith.constant 0 : index
    %211 = vector.load %arg19[%210, %c0_72, %c0_73] : memref<4x2x128xf32, #tpu.memory_space<vmem>>, vector<1x2x128xf32>
    %212 = vector.shape_cast %211 : vector<1x2x128xf32> to vector<2x128xf32>
    %213 = vector.shape_cast %209 : vector<2x128xf32> to vector<1x2x128xf32>
    tpu.vector_store %arg19[%210, %c0_72, %c0_73], %213 {strides = array<i32>} : memref<4x2x128xf32, #tpu.memory_space<vmem>>, vector<1x2x128xf32>,
    %c2_i32 = arith.constant 2 : i32
    %214 = arith.index_cast %c2_i32 : i32 to index
    %c0_74 = arith.constant 0 : index
    %c0_75 = arith.constant 0 : index
    %215 = vector.load %arg6[%214, %c0_74, %c0_75] : memref<4x2x1xf32, #tpu.memory_space<vmem>>, vector<1x2x1xf32>
    %216 = vector.shape_cast %215 : vector<1x2x1xf32> to vector<2x1xf32>
    %217 = vector.broadcast %216 : vector<2x1xf32> to vector<2x16xf32>
    %218 = arith.mulf %208, %217 : vector<2x16xf32>
    %219 = arith.truncf %218 : vector<2x16xf32> to vector<2x16xbf16>
    %cst_76 = arith.constant dense<0.000000e+00> : vector<2x32xf32>
    %220 = tpu.matmul %219, %3, %cst_76 {dimension_numbers = #tpu.dot_dimension_numbers<[1], [0], [0], [1], [0, 0, 1, 1], [], []>} : vector<2x16xbf16>, vector<16x32xbf16>, vector<2x32xf32> -> vector<2x32xf32>
    %221 = arith.index_cast %c2_i32 : i32 to index
    %c0_77 = arith.constant 0 : index
    %c0_78 = arith.constant 0 : index
    %222 = vector.load %arg4[%221, %c0_77, %c0_78] : memref<4x2x32xbf16, #tpu.memory_space<vmem>>, vector<1x2x32xbf16>
    %223 = vector.shape_cast %222 : vector<1x2x32xbf16> to vector<2x32xbf16>
    %224 = arith.extf %223 : vector<2x32xbf16> to vector<2x32xf32>
    %225 = arith.addf %220, %224 : vector<2x32xf32>
    %226 = arith.negf %225 : vector<2x32xf32>
    %227 = math.exp %226 : vector<2x32xf32>
    %cst_79 = arith.constant 1.000000e+00 : f32
    %228 = vector.broadcast %cst_79 : f32 to vector<2x32xf32>
    %229 = arith.addf %228, %227 : vector<2x32xf32>
    %230 = arith.divf %228, %229 : vector<2x32xf32>
    %231 = arith.mulf %225, %230 : vector<2x32xf32>
    %232 = arith.truncf %231 : vector<2x32xf32> to vector<2x32xbf16>
    %cst_80 = arith.constant dense<0.000000e+00> : vector<2x96xf32>
    %233 = tpu.matmul %232, %4, %cst_80 {dimension_numbers = #tpu.dot_dimension_numbers<[1], [0], [0], [1], [0, 0, 1, 1], [], []>} : vector<2x32xbf16>, vector<32x96xbf16>, vector<2x96xf32> -> vector<2x96xf32>
    %234 = arith.truncf %166 : vector<2x32xf32> to vector<2x32xbf16>
    %cst_81 = arith.constant dense<0.000000e+00> : vector<2x96xf32>
    %235 = tpu.matmul %234, %15, %cst_81 {dimension_numbers = #tpu.dot_dimension_numbers<[1], [0], [0], [1], [0, 0, 1, 1], [], []>} : vector<2x32xbf16>, vector<32x96xbf16>, vector<2x96xf32> -> vector<2x96xf32>
    %236 = vector.extract_strided_slice %233 {offsets = [0, 0], sizes = [2, 64], strides = [1, 1]} : vector<2x96xf32> to vector<2x64xf32>
    %237 = vector.extract_strided_slice %235 {offsets = [0, 0], sizes = [2, 64], strides = [1, 1]} : vector<2x96xf32> to vector<2x64xf32>
    %238 = arith.addf %236, %237 : vector<2x64xf32>
    %239 = arith.addf %238, %19 : vector<2x64xf32>
    %240 = arith.negf %239 : vector<2x64xf32>
    %241 = math.exp %240 : vector<2x64xf32>
    %cst_82 = arith.constant 1.000000e+00 : f32
    %242 = vector.broadcast %cst_82 : f32 to vector<2x64xf32>
    %243 = arith.addf %242, %241 : vector<2x64xf32>
    %244 = arith.divf %242, %243 : vector<2x64xf32>
    %245 = vector.extract_strided_slice %244 {offsets = [0, 0], sizes = [2, 32], strides = [1, 1]} : vector<2x64xf32> to vector<2x32xf32>
    %246 = vector.extract_strided_slice %244 {offsets = [0, 32], sizes = [2, 32], strides = [1, 1]} : vector<2x64xf32> to vector<2x32xf32>
    %247 = vector.extract_strided_slice %233 {offsets = [0, 64], sizes = [2, 32], strides = [1, 1]} : vector<2x96xf32> to vector<2x32xf32>
    %248 = arith.addf %247, %23 : vector<2x32xf32>
    %249 = vector.extract_strided_slice %235 {offsets = [0, 64], sizes = [2, 32], strides = [1, 1]} : vector<2x96xf32> to vector<2x32xf32>
    %250 = arith.addf %249, %27 : vector<2x32xf32>
    %251 = arith.mulf %245, %250 : vector<2x32xf32>
    %252 = arith.addf %248, %251 : vector<2x32xf32>
    %253 = math.tanh %252 : vector<2x32xf32>
    %cst_83 = arith.constant 1.000000e+00 : f32
    %254 = vector.broadcast %cst_83 : f32 to vector<2x32xf32>
    %255 = arith.subf %254, %246 : vector<2x32xf32>
    %256 = arith.mulf %255, %253 : vector<2x32xf32>
    %257 = arith.mulf %246, %166 : vector<2x32xf32>
    %258 = arith.addf %256, %257 : vector<2x32xf32>
    %259 = arith.truncf %258 : vector<2x32xf32> to vector<2x32xbf16>
    %cst_84 = arith.constant dense<0.000000e+00> : vector<2x64xf32>
    %260 = tpu.matmul %259, %5, %cst_84 {dimension_numbers = #tpu.dot_dimension_numbers<[1], [0], [0], [1], [0, 0, 1, 1], [], []>} : vector<2x32xbf16>, vector<32x64xbf16>, vector<2x64xf32> -> vector<2x64xf32>
    %261 = arith.index_cast %c2_i32 : i32 to index
    %c0_85 = arith.constant 0 : index
    %c0_86 = arith.constant 0 : index
    %262 = vector.load %arg5[%261, %c0_85, %c0_86] : memref<4x2x64xbf16, #tpu.memory_space<vmem>>, vector<1x2x64xbf16>
    %263 = vector.shape_cast %262 : vector<1x2x64xbf16> to vector<2x64xbf16>
    %264 = arith.extf %263 : vector<2x64xbf16> to vector<2x64xf32>
    %265 = arith.addf %260, %264 : vector<2x64xf32>
    %266 = arith.negf %265 : vector<2x64xf32>
    %267 = math.exp %266 : vector<2x64xf32>
    %cst_87 = arith.constant 1.000000e+00 : f32
    %268 = vector.broadcast %cst_87 : f32 to vector<2x64xf32>
    %269 = arith.addf %268, %267 : vector<2x64xf32>
    %270 = arith.divf %268, %269 : vector<2x64xf32>
    %271 = arith.mulf %265, %270 : vector<2x64xf32>
    %272 = vector.extract_strided_slice %271 {offsets = [0, 0], sizes = [2, 32], strides = [1, 1]} : vector<2x64xf32> to vector<2x32xf32>
    %273 = arith.truncf %272 : vector<2x32xf32> to vector<2x32xbf16>
    %cst_88 = arith.constant dense<0.000000e+00> : vector<2x32xf32>
    %274 = tpu.matmul %273, %6, %cst_88 {dimension_numbers = #tpu.dot_dimension_numbers<[1], [0], [0], [1], [0, 0, 1, 1], [], []>} : vector<2x32xbf16>, vector<32x32xbf16>, vector<2x32xf32> -> vector<2x32xf32>
    %275 = arith.addf %274, %10 : vector<2x32xf32>
    %276 = vector.extract_strided_slice %271 {offsets = [0, 32], sizes = [2, 32], strides = [1, 1]} : vector<2x64xf32> to vector<2x32xf32>
    %277 = arith.truncf %276 : vector<2x32xf32> to vector<2x32xbf16>
    %cst_89 = arith.constant dense<0.000000e+00> : vector<2x32xf32>
    %278 = tpu.matmul %277, %7, %cst_89 {dimension_numbers = #tpu.dot_dimension_numbers<[1], [0], [0], [1], [0, 0, 1, 1], [], []>} : vector<2x32xbf16>, vector<32x32xbf16>, vector<2x32xf32> -> vector<2x32xf32>
    %279 = arith.addf %278, %13 : vector<2x32xf32>
    %280 = arith.index_cast %c2_i32 : i32 to index
    %c0_90 = arith.constant 0 : index
    %c0_91 = arith.constant 0 : index
    %281 = vector.load %arg7[%280, %c0_90, %c0_91] : memref<4x2x32xbf16, #tpu.memory_space<vmem>>, vector<1x2x32xbf16>
    %282 = vector.shape_cast %281 : vector<1x2x32xbf16> to vector<2x32xbf16>
    %283 = vector.extract_strided_slice %275 {offsets = [0, 0], sizes = [2, 16], strides = [1, 1]} : vector<2x32xf32> to vector<2x16xf32>
    %284 = vector.extract_strided_slice %275 {offsets = [0, 16], sizes = [2, 16], strides = [1, 1]} : vector<2x32xf32> to vector<2x16xf32>
    %285 = math.exp %284 : vector<2x16xf32>
    %cst_92 = arith.constant 1.000000e+00 : f32
    %286 = vector.broadcast %cst_92 : f32 to vector<2x16xf32>
    %287 = arith.addf %286, %285 : vector<2x16xf32>
    %288 = vector.extract_strided_slice %282 {offsets = [0, 0], sizes = [2, 16], strides = [1, 1]} : vector<2x32xbf16> to vector<2x16xbf16>
    %289 = arith.extf %288 : vector<2x16xbf16> to vector<2x16xf32>
    %290 = arith.mulf %287, %289 : vector<2x16xf32>
    %291 = arith.addf %283, %290 : vector<2x16xf32>
    %292 = vector.extract_strided_slice %279 {offsets = [0, 0], sizes = [2, 16], strides = [1, 1]} : vector<2x32xf32> to vector<2x16xf32>
    %293 = vector.extract_strided_slice %279 {offsets = [0, 16], sizes = [2, 16], strides = [1, 1]} : vector<2x32xf32> to vector<2x16xf32>
    %294 = math.exp %293 : vector<2x16xf32>
    %cst_93 = arith.constant 1.000000e+00 : f32
    %295 = vector.broadcast %cst_93 : f32 to vector<2x16xf32>
    %296 = arith.addf %295, %294 : vector<2x16xf32>
    %297 = vector.extract_strided_slice %282 {offsets = [0, 16], sizes = [2, 16], strides = [1, 1]} : vector<2x32xbf16> to vector<2x16xbf16>
    %298 = arith.extf %297 : vector<2x16xbf16> to vector<2x16xf32>
    %299 = arith.mulf %296, %298 : vector<2x16xf32>
    %300 = arith.addf %292, %299 : vector<2x16xf32>
    %301 = tpu.concatenate %258, %275, %279, %291, %300 in 1 : vector<2x32xf32>, vector<2x32xf32>, vector<2x32xf32>, vector<2x16xf32>, vector<2x16xf32> -> vector<2x128xf32>
    %302 = arith.index_cast %c2_i32 : i32 to index
    %c0_94 = arith.constant 0 : index
    %c0_95 = arith.constant 0 : index
    %303 = vector.load %arg19[%302, %c0_94, %c0_95] : memref<4x2x128xf32, #tpu.memory_space<vmem>>, vector<1x2x128xf32>
    %304 = vector.shape_cast %303 : vector<1x2x128xf32> to vector<2x128xf32>
    %305 = vector.shape_cast %301 : vector<2x128xf32> to vector<1x2x128xf32>
    tpu.vector_store %arg19[%302, %c0_94, %c0_95], %305 {strides = array<i32>} : memref<4x2x128xf32, #tpu.memory_space<vmem>>, vector<1x2x128xf32>,
    %c3_i32 = arith.constant 3 : i32
    %306 = arith.index_cast %c3_i32 : i32 to index
    %c0_96 = arith.constant 0 : index
    %c0_97 = arith.constant 0 : index
    %307 = vector.load %arg6[%306, %c0_96, %c0_97] : memref<4x2x1xf32, #tpu.memory_space<vmem>>, vector<1x2x1xf32>
    %308 = vector.shape_cast %307 : vector<1x2x1xf32> to vector<2x1xf32>
    %309 = vector.broadcast %308 : vector<2x1xf32> to vector<2x16xf32>
    %310 = arith.mulf %300, %309 : vector<2x16xf32>
    %311 = arith.truncf %310 : vector<2x16xf32> to vector<2x16xbf16>
    %cst_98 = arith.constant dense<0.000000e+00> : vector<2x32xf32>
    %312 = tpu.matmul %311, %3, %cst_98 {dimension_numbers = #tpu.dot_dimension_numbers<[1], [0], [0], [1], [0, 0, 1, 1], [], []>} : vector<2x16xbf16>, vector<16x32xbf16>, vector<2x32xf32> -> vector<2x32xf32>
    %313 = arith.index_cast %c3_i32 : i32 to index
    %c0_99 = arith.constant 0 : index
    %c0_100 = arith.constant 0 : index
    %314 = vector.load %arg4[%313, %c0_99, %c0_100] : memref<4x2x32xbf16, #tpu.memory_space<vmem>>, vector<1x2x32xbf16>
    %315 = vector.shape_cast %314 : vector<1x2x32xbf16> to vector<2x32xbf16>
    %316 = arith.extf %315 : vector<2x32xbf16> to vector<2x32xf32>
    %317 = arith.addf %312, %316 : vector<2x32xf32>
    %318 = arith.negf %317 : vector<2x32xf32>
    %319 = math.exp %318 : vector<2x32xf32>
    %cst_101 = arith.constant 1.000000e+00 : f32
    %320 = vector.broadcast %cst_101 : f32 to vector<2x32xf32>
    %321 = arith.addf %320, %319 : vector<2x32xf32>
    %322 = arith.divf %320, %321 : vector<2x32xf32>
    %323 = arith.mulf %317, %322 : vector<2x32xf32>
    %324 = arith.truncf %323 : vector<2x32xf32> to vector<2x32xbf16>
    %cst_102 = arith.constant dense<0.000000e+00> : vector<2x96xf32>
    %325 = tpu.matmul %324, %4, %cst_102 {dimension_numbers = #tpu.dot_dimension_numbers<[1], [0], [0], [1], [0, 0, 1, 1], [], []>} : vector<2x32xbf16>, vector<32x96xbf16>, vector<2x96xf32> -> vector<2x96xf32>
    %326 = arith.truncf %258 : vector<2x32xf32> to vector<2x32xbf16>
    %cst_103 = arith.constant dense<0.000000e+00> : vector<2x96xf32>
    %327 = tpu.matmul %326, %15, %cst_103 {dimension_numbers = #tpu.dot_dimension_numbers<[1], [0], [0], [1], [0, 0, 1, 1], [], []>} : vector<2x32xbf16>, vector<32x96xbf16>, vector<2x96xf32> -> vector<2x96xf32>
    %328 = vector.extract_strided_slice %325 {offsets = [0, 0], sizes = [2, 64], strides = [1, 1]} : vector<2x96xf32> to vector<2x64xf32>
    %329 = vector.extract_strided_slice %327 {offsets = [0, 0], sizes = [2, 64], strides = [1, 1]} : vector<2x96xf32> to vector<2x64xf32>
    %330 = arith.addf %328, %329 : vector<2x64xf32>
    %331 = arith.addf %330, %19 : vector<2x64xf32>
    %332 = arith.negf %331 : vector<2x64xf32>
    %333 = math.exp %332 : vector<2x64xf32>
    %cst_104 = arith.constant 1.000000e+00 : f32
    %334 = vector.broadcast %cst_104 : f32 to vector<2x64xf32>
    %335 = arith.addf %334, %333 : vector<2x64xf32>
    %336 = arith.divf %334, %335 : vector<2x64xf32>
    %337 = vector.extract_strided_slice %336 {offsets = [0, 0], sizes = [2, 32], strides = [1, 1]} : vector<2x64xf32> to vector<2x32xf32>
    %338 = vector.extract_strided_slice %336 {offsets = [0, 32], sizes = [2, 32], strides = [1, 1]} : vector<2x64xf32> to vector<2x32xf32>
    %339 = vector.extract_strided_slice %325 {offsets = [0, 64], sizes = [2, 32], strides = [1, 1]} : vector<2x96xf32> to vector<2x32xf32>
    %340 = arith.addf %339, %23 : vector<2x32xf32>
    %341 = vector.extract_strided_slice %327 {offsets = [0, 64], sizes = [2, 32], strides = [1, 1]} : vector<2x96xf32> to vector<2x32xf32>
    %342 = arith.addf %341, %27 : vector<2x32xf32>
    %343 = arith.mulf %337, %342 : vector<2x32xf32>
    %344 = arith.addf %340, %343 : vector<2x32xf32>
    %345 = math.tanh %344 : vector<2x32xf32>
    %cst_105 = arith.constant 1.000000e+00 : f32
    %346 = vector.broadcast %cst_105 : f32 to vector<2x32xf32>
    %347 = arith.subf %346, %338 : vector<2x32xf32>
    %348 = arith.mulf %347, %345 : vector<2x32xf32>
    %349 = arith.mulf %338, %258 : vector<2x32xf32>
    %350 = arith.addf %348, %349 : vector<2x32xf32>
    %351 = arith.truncf %350 : vector<2x32xf32> to vector<2x32xbf16>
    %cst_106 = arith.constant dense<0.000000e+00> : vector<2x64xf32>
    %352 = tpu.matmul %351, %5, %cst_106 {dimension_numbers = #tpu.dot_dimension_numbers<[1], [0], [0], [1], [0, 0, 1, 1], [], []>} : vector<2x32xbf16>, vector<32x64xbf16>, vector<2x64xf32> -> vector<2x64xf32>
    %353 = arith.index_cast %c3_i32 : i32 to index
    %c0_107 = arith.constant 0 : index
    %c0_108 = arith.constant 0 : index
    %354 = vector.load %arg5[%353, %c0_107, %c0_108] : memref<4x2x64xbf16, #tpu.memory_space<vmem>>, vector<1x2x64xbf16>
    %355 = vector.shape_cast %354 : vector<1x2x64xbf16> to vector<2x64xbf16>
    %356 = arith.extf %355 : vector<2x64xbf16> to vector<2x64xf32>
    %357 = arith.addf %352, %356 : vector<2x64xf32>
    %358 = arith.negf %357 : vector<2x64xf32>
    %359 = math.exp %358 : vector<2x64xf32>
    %cst_109 = arith.constant 1.000000e+00 : f32
    %360 = vector.broadcast %cst_109 : f32 to vector<2x64xf32>
    %361 = arith.addf %360, %359 : vector<2x64xf32>
    %362 = arith.divf %360, %361 : vector<2x64xf32>
    %363 = arith.mulf %357, %362 : vector<2x64xf32>
    %364 = vector.extract_strided_slice %363 {offsets = [0, 0], sizes = [2, 32], strides = [1, 1]} : vector<2x64xf32> to vector<2x32xf32>
    %365 = arith.truncf %364 : vector<2x32xf32> to vector<2x32xbf16>
    %cst_110 = arith.constant dense<0.000000e+00> : vector<2x32xf32>
    %366 = tpu.matmul %365, %6, %cst_110 {dimension_numbers = #tpu.dot_dimension_numbers<[1], [0], [0], [1], [0, 0, 1, 1], [], []>} : vector<2x32xbf16>, vector<32x32xbf16>, vector<2x32xf32> -> vector<2x32xf32>
    %367 = arith.addf %366, %10 : vector<2x32xf32>
    %368 = vector.extract_strided_slice %363 {offsets = [0, 32], sizes = [2, 32], strides = [1, 1]} : vector<2x64xf32> to vector<2x32xf32>
    %369 = arith.truncf %368 : vector<2x32xf32> to vector<2x32xbf16>
    %cst_111 = arith.constant dense<0.000000e+00> : vector<2x32xf32>
    %370 = tpu.matmul %369, %7, %cst_111 {dimension_numbers = #tpu.dot_dimension_numbers<[1], [0], [0], [1], [0, 0, 1, 1], [], []>} : vector<2x32xbf16>, vector<32x32xbf16>, vector<2x32xf32> -> vector<2x32xf32>
    %371 = arith.addf %370, %13 : vector<2x32xf32>
    %372 = arith.index_cast %c3_i32 : i32 to index
    %c0_112 = arith.constant 0 : index
    %c0_113 = arith.constant 0 : index
    %373 = vector.load %arg7[%372, %c0_112, %c0_113] : memref<4x2x32xbf16, #tpu.memory_space<vmem>>, vector<1x2x32xbf16>
    %374 = vector.shape_cast %373 : vector<1x2x32xbf16> to vector<2x32xbf16>
    %375 = vector.extract_strided_slice %367 {offsets = [0, 0], sizes = [2, 16], strides = [1, 1]} : vector<2x32xf32> to vector<2x16xf32>
    %376 = vector.extract_strided_slice %367 {offsets = [0, 16], sizes = [2, 16], strides = [1, 1]} : vector<2x32xf32> to vector<2x16xf32>
    %377 = math.exp %376 : vector<2x16xf32>
    %cst_114 = arith.constant 1.000000e+00 : f32
    %378 = vector.broadcast %cst_114 : f32 to vector<2x16xf32>
    %379 = arith.addf %378, %377 : vector<2x16xf32>
    %380 = vector.extract_strided_slice %374 {offsets = [0, 0], sizes = [2, 16], strides = [1, 1]} : vector<2x32xbf16> to vector<2x16xbf16>
    %381 = arith.extf %380 : vector<2x16xbf16> to vector<2x16xf32>
    %382 = arith.mulf %379, %381 : vector<2x16xf32>
    %383 = arith.addf %375, %382 : vector<2x16xf32>
    %384 = vector.extract_strided_slice %371 {offsets = [0, 0], sizes = [2, 16], strides = [1, 1]} : vector<2x32xf32> to vector<2x16xf32>
    %385 = vector.extract_strided_slice %371 {offsets = [0, 16], sizes = [2, 16], strides = [1, 1]} : vector<2x32xf32> to vector<2x16xf32>
    %386 = math.exp %385 : vector<2x16xf32>
    %cst_115 = arith.constant 1.000000e+00 : f32
    %387 = vector.broadcast %cst_115 : f32 to vector<2x16xf32>
    %388 = arith.addf %387, %386 : vector<2x16xf32>
    %389 = vector.extract_strided_slice %374 {offsets = [0, 16], sizes = [2, 16], strides = [1, 1]} : vector<2x32xbf16> to vector<2x16xbf16>
    %390 = arith.extf %389 : vector<2x16xbf16> to vector<2x16xf32>
    %391 = arith.mulf %388, %390 : vector<2x16xf32>
    %392 = arith.addf %384, %391 : vector<2x16xf32>
    %393 = tpu.concatenate %350, %367, %371, %383, %392 in 1 : vector<2x32xf32>, vector<2x32xf32>, vector<2x32xf32>, vector<2x16xf32>, vector<2x16xf32> -> vector<2x128xf32>
    %394 = arith.index_cast %c3_i32 : i32 to index
    %c0_116 = arith.constant 0 : index
    %c0_117 = arith.constant 0 : index
    %395 = vector.load %arg19[%394, %c0_116, %c0_117] : memref<4x2x128xf32, #tpu.memory_space<vmem>>, vector<1x2x128xf32>
    %396 = vector.shape_cast %395 : vector<1x2x128xf32> to vector<2x128xf32>
    %397 = vector.shape_cast %393 : vector<2x128xf32> to vector<1x2x128xf32>
    tpu.vector_store %arg19[%394, %c0_116, %c0_117], %397 {strides = array<i32>} : memref<4x2x128xf32, #tpu.memory_space<vmem>>, vector<1x2x128xf32>,
    %c4_i32 = arith.constant 4 : i32
    %c0_118 = arith.constant 0 : index
    %c0_119 = arith.constant 0 : index
    %398 = vector.load %arg20[%c0_118, %c0_119] : memref<2x32xf32, #tpu.memory_space<vmem>>, vector<2x32xf32>
    tpu.vector_store %arg20[%c0_118, %c0_119], %350 {strides = array<i32>} : memref<2x32xf32, #tpu.memory_space<vmem>>, vector<2x32xf32>,
    %c0_120 = arith.constant 0 : index
    %c0_121 = arith.constant 0 : index
    %399 = vector.load %arg21[%c0_120, %c0_121] : memref<2x16xf32, #tpu.memory_space<vmem>>, vector<2x16xf32>
    tpu.vector_store %arg21[%c0_120, %c0_121], %392 {strides = array<i32>} : memref<2x16xf32, #tpu.memory_space<vmem>>, vector<2x16xf32>,
    return
  }
  func.func @transform_0(%arg0: i32, %arg1: i32) -> (i32, i32) {
    %c0_i32 = arith.constant 0 : i32
    %c0_i32_0 = arith.constant 0 : i32
    return %arg0, %c0_i32 : i32, i32
  }
  func.func @transform_1(%arg0: i32, %arg1: i32) -> (i32, i32) {
    %c0_i32 = arith.constant 0 : i32
    %c0_i32_0 = arith.constant 0 : i32
    return %arg0, %c0_i32 : i32, i32
  }
  func.func @transform_2(%arg0: i32, %arg1: i32) -> (i32, i32, i32) {
    %c0_i32 = arith.constant 0 : i32
    %c0_i32_0 = arith.constant 0 : i32
    return %arg1, %arg0, %c0_i32 : i32, i32, i32
  }
  func.func @transform_3(%arg0: i32, %arg1: i32) -> (i32, i32, i32) {
    %c0_i32 = arith.constant 0 : i32
    %c0_i32_0 = arith.constant 0 : i32
    return %arg1, %arg0, %c0_i32 : i32, i32, i32
  }
  func.func @transform_4(%arg0: i32, %arg1: i32) -> (i32, i32, i32) {
    %c0_i32 = arith.constant 0 : i32
    %c0_i32_0 = arith.constant 0 : i32
    return %arg1, %arg0, %c0_i32 : i32, i32, i32
  }
  func.func @transform_5(%arg0: i32, %arg1: i32) -> (i32, i32, i32) {
    %c0_i32 = arith.constant 0 : i32
    %c0_i32_0 = arith.constant 0 : i32
    return %arg1, %arg0, %c0_i32 : i32, i32, i32
  }
  func.func @transform_6(%arg0: i32, %arg1: i32) -> (i32, i32) {
    %c0_i32 = arith.constant 0 : i32
    %c0_i32_0 = arith.constant 0 : i32
    %c0_i32_1 = arith.constant 0 : i32
    return %c0_i32, %c0_i32_0 : i32, i32
  }
  func.func @transform_7(%arg0: i32, %arg1: i32) -> (i32, i32) {
    %c0_i32 = arith.constant 0 : i32
    %c0_i32_0 = arith.constant 0 : i32
    %c0_i32_1 = arith.constant 0 : i32
    return %c0_i32, %c0_i32_0 : i32, i32
  }
  func.func @transform_8(%arg0: i32, %arg1: i32) -> (i32, i32, i32) {
    %c0_i32 = arith.constant 0 : i32
    %c0_i32_0 = arith.constant 0 : i32
    %c0_i32_1 = arith.constant 0 : i32
    %c0_i32_2 = arith.constant 0 : i32
    return %c0_i32, %c0_i32_0, %c0_i32_1 : i32, i32, i32
  }
  func.func @transform_9(%arg0: i32, %arg1: i32) -> (i32, i32, i32) {
    %c0_i32 = arith.constant 0 : i32
    %c0_i32_0 = arith.constant 0 : i32
    %c0_i32_1 = arith.constant 0 : i32
    %c0_i32_2 = arith.constant 0 : i32
    return %c0_i32, %c0_i32_0, %c0_i32_1 : i32, i32, i32
  }
  func.func @transform_10(%arg0: i32, %arg1: i32) -> (i32, i32, i32) {
    %c0_i32 = arith.constant 0 : i32
    %c0_i32_0 = arith.constant 0 : i32
    %c0_i32_1 = arith.constant 0 : i32
    %c0_i32_2 = arith.constant 0 : i32
    return %c0_i32, %c0_i32_0, %c0_i32_1 : i32, i32, i32
  }
  func.func @transform_11(%arg0: i32, %arg1: i32) -> (i32, i32, i32) {
    %c0_i32 = arith.constant 0 : i32
    %c0_i32_0 = arith.constant 0 : i32
    %c0_i32_1 = arith.constant 0 : i32
    %c0_i32_2 = arith.constant 0 : i32
    return %c0_i32, %c0_i32_0, %c0_i32_1 : i32, i32, i32
  }
  func.func @transform_12(%arg0: i32, %arg1: i32) -> (i32, i32) {
    %c0_i32 = arith.constant 0 : i32
    %c0_i32_0 = arith.constant 0 : i32
    %c0_i32_1 = arith.constant 0 : i32
    return %c0_i32, %c0_i32_0 : i32, i32
  }
  func.func @transform_13(%arg0: i32, %arg1: i32) -> (i32, i32) {
    %c0_i32 = arith.constant 0 : i32
    %c0_i32_0 = arith.constant 0 : i32
    %c0_i32_1 = arith.constant 0 : i32
    return %c0_i32, %c0_i32_0 : i32, i32
  }
  func.func @transform_14(%arg0: i32, %arg1: i32) -> (i32, i32) {
    %c0_i32 = arith.constant 0 : i32
    %c0_i32_0 = arith.constant 0 : i32
    %c0_i32_1 = arith.constant 0 : i32
    return %c0_i32, %c0_i32_0 : i32, i32
  }
  func.func @transform_15(%arg0: i32, %arg1: i32) -> (i32, i32) {
    %c0_i32 = arith.constant 0 : i32
    %c0_i32_0 = arith.constant 0 : i32
    %c0_i32_1 = arith.constant 0 : i32
    return %c0_i32, %c0_i32_0 : i32, i32
  }
  func.func @transform_16(%arg0: i32, %arg1: i32) -> (i32, i32) {
    %c0_i32 = arith.constant 0 : i32
    %c0_i32_0 = arith.constant 0 : i32
    %c0_i32_1 = arith.constant 0 : i32
    return %c0_i32, %c0_i32_0 : i32, i32
  }
  func.func @transform_17(%arg0: i32, %arg1: i32) -> (i32, i32, i32) {
    %c0_i32 = arith.constant 0 : i32
    %c0_i32_0 = arith.constant 0 : i32
    return %arg1, %arg0, %c0_i32 : i32, i32, i32
  }
}

</mosaic_0001>

<llo_original>
// kernel: tpu_custom_call.1
$region0: #{tpu_custom_call.1}
  #allocation0 [shape = 'u32[]', space=smem, size = 0x4, offset = 0x4, fixed_abs, tag = 'smem constant byte address 0x4 - core index']
  #allocation1 [shape = 'u32[144,128]{1,0:T(1,128)}', space=vmem, size = 0x12000, scoped, tag = 'internal scratch']
  #allocation2 [shape = 'f32[2,32]{1,0:T(2,128)}', space=vmem, size = 0x400, scoped, tag = 'scratch operand']
  #allocation3 [shape = 'f32[2,16]{1,0:T(2,128)}', space=vmem, size = 0x400, scoped, tag = 'scratch operand']
  %s0 = inlined_call_operand.hbm [shape: f32[2,32], index: 0, kind: input, shape index: {}]
  %s1 = inlined_call_operand.hbm [shape: f32[2,16], index: 1, kind: input, shape index: {}]
  %s2 = inlined_call_operand.hbm [shape: bf16[8,2,32], index: 2, kind: input, shape index: {}]
  %s3 = inlined_call_operand.hbm [shape: bf16[8,2,64], index: 3, kind: input, shape index: {}]
  %s4 = inlined_call_operand.vmem [shape: f32[8,2,1], index: 4, kind: input, shape index: {}]
  %s5 = inlined_call_operand.hbm [shape: bf16[8,2,32], index: 5, kind: input, shape index: {}]
  %s6 = inlined_call_operand.hbm [shape: bf16[16,32], index: 6, kind: input, shape index: {}]
  %s7 = inlined_call_operand.vmem [shape: bf16[32,96], index: 7, kind: input, shape index: {}]
  %s8 = inlined_call_operand.vmem [shape: bf16[1,32,96], index: 8, kind: input, shape index: {}]
  %s9 = inlined_call_operand.vmem [shape: f32[1,1,64], index: 9, kind: input, shape index: {}]
  %s10 = inlined_call_operand.vmem [shape: f32[1,1,32], index: 10, kind: input, shape index: {}]
  %s11 = inlined_call_operand.vmem [shape: f32[1,1,32], index: 11, kind: input, shape index: {}]
  %s12 = inlined_call_operand.vmem [shape: bf16[32,64], index: 12, kind: input, shape index: {}]
  %s13 = inlined_call_operand.vmem [shape: bf16[32,32], index: 13, kind: input, shape index: {}]
  %s14 = inlined_call_operand.vmem [shape: f32[1,32], index: 14, kind: input, shape index: {}]
  %s15 = inlined_call_operand.hbm [shape: bf16[32,32], index: 15, kind: input, shape index: {}]
  %s16 = inlined_call_operand.vmem [shape: f32[1,32], index: 16, kind: input, shape index: {}]
  %s17 = inlined_call_operand.hbm [shape: f32[8,2,128], index: 17, kind: output, shape index: {}]
  %s18 = sld [smem:[#allocation0]]
  $region133: #{tpu_custom_call.1} parent=0
    _
  %s20 = ssub.s32 1, %s18
  %s21 = scalar_select 0, %s20, %s18
  $region1: #{tpu_custom_call.1} parent=0
    #allocation4 [shape = 'u8[1024]{0}', space=vmem, size = 0x400, scoped, tag = 'input window, operand 0, single buffered']
    #allocation5 [shape = 's32[2]{0}', space=sflag, size = 0x8, scoped, tag = 'scoped memory for tpu_custom_call.1']
    #allocation6 [shape = 's32[2]{0}', space=sflag, size = 0x8, scoped, tag = 'scoped memory for tpu_custom_call.1']
    #allocation7 [shape = 'u8[1024]{0}', space=vmem, size = 0x400, scoped, tag = 'input window, operand 1, single buffered']
    #allocation8 [shape = 's32[1]{0}', space=sflag, size = 0x4, scoped, tag = 'scoped memory for tpu_custom_call.1']
    #allocation9 [shape = 'u8[4096]{0}', space=vmem, size = 0x1000, scoped, tag = 'input window, operand 2']
    #allocation10 [shape = 'u8[4096]{0}', space=vmem, size = 0x1000, scoped, tag = 'input window, operand 3']
    #allocation11 [shape = 'u8[4096]{0}', space=vmem, size = 0x1000, scoped, tag = 'input window, operand 5']
    #allocation12 [shape = 'u8[4096]{0}', space=vmem, size = 0x1000, scoped, tag = 'input window, operand 6, single buffered']
    #allocation13 [shape = 'u8[8192]{0}', space=vmem, size = 0x2000, scoped, tag = 'input window, operand 15, single buffered']
    #allocation14 [shape = 's32[1]{0}', space=sflag, size = 0x4, scoped, tag = 'scoped memory for tpu_custom_call.1']
    #allocation15 [shape = 'u8[8192]{0}', space=vmem, size = 0x2000, scoped, tag = 'output window, operand 0']
    %22 = vsyncpa [#allocation5], 0
    %23 = vsyncpa [#allocation8], 0
    %24 = vsyncpa [#allocation14], 0
    %25 = vsyncpa [#allocation6], 0
    %s26 = scalar_lea.sflag [#allocation6], 1
    %27 = vsyncpa %s26, 0
    loop: start=0, step=1, limit=4
    $region2: #{tpu_custom_call.1} parent=1 // loop_pre_header
      _
    $region3: #{tpu_custom_call.1} parent=1 // loop_header
      %s29 = sphi 0, %s33
      %p30 = scmp.ge.s32.totalorder %s29, 4
      %s36 = sphi 0, %s48
      %s37 = sphi 0, %s44
      %s38 = sphi 0, %s36
      %s39 = sphi 0, %s37
      %s40 = sphi 0, %s38
      %s41 = sphi 0, %s39
      %s51 = sphi 0, %s53
      %s54 = sphi 0, %s51
      %s55 = sphi 0, %s54
      %s71 = sphi 0, %s55
      %s77 = sphi 0, %s79
      %s80 = sphi 0, %s77
      %s81 = sphi 0, %s80
      %s97 = sphi 0, %s81
      %s105 = sphi 0, %s107
      %s108 = sphi 0, %s105
      %s109 = sphi 0, %s108
      %s125 = sphi 0, %s109
      %s133 = sphi 0, %s135
      %s136 = sphi 0, %s133
      %s137 = sphi 0, %s136
      %s153 = sphi 0, %s137
      %s161 = sphi 0, %s163
      %s164 = sphi 0, %s161
      %s165 = sphi 0, %s164
      %s181 = sphi 0, %s165
      %s189 = sphi 0, %s191
      %s192 = sphi 0, %s189
      %s193 = sphi 0, %s192
      %s209 = sphi 0, %s193
      %s213 = sphi 0, %s213
      %s215 = sphi 0, %s213
      %s216 = sphi 0, %s215
      %s230 = sphi 0, %s216
      %s234 = sphi 0, %s234
      %s236 = sphi 0, %s234
      %s237 = sphi 0, %s236
      %s251 = sphi 0, %s237
      %s255 = sphi 0, %s255
      %s257 = sphi 0, %s255
      %s258 = sphi 0, %s257
      %s272 = sphi 0, %s258
      %s276 = sphi 0, %s276
      %s278 = sphi 0, %s276
      %s279 = sphi 0, %s278
      %s293 = sphi 0, %s279
      %s297 = sphi 0, %s297
      %s299 = sphi 0, %s297
      %s300 = sphi 0, %s299
      %s314 = sphi 0, %s300
      %s318 = sphi 0, %s318
      %s320 = sphi 0, %s318
      %s321 = sphi 0, %s320
      %s335 = sphi 0, %s321
      %s339 = sphi 0, %s339
      %s341 = sphi 0, %s339
      %s342 = sphi 0, %s341
      %s356 = sphi 0, %s342
      %s360 = sphi 0, %s360
      %s362 = sphi 0, %s360
      %s363 = sphi 0, %s362
      %s377 = sphi 0, %s363
      %s381 = sphi 0, %s381
      %s383 = sphi 0, %s381
      %s384 = sphi 0, %s383
      %s398 = sphi 0, %s384
      %s402 = sphi 0, %s402
      %s404 = sphi 0, %s402
      %s405 = sphi 0, %s404
      %s419 = sphi 0, %s405
      %s423 = sphi 0, %s423
      %s425 = sphi 0, %s423
      %s426 = sphi 0, %s425
      %s440 = sphi 0, %s426
      %s448 = sphi 0, %s450
      %s451 = sphi 0, %s448
      %s452 = sphi 0, %s451
      %s468 = sphi 0, %s452
    $region4: #{tpu_custom_call.1} parent=1 // loop_header_branch
      %32 = sbr.rel (%p30) target = $region8
    $region5: #{tpu_custom_call.1} parent=1 // loop_body
      %s34 = ssub.s32 %s29, 1
      %s35 = ssub.s32 %s29, 2
      %s42 = sadd.s32 1, %s37
      %p43 = scmp.ge.s32.totalorder %s42, 2
      %s44 = scalar_select %p43, 0, %s42
      %s45 = sadd.s32 1, %s36
      %s46 = scalar_select %p43, %s45, %s36
      %p47 = scmp.ge.s32.totalorder %s46, 1
      %s48 = scalar_select %p47, 0, %s46
      %s49 = ssub.s32 %s36, %s48
      %p50 = scmp.eq.s32.totalorder %s49, 0
      %s52 = sadd.s32 %s51, 1
      %s53 = scalar_select %p50, %s51, %s52
      %p56 = pneg %p50
      %p57 = scmp.eq.s32.totalorder %s29, 1
      %p58 = por %p56, %p57
      %p59 = scmp.ne.s32.totalorder %s51, %s54
      %p60 = scmp.eq.s32.totalorder %s29, 0
      %p61 = por %p59, %p60
      %p62 = scmp.ne.s32.totalorder %s51, %s54
      %p63 = scmp.eq.s32.totalorder %s34, 1
      %p64 = por %p62, %p63
      %p65 = scmp.ne.s32.totalorder %s54, %s55
      %p66 = scmp.eq.s32.totalorder %s34, 0
      %p67 = por %p65, %p66
      %p68 = scmp.ne.s32.totalorder %s54, %s55
      %p69 = scmp.eq.s32.totalorder %s35, 1
      %p70 = por %p68, %p69
      %p72 = scmp.ne.s32.totalorder %s55, %s71
      %p73 = scmp.eq.s32.totalorder %s35, 0
      %p74 = por %p72, %p73
      %s75 = ssub.s32 %s36, %s48
      %p76 = scmp.eq.s32.totalorder %s75, 0
      %s78 = sadd.s32 %s77, 1
      %s79 = scalar_select %p76, %s77, %s78
      %p82 = pneg %p76
      %p83 = scmp.eq.s32.totalorder %s29, 1
      %p84 = por %p82, %p83
      %p85 = scmp.ne.s32.totalorder %s77, %s80
      %p86 = scmp.eq.s32.totalorder %s29, 0
      %p87 = por %p85, %p86
      %p88 = scmp.ne.s32.totalorder %s77, %s80
      %p89 = scmp.eq.s32.totalorder %s34, 1
      %p90 = por %p88, %p89
      %p91 = scmp.ne.s32.totalorder %s80, %s81
      %p92 = scmp.eq.s32.totalorder %s34, 0
      %p93 = por %p91, %p92
      %p94 = scmp.ne.s32.totalorder %s80, %s81
      %p95 = scmp.eq.s32.totalorder %s35, 1
      %p96 = por %p94, %p95
      %p98 = scmp.ne.s32.totalorder %s81, %s97
      %p99 = scmp.eq.s32.totalorder %s35, 0
      %p100 = por %p98, %p99
      %s101 = ssub.s32 %s37, %s44
      %s102 = ssub.s32 %s36, %s48
      %s103 = sor.u32 %s101, %s102
      %p104 = scmp.eq.s32.totalorder %s103, 0
      %s106 = sadd.s32 %s105, 1
      %s107 = scalar_select %p104, %s105, %s106
      %p110 = pneg %p104
      %p111 = scmp.eq.s32.totalorder %s29, 1
      %p112 = por %p110, %p111
      %p113 = scmp.ne.s32.totalorder %s105, %s108
      %p114 = scmp.eq.s32.totalorder %s29, 0
      %p115 = por %p113, %p114
      %p116 = scmp.ne.s32.totalorder %s105, %s108
      %p117 = scmp.eq.s32.totalorder %s34, 1
      %p118 = por %p116, %p117
      %p119 = scmp.ne.s32.totalorder %s108, %s109
      %p120 = scmp.eq.s32.totalorder %s34, 0
      %p121 = por %p119, %p120
      %p122 = scmp.ne.s32.totalorder %s108, %s109
      %p123 = scmp.eq.s32.totalorder %s35, 1
      %p124 = por %p122, %p123
      %p126 = scmp.ne.s32.totalorder %s109, %s125
      %p127 = scmp.eq.s32.totalorder %s35, 0
      %p128 = por %p126, %p127
      %s129 = ssub.s32 %s37, %s44
      %s130 = ssub.s32 %s36, %s48
      %s131 = sor.u32 %s129, %s130
      %p132 = scmp.eq.s32.totalorder %s131, 0
      %s134 = sadd.s32 %s133, 1
      %s135 = scalar_select %p132, %s133, %s134
      %p138 = pneg %p132
      %p139 = scmp.eq.s32.totalorder %s29, 1
      %p140 = por %p138, %p139
      %p141 = scmp.ne.s32.totalorder %s133, %s136
      %p142 = scmp.eq.s32.totalorder %s29, 0
      %p143 = por %p141, %p142
      %p144 = scmp.ne.s32.totalorder %s133, %s136
      %p145 = scmp.eq.s32.totalorder %s34, 1
      %p146 = por %p144, %p145
      %p147 = scmp.ne.s32.totalorder %s136, %s137
      %p148 = scmp.eq.s32.totalorder %s34, 0
      %p149 = por %p147, %p148
      %p150 = scmp.ne.s32.totalorder %s136, %s137
      %p151 = scmp.eq.s32.totalorder %s35, 1
      %p152 = por %p150, %p151
      %p154 = scmp.ne.s32.totalorder %s137, %s153
      %p155 = scmp.eq.s32.totalorder %s35, 0
      %p156 = por %p154, %p155
      %s157 = ssub.s32 %s37, %s44
      %s158 = ssub.s32 %s36, %s48
      %s159 = sor.u32 %s157, %s158
      %p160 = scmp.eq.s32.totalorder %s159, 0
      %s162 = sadd.s32 %s161, 1
      %s163 = scalar_select %p160, %s161, %s162
      %p166 = pneg %p160
      %p167 = scmp.eq.s32.totalorder %s29, 1
      %p168 = por %p166, %p167
      %p169 = scmp.ne.s32.totalorder %s161, %s164
      %p170 = scmp.eq.s32.totalorder %s29, 0
      %p171 = por %p169, %p170
      %p172 = scmp.ne.s32.totalorder %s161, %s164
      %p173 = scmp.eq.s32.totalorder %s34, 1
      %p174 = por %p172, %p173
      %p175 = scmp.ne.s32.totalorder %s164, %s165
      %p176 = scmp.eq.s32.totalorder %s34, 0
      %p177 = por %p175, %p176
      %p178 = scmp.ne.s32.totalorder %s164, %s165
      %p179 = scmp.eq.s32.totalorder %s35, 1
      %p180 = por %p178, %p179
      %p182 = scmp.ne.s32.totalorder %s165, %s181
      %p183 = scmp.eq.s32.totalorder %s35, 0
      %p184 = por %p182, %p183
      %s185 = ssub.s32 %s37, %s44
      %s186 = ssub.s32 %s36, %s48
      %s187 = sor.u32 %s185, %s186
      %p188 = scmp.eq.s32.totalorder %s187, 0
      %s190 = sadd.s32 %s189, 1
      %s191 = scalar_select %p188, %s189, %s190
      %p194 = pneg %p188
      %p195 = scmp.eq.s32.totalorder %s29, 1
      %p196 = por %p194, %p195
      %p197 = scmp.ne.s32.totalorder %s189, %s192
      %p198 = scmp.eq.s32.totalorder %s29, 0
      %p199 = por %p197, %p198
      %p200 = scmp.ne.s32.totalorder %s189, %s192
      %p201 = scmp.eq.s32.totalorder %s34, 1
      %p202 = por %p200, %p201
      %p203 = scmp.ne.s32.totalorder %s192, %s193
      %p204 = scmp.eq.s32.totalorder %s34, 0
      %p205 = por %p203, %p204
      %p206 = scmp.ne.s32.totalorder %s192, %s193
      %p207 = scmp.eq.s32.totalorder %s35, 1
      %p208 = por %p206, %p207
      %p210 = scmp.ne.s32.totalorder %s193, %s209
      %p211 = scmp.eq.s32.totalorder %s35, 0
      %p212 = por %p210, %p211
      %s214 = sadd.s32 %s213, 1
      %p217 = scmp.eq.s32.totalorder %s29, 1
      %p218 = scmp.ne.s32.totalorder %s213, %s215
      %p219 = scmp.eq.s32.totalorder %s29, 0
      %p220 = por %p218, %p219
      %p221 = scmp.ne.s32.totalorder %s213, %s215
      %p222 = scmp.eq.s32.totalorder %s34, 1
      %p223 = por %p221, %p222
      %p224 = scmp.ne.s32.totalorder %s215, %s216
      %p225 = scmp.eq.s32.totalorder %s34, 0
      %p226 = por %p224, %p225
      %p227 = scmp.ne.s32.totalorder %s215, %s216
      %p228 = scmp.eq.s32.totalorder %s35, 1
      %p229 = por %p227, %p228
      %p231 = scmp.ne.s32.totalorder %s216, %s230
      %p232 = scmp.eq.s32.totalorder %s35, 0
      %p233 = por %p231, %p232
      %s235 = sadd.s32 %s234, 1
      %p238 = scmp.eq.s32.totalorder %s29, 1
      %p239 = scmp.ne.s32.totalorder %s234, %s236
      %p240 = scmp.eq.s32.totalorder %s29, 0
      %p241 = por %p239, %p240
      %p242 = scmp.ne.s32.totalorder %s234, %s236
      %p243 = scmp.eq.s32.totalorder %s34, 1
      %p244 = por %p242, %p243
      %p245 = scmp.ne.s32.totalorder %s236, %s237
      %p246 = scmp.eq.s32.totalorder %s34, 0
      %p247 = por %p245, %p246
      %p248 = scmp.ne.s32.totalorder %s236, %s237
      %p249 = scmp.eq.s32.totalorder %s35, 1
      %p250 = por %p248, %p249
      %p252 = scmp.ne.s32.totalorder %s237, %s251
      %p253 = scmp.eq.s32.totalorder %s35, 0
      %p254 = por %p252, %p253
      %s256 = sadd.s32 %s255, 1
      %p259 = scmp.eq.s32.totalorder %s29, 1
      %p260 = scmp.ne.s32.totalorder %s255, %s257
      %p261 = scmp.eq.s32.totalorder %s29, 0
      %p262 = por %p260, %p261
      %p263 = scmp.ne.s32.totalorder %s255, %s257
      %p264 = scmp.eq.s32.totalorder %s34, 1
      %p265 = por %p263, %p264
      %p266 = scmp.ne.s32.totalorder %s257, %s258
      %p267 = scmp.eq.s32.totalorder %s34, 0
      %p268 = por %p266, %p267
      %p269 = scmp.ne.s32.totalorder %s257, %s258
      %p270 = scmp.eq.s32.totalorder %s35, 1
      %p271 = por %p269, %p270
      %p273 = scmp.ne.s32.totalorder %s258, %s272
      %p274 = scmp.eq.s32.totalorder %s35, 0
      %p275 = por %p273, %p274
      %s277 = sadd.s32 %s276, 1
      %p280 = scmp.eq.s32.totalorder %s29, 1
      %p281 = scmp.ne.s32.totalorder %s276, %s278
      %p282 = scmp.eq.s32.totalorder %s29, 0
      %p283 = por %p281, %p282
      %p284 = scmp.ne.s32.totalorder %s276, %s278
      %p285 = scmp.eq.s32.totalorder %s34, 1
      %p286 = por %p284, %p285
      %p287 = scmp.ne.s32.totalorder %s278, %s279
      %p288 = scmp.eq.s32.totalorder %s34, 0
      %p289 = por %p287, %p288
      %p290 = scmp.ne.s32.totalorder %s278, %s279
      %p291 = scmp.eq.s32.totalorder %s35, 1
      %p292 = por %p290, %p291
      %p294 = scmp.ne.s32.totalorder %s279, %s293
      %p295 = scmp.eq.s32.totalorder %s35, 0
      %p296 = por %p294, %p295
      %s298 = sadd.s32 %s297, 1
      %p301 = scmp.eq.s32.totalorder %s29, 1
      %p302 = scmp.ne.s32.totalorder %s297, %s299
      %p303 = scmp.eq.s32.totalorder %s29, 0
      %p304 = por %p302, %p303
      %p305 = scmp.ne.s32.totalorder %s297, %s299
      %p306 = scmp.eq.s32.totalorder %s34, 1
      %p307 = por %p305, %p306
      %p308 = scmp.ne.s32.totalorder %s299, %s300
      %p309 = scmp.eq.s32.totalorder %s34, 0
      %p310 = por %p308, %p309
      %p311 = scmp.ne.s32.totalorder %s299, %s300
      %p312 = scmp.eq.s32.totalorder %s35, 1
      %p313 = por %p311, %p312
      %p315 = scmp.ne.s32.totalorder %s300, %s314
      %p316 = scmp.eq.s32.totalorder %s35, 0
      %p317 = por %p315, %p316
      %s319 = sadd.s32 %s318, 1
      %p322 = scmp.eq.s32.totalorder %s29, 1
      %p323 = scmp.ne.s32.totalorder %s318, %s320
      %p324 = scmp.eq.s32.totalorder %s29, 0
      %p325 = por %p323, %p324
      %p326 = scmp.ne.s32.totalorder %s318, %s320
      %p327 = scmp.eq.s32.totalorder %s34, 1
      %p328 = por %p326, %p327
      %p329 = scmp.ne.s32.totalorder %s320, %s321
      %p330 = scmp.eq.s32.totalorder %s34, 0
      %p331 = por %p329, %p330
      %p332 = scmp.ne.s32.totalorder %s320, %s321
      %p333 = scmp.eq.s32.totalorder %s35, 1
      %p334 = por %p332, %p333
      %p336 = scmp.ne.s32.totalorder %s321, %s335
      %p337 = scmp.eq.s32.totalorder %s35, 0
      %p338 = por %p336, %p337
      %s340 = sadd.s32 %s339, 1
      %p343 = scmp.eq.s32.totalorder %s29, 1
      %p344 = scmp.ne.s32.totalorder %s339, %s341
      %p345 = scmp.eq.s32.totalorder %s29, 0
      %p346 = por %p344, %p345
      %p347 = scmp.ne.s32.totalorder %s339, %s341
      %p348 = scmp.eq.s32.totalorder %s34, 1
      %p349 = por %p347, %p348
      %p350 = scmp.ne.s32.totalorder %s341, %s342
      %p351 = scmp.eq.s32.totalorder %s34, 0
      %p352 = por %p350, %p351
      %p353 = scmp.ne.s32.totalorder %s341, %s342
      %p354 = scmp.eq.s32.totalorder %s35, 1
      %p355 = por %p353, %p354
      %p357 = scmp.ne.s32.totalorder %s342, %s356
      %p358 = scmp.eq.s32.totalorder %s35, 0
      %p359 = por %p357, %p358
      %s361 = sadd.s32 %s360, 1
      %p364 = scmp.eq.s32.totalorder %s29, 1
      %p365 = scmp.ne.s32.totalorder %s360, %s362
      %p366 = scmp.eq.s32.totalorder %s29, 0
      %p367 = por %p365, %p366
      %p368 = scmp.ne.s32.totalorder %s360, %s362
      %p369 = scmp.eq.s32.totalorder %s34, 1
      %p370 = por %p368, %p369
      %p371 = scmp.ne.s32.totalorder %s362, %s363
      %p372 = scmp.eq.s32.totalorder %s34, 0
      %p373 = por %p371, %p372
      %p374 = scmp.ne.s32.totalorder %s362, %s363
      %p375 = scmp.eq.s32.totalorder %s35, 1
      %p376 = por %p374, %p375
      %p378 = scmp.ne.s32.totalorder %s363, %s377
      %p379 = scmp.eq.s32.totalorder %s35, 0
      %p380 = por %p378, %p379
      %s382 = sadd.s32 %s381, 1
      %p385 = scmp.eq.s32.totalorder %s29, 1
      %p386 = scmp.ne.s32.totalorder %s381, %s383
      %p387 = scmp.eq.s32.totalorder %s29, 0
      %p388 = por %p386, %p387
      %p389 = scmp.ne.s32.totalorder %s381, %s383
      %p390 = scmp.eq.s32.totalorder %s34, 1
      %p391 = por %p389, %p390
      %p392 = scmp.ne.s32.totalorder %s383, %s384
      %p393 = scmp.eq.s32.totalorder %s34, 0
      %p394 = por %p392, %p393
      %p395 = scmp.ne.s32.totalorder %s383, %s384
      %p396 = scmp.eq.s32.totalorder %s35, 1
      %p397 = por %p395, %p396
      %p399 = scmp.ne.s32.totalorder %s384, %s398
      %p400 = scmp.eq.s32.totalorder %s35, 0
      %p401 = por %p399, %p400
      %s403 = sadd.s32 %s402, 1
      %p406 = scmp.eq.s32.totalorder %s29, 1
      %p407 = scmp.ne.s32.totalorder %s402, %s404
      %p408 = scmp.eq.s32.totalorder %s29, 0
      %p409 = por %p407, %p408
      %p410 = scmp.ne.s32.totalorder %s402, %s404
      %p411 = scmp.eq.s32.totalorder %s34, 1
      %p412 = por %p410, %p411
      %p413 = scmp.ne.s32.totalorder %s404, %s405
      %p414 = scmp.eq.s32.totalorder %s34, 0
      %p415 = por %p413, %p414
      %p416 = scmp.ne.s32.totalorder %s404, %s405
      %p417 = scmp.eq.s32.totalorder %s35, 1
      %p418 = por %p416, %p417
      %p420 = scmp.ne.s32.totalorder %s405, %s419
      %p421 = scmp.eq.s32.totalorder %s35, 0
      %p422 = por %p420, %p421
      %s424 = sadd.s32 %s423, 1
      %p427 = scmp.eq.s32.totalorder %s29, 1
      %p428 = scmp.ne.s32.totalorder %s423, %s425
      %p429 = scmp.eq.s32.totalorder %s29, 0
      %p430 = por %p428, %p429
      %p431 = scmp.ne.s32.totalorder %s423, %s425
      %p432 = scmp.eq.s32.totalorder %s34, 1
      %p433 = por %p431, %p432
      %p434 = scmp.ne.s32.totalorder %s425, %s426
      %p435 = scmp.eq.s32.totalorder %s34, 0
      %p436 = por %p434, %p435
      %p437 = scmp.ne.s32.totalorder %s425, %s426
      %p438 = scmp.eq.s32.totalorder %s35, 1
      %p439 = por %p437, %p438
      %p441 = scmp.ne.s32.totalorder %s426, %s440
      %p442 = scmp.eq.s32.totalorder %s35, 0
      %p443 = por %p441, %p442
      %s444 = ssub.s32 %s37, %s44
      %s445 = ssub.s32 %s36, %s48
      %s446 = sor.u32 %s444, %s445
      %p447 = scmp.eq.s32.totalorder %s446, 0
      %s449 = sadd.s32 %s448, 1
      %s450 = scalar_select %p447, %s448, %s449
      %p453 = pneg %p447
      %p454 = scmp.eq.s32.totalorder %s29, 1
      %p455 = por %p453, %p454
      %p456 = scmp.ne.s32.totalorder %s448, %s451
      %p457 = scmp.eq.s32.totalorder %s29, 0
      %p458 = por %p456, %p457
      %p459 = scmp.ne.s32.totalorder %s448, %s451
      %p460 = scmp.eq.s32.totalorder %s34, 1
      %p461 = por %p459, %p460
      %p462 = scmp.ne.s32.totalorder %s451, %s452
      %p463 = scmp.eq.s32.totalorder %s34, 0
      %p464 = por %p462, %p463
      %p465 = scmp.ne.s32.totalorder %s451, %s452
      %p466 = scmp.eq.s32.totalorder %s35, 1
      %p467 = por %p465, %p466
      %p469 = scmp.ne.s32.totalorder %s452, %s468
      %p470 = scmp.eq.s32.totalorder %s35, 0
      %p471 = por %p469, %p470
      %p472 = scmp.le.s32.totalorder 1, %s29
      %p473 = scmp.lt.s32.totalorder %s29, 3
      %p474 = pnand %p472, %p473
      %p475 = pneg %p474
      // Predicated region
      $region9: #{tpu_custom_call.1} parent=5 // pred_check
        _
      $region10: #{tpu_custom_call.1} parent=5 // pred_check_branch
        %477 = sbr.rel (%p474) target = $region12
      $region11: #{tpu_custom_call.1} parent=5 // pred_region
        %s478 = ssub.s32 %s29, 1
        // Predicated region
        $region13: #{tpu_custom_call.1} parent=11 // pred_check
          %p479 = pneg %p67
        $region14: #{tpu_custom_call.1} parent=11 // pred_check_branch
          %481 = sbr.rel (%p479) target = $region16
        $region15: #{tpu_custom_call.1} parent=11 // pred_region
          %s483 = ssub.s32 32, 32
          %484 = vsyncadd [#allocation5], %s483
          %s485 = smul.addr %s38, 32
          %s486 = scalar_lea.hbm %s0, %s485
          %s488 = sshll.u32 [#allocation4], 4
          %s489 = int_to_ptr.vmem [resolvable:$true] %s488
          %491 = dma.hbm_to_vmem [thread:$0]  %s486, 32, %s489, [#allocation5]
        $region16: #{tpu_custom_call.1} parent=11 // pred_fallthru
          _
        // Predicated region
        $region17: #{tpu_custom_call.1} parent=11 // pred_check
          %p492 = pneg %p93
        $region18: #{tpu_custom_call.1} parent=11 // pred_check_branch
          %494 = sbr.rel (%p492) target = $region20
        $region19: #{tpu_custom_call.1} parent=11 // pred_region
          %s496 = ssub.s32 32, 32
          %497 = vsyncadd [#allocation8], %s496
          %s498 = smul.addr %s38, 32
          %s499 = scalar_lea.hbm %s1, %s498
          %s501 = sshll.u32 [#allocation7], 4
          %s502 = int_to_ptr.vmem [resolvable:$true] %s501
          %504 = dma.hbm_to_vmem [thread:$0]  %s499, 32, %s502, [#allocation8]
        $region20: #{tpu_custom_call.1} parent=11 // pred_fallthru
          _
        // Predicated region
        $region21: #{tpu_custom_call.1} parent=11 // pred_check
          %p505 = pneg %p226
        $region22: #{tpu_custom_call.1} parent=11 // pred_check_branch
          %507 = sbr.rel (%p505) target = $region24
        $region23: #{tpu_custom_call.1} parent=11 // pred_region
          %s509 = ssub.s32 128, 128
          %510 = vsyncadd [#allocation8], %s509
          %s511 = sshll.u32 [#allocation12], 4
          %s512 = int_to_ptr.vmem [resolvable:$true] %s511
          %517 = dma.hbm_to_vmem [thread:$0]  %s6, 128, %s512, [#allocation8], 64, 64, 4
        $region24: #{tpu_custom_call.1} parent=11 // pred_fallthru
          _
        // Predicated region
        $region25: #{tpu_custom_call.1} parent=11 // pred_check
          %p518 = pneg %p247
        $region26: #{tpu_custom_call.1} parent=11 // pred_check_branch
          %520 = sbr.rel (%p518) target = $region28
        $region27: #{tpu_custom_call.1} parent=11 // pred_region
          _
        $region28: #{tpu_custom_call.1} parent=11 // pred_fallthru
          _
        // Predicated region
        $region29: #{tpu_custom_call.1} parent=11 // pred_check
          %p521 = pneg %p268
        $region30: #{tpu_custom_call.1} parent=11 // pred_check_branch
          %523 = sbr.rel (%p521) target = $region32
        $region31: #{tpu_custom_call.1} parent=11 // pred_region
          _
        $region32: #{tpu_custom_call.1} parent=11 // pred_fallthru
          _
        // Predicated region
        $region33: #{tpu_custom_call.1} parent=11 // pred_check
          %p524 = pneg %p289
        $region34: #{tpu_custom_call.1} parent=11 // pred_check_branch
          %526 = sbr.rel (%p524) target = $region36
        $region35: #{tpu_custom_call.1} parent=11 // pred_region
          _
        $region36: #{tpu_custom_call.1} parent=11 // pred_fallthru
          _
        // Predicated region
        $region37: #{tpu_custom_call.1} parent=11 // pred_check
          %p527 = pneg %p310
        $region38: #{tpu_custom_call.1} parent=11 // pred_check_branch
          %529 = sbr.rel (%p527) target = $region40
        $region39: #{tpu_custom_call.1} parent=11 // pred_region
          _
        $region40: #{tpu_custom_call.1} parent=11 // pred_fallthru
          _
        // Predicated region
        $region41: #{tpu_custom_call.1} parent=11 // pred_check
          %p530 = pneg %p331
        $region42: #{tpu_custom_call.1} parent=11 // pred_check_branch
          %532 = sbr.rel (%p530) target = $region44
        $region43: #{tpu_custom_call.1} parent=11 // pred_region
          _
        $region44: #{tpu_custom_call.1} parent=11 // pred_fallthru
          _
        // Predicated region
        $region45: #{tpu_custom_call.1} parent=11 // pred_check
          %p533 = pneg %p352
        $region46: #{tpu_custom_call.1} parent=11 // pred_check_branch
          %535 = sbr.rel (%p533) target = $region48
        $region47: #{tpu_custom_call.1} parent=11 // pred_region
          _
        $region48: #{tpu_custom_call.1} parent=11 // pred_fallthru
          _
        // Predicated region
        $region49: #{tpu_custom_call.1} parent=11 // pred_check
          %p536 = pneg %p373
        $region50: #{tpu_custom_call.1} parent=11 // pred_check_branch
          %538 = sbr.rel (%p536) target = $region52
        $region51: #{tpu_custom_call.1} parent=11 // pred_region
          _
        $region52: #{tpu_custom_call.1} parent=11 // pred_fallthru
          _
        // Predicated region
        $region53: #{tpu_custom_call.1} parent=11 // pred_check
          %p539 = pneg %p394
        $region54: #{tpu_custom_call.1} parent=11 // pred_check_branch
          %541 = sbr.rel (%p539) target = $region56
        $region55: #{tpu_custom_call.1} parent=11 // pred_region
          _
        $region56: #{tpu_custom_call.1} parent=11 // pred_fallthru
          _
        // Predicated region
        $region57: #{tpu_custom_call.1} parent=11 // pred_check
          %p542 = pneg %p415
        $region58: #{tpu_custom_call.1} parent=11 // pred_check_branch
          %544 = sbr.rel (%p542) target = $region60
        $region59: #{tpu_custom_call.1} parent=11 // pred_region
          %s546 = ssub.s32 256, 256
          %547 = vsyncadd [#allocation14], %s546
          %s548 = sshll.u32 [#allocation13], 4
          %s549 = int_to_ptr.vmem [resolvable:$true] %s548
          %554 = dma.hbm_to_vmem [thread:$0]  %s15, 256, %s549, [#allocation14], 64, 64, 4
        $region60: #{tpu_custom_call.1} parent=11 // pred_fallthru
          _
        // Predicated region
        $region61: #{tpu_custom_call.1} parent=11 // pred_check
          %p555 = pneg %p436
        $region62: #{tpu_custom_call.1} parent=11 // pred_check_branch
          %557 = sbr.rel (%p555) target = $region64
        $region63: #{tpu_custom_call.1} parent=11 // pred_region
          _
        $region64: #{tpu_custom_call.1} parent=11 // pred_fallthru
          _
      $region12: #{tpu_custom_call.1} parent=5 // pred_fallthru
        _
      %p558 = scmp.lt.s32.totalorder %s29, 2
      // Predicated region
      $region65: #{tpu_custom_call.1} parent=5 // pred_check
        %p559 = pneg %p558
      $region66: #{tpu_custom_call.1} parent=5 // pred_check_branch
        %561 = sbr.rel (%p559) target = $region68
      $region67: #{tpu_custom_call.1} parent=5 // pred_region
        // Predicated region
        $region69: #{tpu_custom_call.1} parent=67 // pred_check
          %p562 = pneg %p115
        $region70: #{tpu_custom_call.1} parent=67 // pred_check_branch
          %564 = sbr.rel (%p562) target = $region72
        $region71: #{tpu_custom_call.1} parent=67 // pred_region
          %s565 = sand.u32 %s29, 1
          %s566 = scalar_lea.sflag [#allocation5], %s565
          %s567 = sand.u32 %s105, 1
          %s568 = smul.addr %s567, 4
          %s569 = scalar_lea.vmem [#allocation9], %s568
          %s570 = smul.u32 4, %s37
          %s572 = ssub.s32 64, 64
          %573 = vsyncadd %s566, %s572
          %s574 = sadd.s32 %s36, %s570
          %s575 = smul.addr %s574, 16
          %s576 = scalar_lea.hbm %s2, %s575
          %s577 = sshll.u32 %s569, 4
          %s578 = int_to_ptr.vmem [resolvable:$true] %s577
          %583 = dma.hbm_to_vmem [thread:$0]  %s576, 64, %s578, %s566, 16, 16, 1
        $region72: #{tpu_custom_call.1} parent=67 // pred_fallthru
          _
        // Predicated region
        $region73: #{tpu_custom_call.1} parent=67 // pred_check
          %p584 = pneg %p143
        $region74: #{tpu_custom_call.1} parent=67 // pred_check_branch
          %586 = sbr.rel (%p584) target = $region76
        $region75: #{tpu_custom_call.1} parent=67 // pred_region
          %s587 = sand.u32 %s29, 1
          %s588 = scalar_lea.sflag [#allocation5], %s587
          %s589 = sand.u32 %s133, 1
          %s590 = smul.addr %s589, 4
          %s591 = scalar_lea.vmem [#allocation10], %s590
          %s592 = smul.u32 4, %s37
          %s594 = ssub.s32 64, 64
          %595 = vsyncadd %s588, %s594
          %s596 = sadd.s32 %s36, %s592
          %s597 = smul.addr %s596, 16
          %s598 = scalar_lea.hbm %s3, %s597
          %s599 = sshll.u32 %s591, 4
          %s600 = int_to_ptr.vmem [resolvable:$true] %s599
          %605 = dma.hbm_to_vmem [thread:$0]  %s598, 64, %s600, %s588, 16, 16, 1
        $region76: #{tpu_custom_call.1} parent=67 // pred_fallthru
          _
        // Predicated region
        $region77: #{tpu_custom_call.1} parent=67 // pred_check
          %p606 = pneg %p171
        $region78: #{tpu_custom_call.1} parent=67 // pred_check_branch
          %608 = sbr.rel (%p606) target = $region80
        $region79: #{tpu_custom_call.1} parent=67 // pred_region
          %s609 = smul.u32 4, %s37
          %p610 = scmp.lt.s32.totalorder %s609, 7
          %s611 = scalar_select %p610, %s609, 7
          %p612 = scmp.lt.s32.totalorder %s36, 0
          %s613 = scalar_select %p612, %s36, 0
          %s614 = sadd.s32 %s613, %s611
          %s615 = smul.addr %s614, 2
          %s616 = scalar_lea.vmem %s4, %s615
          %s617 = smul.u32 4, %s37
        $region80: #{tpu_custom_call.1} parent=67 // pred_fallthru
          _
        // Predicated region
        $region81: #{tpu_custom_call.1} parent=67 // pred_check
          %p618 = pneg %p199
        $region82: #{tpu_custom_call.1} parent=67 // pred_check_branch
          %620 = sbr.rel (%p618) target = $region84
        $region83: #{tpu_custom_call.1} parent=67 // pred_region
          %s621 = sand.u32 %s29, 1
          %s622 = scalar_lea.sflag [#allocation5], %s621
          %s623 = sand.u32 %s189, 1
          %s624 = smul.addr %s623, 4
          %s625 = scalar_lea.vmem [#allocation11], %s624
          %s626 = smul.u32 4, %s37
          %s628 = ssub.s32 64, 64
          %629 = vsyncadd %s622, %s628
          %s630 = sadd.s32 %s36, %s626
          %s631 = smul.addr %s630, 16
          %s632 = scalar_lea.hbm %s5, %s631
          %s633 = sshll.u32 %s625, 4
          %s634 = int_to_ptr.vmem [resolvable:$true] %s633
          %639 = dma.hbm_to_vmem [thread:$0]  %s632, 64, %s634, %s622, 16, 16, 1
        $region84: #{tpu_custom_call.1} parent=67 // pred_fallthru
          _
      $region68: #{tpu_custom_call.1} parent=5 // pred_fallthru
        _
      %p640 = scmp.le.s32.totalorder 1, %s29
      %p641 = scmp.lt.s32.totalorder %s29, 3
      %p642 = pnand %p640, %p641
      %p643 = pneg %p642
      // Predicated region
      $region85: #{tpu_custom_call.1} parent=5 // pred_check
        _
      $region86: #{tpu_custom_call.1} parent=5 // pred_check_branch
        %645 = sbr.rel (%p642) target = $region88
      $region87: #{tpu_custom_call.1} parent=5 // pred_region
        %s646 = ssub.s32 %s29, 1
        // Predicated region
        $region89: #{tpu_custom_call.1} parent=87 // pred_check
          %p647 = pneg %p67
        $region90: #{tpu_custom_call.1} parent=87 // pred_check_branch
          %649 = sbr.rel (%p647) target = $region92
        $region91: #{tpu_custom_call.1} parent=87 // pred_region
          %650 = dma.done [#allocation5], 32
        $region92: #{tpu_custom_call.1} parent=87 // pred_fallthru
          _
        // Predicated region
        $region93: #{tpu_custom_call.1} parent=87 // pred_check
          %p651 = pneg %p93
        $region94: #{tpu_custom_call.1} parent=87 // pred_check_branch
          %653 = sbr.rel (%p651) target = $region96
        $region95: #{tpu_custom_call.1} parent=87 // pred_region
          %654 = dma.done [#allocation8], 32
        $region96: #{tpu_custom_call.1} parent=87 // pred_fallthru
          _
        %s655 = sand.u32 %s34, 1
        %s656 = scalar_lea.sflag [#allocation5], %s655
        %s657 = sand.u32 %s108, 1
        %s658 = smul.addr %s657, 4
        %s659 = scalar_lea.vmem [#allocation9], %s658
        // Predicated region
        $region97: #{tpu_custom_call.1} parent=87 // pred_check
          %p660 = pneg %p121
        $region98: #{tpu_custom_call.1} parent=87 // pred_check_branch
          %662 = sbr.rel (%p660) target = $region100
        $region99: #{tpu_custom_call.1} parent=87 // pred_region
          %663 = dma.done %s656, 64
        $region100: #{tpu_custom_call.1} parent=87 // pred_fallthru
          _
        %s664 = sand.u32 %s34, 1
        %s665 = scalar_lea.sflag [#allocation5], %s664
        %s666 = sand.u32 %s136, 1
        %s667 = smul.addr %s666, 4
        %s668 = scalar_lea.vmem [#allocation10], %s667
        // Predicated region
        $region101: #{tpu_custom_call.1} parent=87 // pred_check
          %p669 = pneg %p149
        $region102: #{tpu_custom_call.1} parent=87 // pred_check_branch
          %671 = sbr.rel (%p669) target = $region104
        $region103: #{tpu_custom_call.1} parent=87 // pred_region
          %672 = dma.done %s665, 64
        $region104: #{tpu_custom_call.1} parent=87 // pred_fallthru
          _
        %s673 = sand.u32 %s34, 1
        %s674 = scalar_lea.sflag [#allocation5], %s673
        %s675 = sand.u32 %s192, 1
        %s676 = smul.addr %s675, 4
        %s677 = scalar_lea.vmem [#allocation11], %s676
        // Predicated region
        $region105: #{tpu_custom_call.1} parent=87 // pred_check
          %p678 = pneg %p205
        $region106: #{tpu_custom_call.1} parent=87 // pred_check_branch
          %680 = sbr.rel (%p678) target = $region108
        $region107: #{tpu_custom_call.1} parent=87 // pred_region
          %681 = dma.done %s674, 64
        $region108: #{tpu_custom_call.1} parent=87 // pred_fallthru
          _
        // Predicated region
        $region109: #{tpu_custom_call.1} parent=87 // pred_check
          %p682 = pneg %p226
        $region110: #{tpu_custom_call.1} parent=87 // pred_check_branch
          %684 = sbr.rel (%p682) target = $region112
        $region111: #{tpu_custom_call.1} parent=87 // pred_region
          %685 = dma.done [#allocation8], 128
        $region112: #{tpu_custom_call.1} parent=87 // pred_fallthru
          _
        // Predicated region
        $region113: #{tpu_custom_call.1} parent=87 // pred_check
          %p686 = pneg %p415
        $region114: #{tpu_custom_call.1} parent=87 // pred_check_branch
          %688 = sbr.rel (%p686) target = $region116
        $region115: #{tpu_custom_call.1} parent=87 // pred_region
          %689 = dma.done [#allocation14], 256
        $region116: #{tpu_custom_call.1} parent=87 // pred_fallthru
          _
        %p690 = pneg %p67
        %p691 = pneg %p64
        %p692 = pneg %p93
        %p693 = pneg %p90
        %s694 = sand.u32 %s34, 1
        %s695 = scalar_lea.sflag [#allocation5], %s694
        %s696 = sand.u32 %s108, 1
        %s697 = smul.addr %s696, 4
        %s698 = scalar_lea.vmem [#allocation9], %s697
        %p699 = pneg %p121
        %p700 = pneg %p118
        %s701 = sand.u32 %s34, 1
        %s702 = scalar_lea.sflag [#allocation5], %s701
        %s703 = sand.u32 %s136, 1
        %s704 = smul.addr %s703, 4
        %s705 = scalar_lea.vmem [#allocation10], %s704
        %p706 = pneg %p149
        %p707 = pneg %p146
        %s708 = smul.u32 4, %s39
        %p709 = scmp.lt.s32.totalorder %s708, 7
        %s710 = scalar_select %p709, %s708, 7
        %p711 = scmp.lt.s32.totalorder %s38, 0
        %s712 = scalar_select %p711, %s38, 0
        %s713 = sadd.s32 %s712, %s710
        %s714 = smul.addr %s713, 2
        %s715 = scalar_lea.vmem %s4, %s714
        %p716 = pneg %p177
        %p717 = pneg %p174
        %s718 = sand.u32 %s34, 1
        %s719 = scalar_lea.sflag [#allocation5], %s718
        %s720 = sand.u32 %s192, 1
        %s721 = smul.addr %s720, 4
        %s722 = scalar_lea.vmem [#allocation11], %s721
        %p723 = pneg %p205
        %p724 = pneg %p202
        %p725 = pneg %p226
        %p726 = pneg %p223
        %p727 = pneg %p247
        %p728 = pneg %p244
        %p729 = pneg %p268
        %p730 = pneg %p265
        %p731 = pneg %p289
        %p732 = pneg %p286
        %p733 = pneg %p310
        %p734 = pneg %p307
        %p735 = pneg %p331
        %p736 = pneg %p328
        %p737 = pneg %p352
        %p738 = pneg %p349
        %p739 = pneg %p373
        %p740 = pneg %p370
        %p741 = pneg %p394
        %p742 = pneg %p391
        %p743 = pneg %p415
        %p744 = pneg %p412
        %p745 = pneg %p436
        %p746 = pneg %p433
        %p747 = pneg %p464
        %p748 = pneg %p461
        %s749 = sand.u32 %s451, 1
        %s750 = scalar_lea.sflag [#allocation6], %s749
        %s751 = sand.u32 %s451, 1
        %s752 = smul.addr %s751, 8
        %s753 = scalar_lea.vmem [#allocation15], %s752
        %s754 = smul.u32 4, %s39
        %s755 = smul.u32 4, %s39
        %s756 = smul.u32 4, %s39
        %p757 = scmp.lt.s32.totalorder %s756, 7
        %s758 = scalar_select %p757, %s756, 7
        %p759 = scmp.lt.s32.totalorder %s38, 0
        %s760 = scalar_select %p759, %s38, 0
        %s761 = sadd.s32 %s760, %s758
        %s762 = smul.addr %s761, 2
        %s763 = scalar_lea.vmem %s4, %s762
        %s764 = smul.u32 4, %s39
        %s765 = smul.u32 4, %s39
        %s766 = smul.u32 4, %s39
        %p768 = scmp.eq.s32.totalorder %s39, 0
        // Predicated region
        $region117: #{tpu_custom_call.1} parent=87 // pred_check
          %p769 = pneg %p768
        $region118: #{tpu_custom_call.1} parent=87 // pred_check_branch
          %771 = sbr.rel (%p769) target = $region120
        $region119: #{tpu_custom_call.1} parent=87 // pred_region
          %v772 = vld [vmem:[#allocation4] sm:$0x3]
          %vm773 = vcmask 254976
          %774 = vst.msk [vmem:[#allocation2] sm:$0x3] %vm773, %v772
          %v775 = vld [vmem:[#allocation7] sm:$0x3]
          %vm776 = vcmask 123904
          %777 = vst.msk [vmem:[#allocation3] sm:$0x3] %vm776, %v775
        $region120: #{tpu_custom_call.1} parent=87 // pred_fallthru
          _
        %v778 = vld [vmem:[#allocation12] sm:$0xf]
        %v779 = vld [vmem:[#allocation12 + $0x4] sm:$0xf]
        %v780 = vld [vmem:[%s7] sm:$0xf]
        %v781 = vld [vmem:[%s7 + $0x4] sm:$0xf]
        %v782 = vld [vmem:[%s7 + $0x8] sm:$0xf]
        %v783 = vld [vmem:[%s7 + $0xc] sm:$0xf]
        %v784 = vld [vmem:[%s12] sm:$0xf]
        %v785 = vld [vmem:[%s12 + $0x4] sm:$0xf]
        %v786 = vld [vmem:[%s12 + $0x8] sm:$0xf]
        %v787 = vld [vmem:[%s12 + $0xc] sm:$0xf]
        %v788 = vld [vmem:[%s13] sm:$0xf]
        %v789 = vld [vmem:[%s13 + $0x4] sm:$0xf]
        %v790 = vld [vmem:[%s13 + $0x8] sm:$0xf]
        %v791 = vld [vmem:[%s13 + $0xc] sm:$0xf]
        %v792 = vld [vmem:[#allocation13] sm:$0xf]
        %v793 = vld [vmem:[#allocation13 + $0x4] sm:$0xf]
        %v794 = vld [vmem:[#allocation13 + $0x8] sm:$0xf]
        %v795 = vld [vmem:[#allocation13 + $0xc] sm:$0xf]
        %v796 = vld [vmem:[%s14] sm:$0x1]
        %v798 = vlaneseq
        %v799 = vshrl.u32 %v798, 7
        %v800 = vsub.s32 0, %v799
        %v801 = vrot.slane %v796, %v800
        %v803 = vld [vmem:[%s16] sm:$0x1]
        %v805 = vlaneseq
        %v806 = vshrl.u32 %v805, 7
        %v807 = vsub.s32 0, %v806
        %v808 = vrot.slane %v803, %v807
        %v810 = vld [vmem:[%s8] sm:$0xf]
        %v811 = vld [vmem:[%s8 + $0x4] sm:$0xf]
        %v812 = vld [vmem:[%s8 + $0x8] sm:$0xf]
        %v813 = vld [vmem:[%s8 + $0xc] sm:$0xf]
        %v814 = vld [vmem:[%s9] sm:$0x1]
        %v816 = vlaneseq
        %v817 = vshrl.u32 %v816, 7
        %v818 = vsub.s32 0, %v817
        %v819 = vrot.slane %v814, %v818
        %v821 = vld [vmem:[%s10] sm:$0x1]
        %v823 = vlaneseq
        %v824 = vshrl.u32 %v823, 7
        %v825 = vsub.s32 0, %v824
        %v826 = vrot.slane %v821, %v825
        %v827 = vld [vmem:[%s11] sm:$0x1]
        %v829 = vlaneseq
        %v830 = vshrl.u32 %v829, 7
        %v831 = vsub.s32 0, %v830
        %v832 = vrot.slane %v827, %v831
        %v833 = vld [vmem:[#allocation2] sm:$0x3]
        %v834 = vld [vmem:[#allocation3] sm:$0x3]
        %v835 = vld [vmem:[%s763] sm:$0x3]
        %837 = vset.pattern.permute.xlu0 0
        %838 = vperm.xlu0 %837, %v835
        %v839 = vpop.permute.xlu0 %838
        %v841 = vmul.f32 %v834, %v839
        %v842 = vpack.c.bf16 %v841, %v841
        %v843 = vld [vmem:[%s659] sm:$0x1]
        %v844 = vunpack.c.l.bf16 %v843
        %v847 = vunpack.c.l.b16 %v778
        %v848 = vunpack.c.l.b16 %v779
        %v849 = vpack.c.b16 %v848, %v847
        %vm851 = vcmask 130048
        %v853 = vsel %vm851, %v842, 0
        %855 = vmatprep.subr.bf16.mxu0 0
        %856 = vmatpush1.bf16.msra.mxu0 %v849
        %857 = vmatprep.subr.bf16.mxu0 0
        %858 = vmatpush1.bf16.msra.mxu0 0
        %859 = vmatprep.subr.bf16.mxu0 0
        %860 = vmatpush1.bf16.msra.mxu0 0
        %861 = vmatprep.subr.bf16.mxu0 0
        %862 = vmatpush1.bf16.msra.mxu0 0
        %863 = vmatprep.subr.bf16.mxu0 0
        %864 = vmatpush1.bf16.msra.mxu0 0
        %865 = vmatprep.subr.bf16.mxu0 0
        %866 = vmatpush1.bf16.msra.mxu0 0
        %867 = vmatprep.subr.bf16.mxu0 0
        %868 = vmatpush1.bf16.msra.mxu0 0
        %869 = vmatprep.subr.bf16.mxu0 0
        %870 = vmatpush1.bf16.msra.mxu0 0
        %871 = vmatprep.subr.bf16.mxu0 0
        %872 = vmatpush1.bf16.msra.mxu0 0
        %873 = vmatprep.subr.bf16.mxu0 0
        %874 = vmatpush1.bf16.msra.mxu0 0
        %875 = vmatprep.subr.bf16.mxu0 0
        %876 = vmatpush1.bf16.msra.mxu0 0
        %877 = vmatprep.subr.bf16.mxu0 0
        %878 = vmatpush1.bf16.msra.mxu0 0
        %879 = vmatprep.subr.bf16.mxu0 0
        %880 = vmatpush1.bf16.msra.mxu0 0
        %881 = vmatprep.subr.bf16.mxu0 0
        %882 = vmatpush1.bf16.msra.mxu0 0
        %883 = vmatprep.subr.bf16.mxu0 0
        %884 = vmatpush1.bf16.msra.mxu0 0
        %885 = vmatprep.subr.bf16.mxu0 0
        %886 = vmatpush1.bf16.msra.mxu0 0
        %887 = vmatprep.mubr.bf16.mxu0 0
        %888 = vmatmul.mubr.bf16.gmra.mrb[0].mxu0 %v853
        %v889 = vpop.f32.mrb[0].mxu0
        %v890 = vadd.f32 %v844, %v889
        %v891 = vpop.f32.mrb[0].mxu0
        %v892 = vpop.f32.mrb[0].mxu0
        %v893 = vpop.f32.mrb[0].mxu0
        %894 = vdwg.mxu0
        %v895 = vxor.u32 %v890, 2147483648
        %v896 = vmul.f32 %v895, 1.442695
        %v897 = vpow.pop %v896
        %v898 = vadd.f32 %v897, 1.0
        %v899 = vrcp.pop %v898
        %v900 = vmul.f32 1.0, %v899
        %v901 = vmul.f32 %v890, %v900
        %v902 = vpack.c.bf16 %v901, %v901
        %v907 = vunpack.c.l.b16 %v780
        %v908 = vunpack.c.l.b16 %v781
        %v909 = vunpack.c.l.b16 %v782
        %v910 = vunpack.c.l.b16 %v783
        %v911 = vpack.c.b16 %v908, %v907
        %v912 = vpack.c.b16 %v910, %v909
        %vm915 = vcmask 261120
        %v917 = vsel %vm915, %v902, 0
        %919 = vmatprep.subr.bf16.mxu0 0
        %920 = vmatpush1.bf16.msra.mxu0 %v911
        %921 = vmatprep.subr.bf16.mxu0 0
        %922 = vmatpush1.bf16.msra.mxu0 %v912
        %923 = vmatprep.subr.bf16.mxu0 0
        %924 = vmatpush1.bf16.msra.mxu0 0
        %925 = vmatprep.subr.bf16.mxu0 0
        %926 = vmatpush1.bf16.msra.mxu0 0
        %927 = vmatprep.subr.bf16.mxu0 0
        %928 = vmatpush1.bf16.msra.mxu0 0
        %929 = vmatprep.subr.bf16.mxu0 0
        %930 = vmatpush1.bf16.msra.mxu0 0
        %931 = vmatprep.subr.bf16.mxu0 0
        %932 = vmatpush1.bf16.msra.mxu0 0
        %933 = vmatprep.subr.bf16.mxu0 0
        %934 = vmatpush1.bf16.msra.mxu0 0
        %935 = vmatprep.subr.bf16.mxu0 0
        %936 = vmatpush1.bf16.msra.mxu0 0
        %937 = vmatprep.subr.bf16.mxu0 0
        %938 = vmatpush1.bf16.msra.mxu0 0
        %939 = vmatprep.subr.bf16.mxu0 0
        %940 = vmatpush1.bf16.msra.mxu0 0
        %941 = vmatprep.subr.bf16.mxu0 0
        %942 = vmatpush1.bf16.msra.mxu0 0
        %943 = vmatprep.subr.bf16.mxu0 0
        %944 = vmatpush1.bf16.msra.mxu0 0
        %945 = vmatprep.subr.bf16.mxu0 0
        %946 = vmatpush1.bf16.msra.mxu0 0
        %947 = vmatprep.subr.bf16.mxu0 0
        %948 = vmatpush1.bf16.msra.mxu0 0
        %949 = vmatprep.subr.bf16.mxu0 0
        %950 = vmatpush1.bf16.msra.mxu0 0
        %951 = vmatprep.mubr.bf16.mxu0 0
        %952 = vmatmul.mubr.bf16.gmra.mrb[0].mxu0 %v917
        %v953 = vpop.f32.mrb[0].mxu0
        %v954 = vadd.f32 0.0, %v953
        %v955 = vpop.f32.mrb[0].mxu0
        %v956 = vpop.f32.mrb[0].mxu0
        %v957 = vpop.f32.mrb[0].mxu0
        %958 = vdwg.mxu0
        %v959 = vpack.c.bf16 %v833, %v833
        %v964 = vunpack.c.l.b16 %v810
        %v965 = vunpack.c.l.b16 %v811
        %v966 = vunpack.c.l.b16 %v812
        %v967 = vunpack.c.l.b16 %v813
        %v968 = vpack.c.b16 %v965, %v964
        %v969 = vpack.c.b16 %v967, %v966
        %v973 = vsel %vm915, %v959, 0
        %975 = vmatprep.subr.bf16.mxu0 0
        %976 = vmatpush1.bf16.msra.mxu0 %v968
        %977 = vmatprep.subr.bf16.mxu0 0
        %978 = vmatpush1.bf16.msra.mxu0 %v969
        %979 = vmatprep.subr.bf16.mxu0 0
        %980 = vmatpush1.bf16.msra.mxu0 0
        %981 = vmatprep.subr.bf16.mxu0 0
        %982 = vmatpush1.bf16.msra.mxu0 0
        %983 = vmatprep.subr.bf16.mxu0 0
        %984 = vmatpush1.bf16.msra.mxu0 0
        %985 = vmatprep.subr.bf16.mxu0 0
        %986 = vmatpush1.bf16.msra.mxu0 0
        %987 = vmatprep.subr.bf16.mxu0 0
        %988 = vmatpush1.bf16.msra.mxu0 0
        %989 = vmatprep.subr.bf16.mxu0 0
        %990 = vmatpush1.bf16.msra.mxu0 0
        %991 = vmatprep.subr.bf16.mxu0 0
        %992 = vmatpush1.bf16.msra.mxu0 0
        %993 = vmatprep.subr.bf16.mxu0 0
        %994 = vmatpush1.bf16.msra.mxu0 0
        %995 = vmatprep.subr.bf16.mxu0 0
        %996 = vmatpush1.bf16.msra.mxu0 0
        %997 = vmatprep.subr.bf16.mxu0 0
        %998 = vmatpush1.bf16.msra.mxu0 0
        %999 = vmatprep.subr.bf16.mxu0 0
        %1000 = vmatpush1.bf16.msra.mxu0 0
        %1001 = vmatprep.subr.bf16.mxu0 0
        %1002 = vmatpush1.bf16.msra.mxu0 0
        %1003 = vmatprep.subr.bf16.mxu0 0
        %1004 = vmatpush1.bf16.msra.mxu0 0
        %1005 = vmatprep.subr.bf16.mxu0 0
        %1006 = vmatpush1.bf16.msra.mxu0 0
        %1007 = vmatprep.mubr.bf16.mxu0 0
        %1008 = vmatmul.mubr.bf16.gmra.mrb[0].mxu0 %v973
        %v1009 = vpop.f32.mrb[0].mxu0
        %v1010 = vadd.f32 0.0, %v1009
        %v1011 = vpop.f32.mrb[0].mxu0
        %v1012 = vpop.f32.mrb[0].mxu0
        %v1013 = vpop.f32.mrb[0].mxu0
        %1014 = vdwg.mxu0
        %v1015 = vadd.f32 %v954, %v1010
        %v1016 = vadd.f32 %v1015, %v819
        %v1017 = vxor.u32 %v1016, 2147483648
        %v1018 = vmul.f32 %v1017, 1.442695
        %v1019 = vpow.pop %v1018
        %v1020 = vadd.f32 %v1019, 1.0
        %v1021 = vrcp.pop %v1020
        %v1022 = vmul.f32 1.0, %v1021
        %1023 = vrot.lane.b32.xlu0 %v826, 64
        %v1024 = vpop.permute.xlu0 %1023
        %v1026 = vadd.f32 %v954, %v1024
        %1027 = vrot.lane.b32.xlu0 %v832, 64
        %v1028 = vpop.permute.xlu0 %1027
        %v1030 = vadd.f32 %v1010, %v1028
        %1032 = vrot.lane.b32.xlu0 %v1030, 64
        %v1033 = vpop.permute.xlu0 %1032
        %v1035 = vmul.f32 %v1022, %v1033
        %1037 = vrot.lane.b32.xlu0 %v1035, 64
        %v1038 = vpop.permute.xlu0 %1037
        %v1040 = vadd.f32 %v1026, %v1038
        %v1041 = vtanh.pop %v1040
        %v1042 = vsub.f32 1.0, %v1022
        %1044 = vrot.lane.b32.xlu0 %v1041, 96
        %v1045 = vpop.permute.xlu0 %1044
        %v1047 = vmul.f32 %v1042, %v1045
        %1049 = vrot.lane.b32.xlu0 %v833, 32
        %v1050 = vpop.permute.xlu0 %1049
        %v1052 = vmul.f32 %v1022, %v1050
        %v1053 = vadd.f32 %v1047, %v1052
        %v1054 = vpack.c.bf16 %v1053, %v1053
        %v1055 = vld [vmem:[%s668] sm:$0x1]
        %v1056 = vunpack.c.l.bf16 %v1055
        %1058 = vrot.lane.b32.xlu0 %v1054, 96
        %v1059 = vpop.permute.xlu0 %1058
        %v1064 = vunpack.c.l.b16 %v784
        %v1065 = vunpack.c.l.b16 %v785
        %v1066 = vunpack.c.l.b16 %v786
        %v1067 = vunpack.c.l.b16 %v787
        %v1068 = vpack.c.b16 %v1065, %v1064
        %v1069 = vpack.c.b16 %v1067, %v1066
        %v1073 = vsel %vm915, %v1059, 0
        %1075 = vmatprep.subr.bf16.mxu0 0
        %1076 = vmatpush1.bf16.msra.mxu0 %v1068
        %1077 = vmatprep.subr.bf16.mxu0 0
        %1078 = vmatpush1.bf16.msra.mxu0 %v1069
        %1079 = vmatprep.subr.bf16.mxu0 0
        %1080 = vmatpush1.bf16.msra.mxu0 0
        %1081 = vmatprep.subr.bf16.mxu0 0
        %1082 = vmatpush1.bf16.msra.mxu0 0
        %1083 = vmatprep.subr.bf16.mxu0 0
        %1084 = vmatpush1.bf16.msra.mxu0 0
        %1085 = vmatprep.subr.bf16.mxu0 0
        %1086 = vmatpush1.bf16.msra.mxu0 0
        %1087 = vmatprep.subr.bf16.mxu0 0
        %1088 = vmatpush1.bf16.msra.mxu0 0
        %1089 = vmatprep.subr.bf16.mxu0 0
        %1090 = vmatpush1.bf16.msra.mxu0 0
        %1091 = vmatprep.subr.bf16.mxu0 0
        %1092 = vmatpush1.bf16.msra.mxu0 0
        %1093 = vmatprep.subr.bf16.mxu0 0
        %1094 = vmatpush1.bf16.msra.mxu0 0
        %1095 = vmatprep.subr.bf16.mxu0 0
        %1096 = vmatpush1.bf16.msra.mxu0 0
        %1097 = vmatprep.subr.bf16.mxu0 0
        %1098 = vmatpush1.bf16.msra.mxu0 0
        %1099 = vmatprep.subr.bf16.mxu0 0
        %1100 = vmatpush1.bf16.msra.mxu0 0
        %1101 = vmatprep.subr.bf16.mxu0 0
        %1102 = vmatpush1.bf16.msra.mxu0 0
        %1103 = vmatprep.subr.bf16.mxu0 0
        %1104 = vmatpush1.bf16.msra.mxu0 0
        %1105 = vmatprep.subr.bf16.mxu0 0
        %1106 = vmatpush1.bf16.msra.mxu0 0
        %1107 = vmatprep.mubr.bf16.mxu0 0
        %1108 = vmatmul.mubr.bf16.gmra.mrb[0].mxu0 %v1073
        %v1109 = vpop.f32.mrb[0].mxu0
        %v1110 = vadd.f32 %v1056, %v1109
        %v1111 = vpop.f32.mrb[0].mxu0
        %v1112 = vpop.f32.mrb[0].mxu0
        %v1113 = vpop.f32.mrb[0].mxu0
        %1114 = vdwg.mxu0
        %v1115 = vxor.u32 %v1110, 2147483648
        %v1116 = vmul.f32 %v1115, 1.442695
        %v1117 = vpow.pop %v1116
        %v1118 = vadd.f32 %v1117, 1.0
        %v1119 = vrcp.pop %v1118
        %v1120 = vmul.f32 1.0, %v1119
        %v1121 = vmul.f32 %v1110, %v1120
        %v1122 = vpack.c.bf16 %v1121, %v1121
        %v1127 = vunpack.c.l.b16 %v788
        %v1128 = vunpack.c.l.b16 %v789
        %v1129 = vunpack.c.l.b16 %v790
        %v1130 = vunpack.c.l.b16 %v791
        %v1131 = vpack.c.b16 %v1128, %v1127
        %v1132 = vpack.c.b16 %v1130, %v1129
        %v1136 = vsel %vm915, %v1122, 0
        %1138 = vmatprep.subr.bf16.mxu0 0
        %1139 = vmatpush1.bf16.msra.mxu0 %v1131
        %1140 = vmatprep.subr.bf16.mxu0 0
        %1141 = vmatpush1.bf16.msra.mxu0 %v1132
        %1142 = vmatprep.subr.bf16.mxu0 0
        %1143 = vmatpush1.bf16.msra.mxu0 0
        %1144 = vmatprep.subr.bf16.mxu0 0
        %1145 = vmatpush1.bf16.msra.mxu0 0
        %1146 = vmatprep.subr.bf16.mxu0 0
        %1147 = vmatpush1.bf16.msra.mxu0 0
        %1148 = vmatprep.subr.bf16.mxu0 0
        %1149 = vmatpush1.bf16.msra.mxu0 0
        %1150 = vmatprep.subr.bf16.mxu0 0
        %1151 = vmatpush1.bf16.msra.mxu0 0
        %1152 = vmatprep.subr.bf16.mxu0 0
        %1153 = vmatpush1.bf16.msra.mxu0 0
        %1154 = vmatprep.subr.bf16.mxu0 0
        %1155 = vmatpush1.bf16.msra.mxu0 0
        %1156 = vmatprep.subr.bf16.mxu0 0
        %1157 = vmatpush1.bf16.msra.mxu0 0
        %1158 = vmatprep.subr.bf16.mxu0 0
        %1159 = vmatpush1.bf16.msra.mxu0 0
        %1160 = vmatprep.subr.bf16.mxu0 0
        %1161 = vmatpush1.bf16.msra.mxu0 0
        %1162 = vmatprep.subr.bf16.mxu0 0
        %1163 = vmatpush1.bf16.msra.mxu0 0
        %1164 = vmatprep.subr.bf16.mxu0 0
        %1165 = vmatpush1.bf16.msra.mxu0 0
        %1166 = vmatprep.subr.bf16.mxu0 0
        %1167 = vmatpush1.bf16.msra.mxu0 0
        %1168 = vmatprep.subr.bf16.mxu0 0
        %1169 = vmatpush1.bf16.msra.mxu0 0
        %1170 = vmatprep.mubr.bf16.mxu0 0
        %1171 = vmatmul.mubr.bf16.gmra.mrb[0].mxu0 %v1136
        %v1172 = vpop.f32.mrb[0].mxu0
        %v1173 = vadd.f32 %v801, %v1172
        %v1174 = vpop.f32.mrb[0].mxu0
        %v1175 = vpop.f32.mrb[0].mxu0
        %v1176 = vpop.f32.mrb[0].mxu0
        %1177 = vdwg.mxu0
        %1179 = vrot.lane.b32.xlu0 %v1122, 96
        %v1180 = vpop.permute.xlu0 %1179
        %v1185 = vunpack.c.l.b16 %v792
        %v1186 = vunpack.c.l.b16 %v793
        %v1187 = vunpack.c.l.b16 %v794
        %v1188 = vunpack.c.l.b16 %v795
        %v1189 = vpack.c.b16 %v1186, %v1185
        %v1190 = vpack.c.b16 %v1188, %v1187
        %v1194 = vsel %vm915, %v1180, 0
        %1196 = vmatprep.subr.bf16.mxu0 0
        %1197 = vmatpush1.bf16.msra.mxu0 %v1189
        %1198 = vmatprep.subr.bf16.mxu0 0
        %1199 = vmatpush1.bf16.msra.mxu0 %v1190
        %1200 = vmatprep.subr.bf16.mxu0 0
        %1201 = vmatpush1.bf16.msra.mxu0 0
        %1202 = vmatprep.subr.bf16.mxu0 0
        %1203 = vmatpush1.bf16.msra.mxu0 0
        %1204 = vmatprep.subr.bf16.mxu0 0
        %1205 = vmatpush1.bf16.msra.mxu0 0
        %1206 = vmatprep.subr.bf16.mxu0 0
        %1207 = vmatpush1.bf16.msra.mxu0 0
        %1208 = vmatprep.subr.bf16.mxu0 0
        %1209 = vmatpush1.bf16.msra.mxu0 0
        %1210 = vmatprep.subr.bf16.mxu0 0
        %1211 = vmatpush1.bf16.msra.mxu0 0
        %1212 = vmatprep.subr.bf16.mxu0 0
        %1213 = vmatpush1.bf16.msra.mxu0 0
        %1214 = vmatprep.subr.bf16.mxu0 0
        %1215 = vmatpush1.bf16.msra.mxu0 0
        %1216 = vmatprep.subr.bf16.mxu0 0
        %1217 = vmatpush1.bf16.msra.mxu0 0
        %1218 = vmatprep.subr.bf16.mxu0 0
        %1219 = vmatpush1.bf16.msra.mxu0 0
        %1220 = vmatprep.subr.bf16.mxu0 0
        %1221 = vmatpush1.bf16.msra.mxu0 0
        %1222 = vmatprep.subr.bf16.mxu0 0
        %1223 = vmatpush1.bf16.msra.mxu0 0
        %1224 = vmatprep.subr.bf16.mxu0 0
        %1225 = vmatpush1.bf16.msra.mxu0 0
        %1226 = vmatprep.subr.bf16.mxu0 0
        %1227 = vmatpush1.bf16.msra.mxu0 0
        %1228 = vmatprep.mubr.bf16.mxu0 0
        %1229 = vmatmul.mubr.bf16.gmra.mrb[0].mxu0 %v1194
        %v1230 = vpop.f32.mrb[0].mxu0
        %v1231 = vadd.f32 %v808, %v1230
        %v1232 = vpop.f32.mrb[0].mxu0
        %v1233 = vpop.f32.mrb[0].mxu0
        %v1234 = vpop.f32.mrb[0].mxu0
        %1235 = vdwg.mxu0
        %v1236 = vld [vmem:[%s677] sm:$0x1]
        %v1237 = vmul.f32 %v1173, 1.442695
        %v1238 = vpow.pop %v1237
        %v1239 = vadd.f32 %v1238, 1.0
        %v1240 = vunpack.c.l.bf16 %v1236
        %v1243 = vunpack.c.l.s4 1983009808
        %v1244 = vunpack.c.0.s8 %v1243
        %v1245 = vlaneseq
        %v1246 = vshrl.u32 %v1245, 7
        %v1247 = vsub.s32 %v1244, %v1246
        %v1248 = vrot.slane %v1240, %v1247
        %1249 = vrot.lane.b32.xlu0 %v1248, 16
        %v1250 = vpop.permute.xlu0 %1249
        %v1252 = vmul.f32 %v1239, %v1250
        %1254 = vrot.lane.b32.xlu0 %v1252, 112
        %v1255 = vpop.permute.xlu0 %1254
        %v1257 = vadd.f32 %v1173, %v1255
        %v1258 = vmul.f32 %v1231, 1.442695
        %v1259 = vpow.pop %v1258
        %v1260 = vadd.f32 %v1259, 1.0
        %v1261 = vmul.f32 %v1260, %v1240
        %1263 = vrot.lane.b32.xlu0 %v1261, 112
        %v1264 = vpop.permute.xlu0 %1263
        %v1266 = vadd.f32 %v1231, %v1264
        %1268 = vrot.lane.b32.xlu0 %v1053, 96
        %v1269 = vpop.permute.xlu0 %1268
        %1272 = vrot.lane.b32.xlu0 %v1173, 32
        %v1273 = vpop.permute.xlu0 %1272
        %1276 = vrot.lane.b32.xlu0 %v1231, 64
        %v1277 = vpop.permute.xlu0 %1276
        %1280 = vrot.lane.b32.xlu0 %v1257, 96
        %v1281 = vpop.permute.xlu0 %1280
        %1284 = vrot.lane.b32.xlu0 %v1266, 112
        %v1285 = vpop.permute.xlu0 %1284
        %v1287 = vsel %vm915, %v1269, %v1273
        %vm1288 = vcmask 523264
        %v1289 = vsel %vm1288, %v1287, %v1277
        %vm1290 = vcmask 785408
        %v1291 = vsel %vm1290, %v1289, %v1281
        %vm1292 = vcmask 916480
        %v1293 = vsel %vm1292, %v1291, %v1285
        %1294 = vst [vmem:[%s753] sm:$0x3] %v1293
        %s1295 = scalar_lea.vmem %s763, 2
        %v1296 = vld [vmem:[%s1295] sm:$0x3]
        %1298 = vset.pattern.permute.xlu0 0
        %1299 = vperm.xlu0 %1298, %v1296
        %v1300 = vpop.permute.xlu0 %1299
        %v1302 = vmul.f32 %v1266, %v1300
        %v1303 = vpack.c.bf16 %v1302, %v1302
        %s1304 = scalar_lea.vmem %s659, 1 [#allocation9]
        %v1305 = vld [vmem:[%s1304] sm:$0x1]
        %v1306 = vunpack.c.l.bf16 %v1305
        %v1308 = vsel %vm851, %v1303, 0
        %1310 = vmatprep.subr.bf16.mxu0 0
        %1311 = vmatpush1.bf16.msra.mxu0 %v849
        %1312 = vmatprep.subr.bf16.mxu0 0
        %1313 = vmatpush1.bf16.msra.mxu0 0
        %1314 = vmatprep.subr.bf16.mxu0 0
        %1315 = vmatpush1.bf16.msra.mxu0 0
        %1316 = vmatprep.subr.bf16.mxu0 0
        %1317 = vmatpush1.bf16.msra.mxu0 0
        %1318 = vmatprep.subr.bf16.mxu0 0
        %1319 = vmatpush1.bf16.msra.mxu0 0
        %1320 = vmatprep.subr.bf16.mxu0 0
        %1321 = vmatpush1.bf16.msra.mxu0 0
        %1322 = vmatprep.subr.bf16.mxu0 0
        %1323 = vmatpush1.bf16.msra.mxu0 0
        %1324 = vmatprep.subr.bf16.mxu0 0
        %1325 = vmatpush1.bf16.msra.mxu0 0
        %1326 = vmatprep.subr.bf16.mxu0 0
        %1327 = vmatpush1.bf16.msra.mxu0 0
        %1328 = vmatprep.subr.bf16.mxu0 0
        %1329 = vmatpush1.bf16.msra.mxu0 0
        %1330 = vmatprep.subr.bf16.mxu0 0
        %1331 = vmatpush1.bf16.msra.mxu0 0
        %1332 = vmatprep.subr.bf16.mxu0 0
        %1333 = vmatpush1.bf16.msra.mxu0 0
        %1334 = vmatprep.subr.bf16.mxu0 0
        %1335 = vmatpush1.bf16.msra.mxu0 0
        %1336 = vmatprep.subr.bf16.mxu0 0
        %1337 = vmatpush1.bf16.msra.mxu0 0
        %1338 = vmatprep.subr.bf16.mxu0 0
        %1339 = vmatpush1.bf16.msra.mxu0 0
        %1340 = vmatprep.subr.bf16.mxu0 0
        %1341 = vmatpush1.bf16.msra.mxu0 0
        %1342 = vmatprep.mubr.bf16.mxu0 0
        %1343 = vmatmul.mubr.bf16.gmra.mrb[0].mxu0 %v1308
        %v1344 = vpop.f32.mrb[0].mxu0
        %v1345 = vadd.f32 %v1306, %v1344
        %v1346 = vpop.f32.mrb[0].mxu0
        %v1347 = vpop.f32.mrb[0].mxu0
        %v1348 = vpop.f32.mrb[0].mxu0
        %1349 = vdwg.mxu0
        %v1350 = vxor.u32 %v1345, 2147483648
        %v1351 = vmul.f32 %v1350, 1.442695
        %v1352 = vpow.pop %v1351
        %v1353 = vadd.f32 %v1352, 1.0
        %v1354 = vrcp.pop %v1353
        %v1355 = vmul.f32 1.0, %v1354
        %v1356 = vmul.f32 %v1345, %v1355
        %v1357 = vpack.c.bf16 %v1356, %v1356
        %v1359 = vsel %vm915, %v1357, 0
        %1361 = vmatprep.subr.bf16.mxu0 0
        %1362 = vmatpush1.bf16.msra.mxu0 %v911
        %1363 = vmatprep.subr.bf16.mxu0 0
        %1364 = vmatpush1.bf16.msra.mxu0 %v912
        %1365 = vmatprep.subr.bf16.mxu0 0
        %1366 = vmatpush1.bf16.msra.mxu0 0
        %1367 = vmatprep.subr.bf16.mxu0 0
        %1368 = vmatpush1.bf16.msra.mxu0 0
        %1369 = vmatprep.subr.bf16.mxu0 0
        %1370 = vmatpush1.bf16.msra.mxu0 0
        %1371 = vmatprep.subr.bf16.mxu0 0
        %1372 = vmatpush1.bf16.msra.mxu0 0
        %1373 = vmatprep.subr.bf16.mxu0 0
        %1374 = vmatpush1.bf16.msra.mxu0 0
        %1375 = vmatprep.subr.bf16.mxu0 0
        %1376 = vmatpush1.bf16.msra.mxu0 0
        %1377 = vmatprep.subr.bf16.mxu0 0
        %1378 = vmatpush1.bf16.msra.mxu0 0
        %1379 = vmatprep.subr.bf16.mxu0 0
        %1380 = vmatpush1.bf16.msra.mxu0 0
        %1381 = vmatprep.subr.bf16.mxu0 0
        %1382 = vmatpush1.bf16.msra.mxu0 0
        %1383 = vmatprep.subr.bf16.mxu0 0
        %1384 = vmatpush1.bf16.msra.mxu0 0
        %1385 = vmatprep.subr.bf16.mxu0 0
        %1386 = vmatpush1.bf16.msra.mxu0 0
        %1387 = vmatprep.subr.bf16.mxu0 0
        %1388 = vmatpush1.bf16.msra.mxu0 0
        %1389 = vmatprep.subr.bf16.mxu0 0
        %1390 = vmatpush1.bf16.msra.mxu0 0
        %1391 = vmatprep.subr.bf16.mxu0 0
        %1392 = vmatpush1.bf16.msra.mxu0 0
        %1393 = vmatprep.mubr.bf16.mxu0 0
        %1394 = vmatmul.mubr.bf16.gmra.mrb[0].mxu0 %v1359
        %v1395 = vpop.f32.mrb[0].mxu0
        %v1396 = vadd.f32 0.0, %v1395
        %v1397 = vpop.f32.mrb[0].mxu0
        %v1398 = vpop.f32.mrb[0].mxu0
        %v1399 = vpop.f32.mrb[0].mxu0
        %1400 = vdwg.mxu0
        %1401 = vmatprep.subr.bf16.mxu0 0
        %1402 = vmatpush1.bf16.msra.mxu0 %v968
        %1403 = vmatprep.subr.bf16.mxu0 0
        %1404 = vmatpush1.bf16.msra.mxu0 %v969
        %1405 = vmatprep.subr.bf16.mxu0 0
        %1406 = vmatpush1.bf16.msra.mxu0 0
        %1407 = vmatprep.subr.bf16.mxu0 0
        %1408 = vmatpush1.bf16.msra.mxu0 0
        %1409 = vmatprep.subr.bf16.mxu0 0
        %1410 = vmatpush1.bf16.msra.mxu0 0
        %1411 = vmatprep.subr.bf16.mxu0 0
        %1412 = vmatpush1.bf16.msra.mxu0 0
        %1413 = vmatprep.subr.bf16.mxu0 0
        %1414 = vmatpush1.bf16.msra.mxu0 0
        %1415 = vmatprep.subr.bf16.mxu0 0
        %1416 = vmatpush1.bf16.msra.mxu0 0
        %1417 = vmatprep.subr.bf16.mxu0 0
        %1418 = vmatpush1.bf16.msra.mxu0 0
        %1419 = vmatprep.subr.bf16.mxu0 0
        %1420 = vmatpush1.bf16.msra.mxu0 0
        %1421 = vmatprep.subr.bf16.mxu0 0
        %1422 = vmatpush1.bf16.msra.mxu0 0
        %1423 = vmatprep.subr.bf16.mxu0 0
        %1424 = vmatpush1.bf16.msra.mxu0 0
        %1425 = vmatprep.subr.bf16.mxu0 0
        %1426 = vmatpush1.bf16.msra.mxu0 0
        %1427 = vmatprep.subr.bf16.mxu0 0
        %1428 = vmatpush1.bf16.msra.mxu0 0
        %1429 = vmatprep.subr.bf16.mxu0 0
        %1430 = vmatpush1.bf16.msra.mxu0 0
        %1431 = vmatprep.subr.bf16.mxu0 0
        %1432 = vmatpush1.bf16.msra.mxu0 0
        %1433 = vmatprep.mubr.bf16.mxu0 0
        %1434 = vmatmul.mubr.bf16.gmra.mrb[0].mxu0 %v1073
        %v1435 = vpop.f32.mrb[0].mxu0
        %v1436 = vadd.f32 0.0, %v1435
        %v1437 = vpop.f32.mrb[0].mxu0
        %v1438 = vpop.f32.mrb[0].mxu0
        %v1439 = vpop.f32.mrb[0].mxu0
        %1440 = vdwg.mxu0
        %v1441 = vadd.f32 %v1396, %v1436
        %v1442 = vadd.f32 %v1441, %v819
        %v1443 = vxor.u32 %v1442, 2147483648
        %v1444 = vmul.f32 %v1443, 1.442695
        %v1445 = vpow.pop %v1444
        %v1446 = vadd.f32 %v1445, 1.0
        %v1447 = vrcp.pop %v1446
        %v1448 = vmul.f32 1.0, %v1447
        %v1449 = vadd.f32 %v1396, %v1024
        %v1450 = vadd.f32 %v1436, %v1028
        %1452 = vrot.lane.b32.xlu0 %v1450, 64
        %v1453 = vpop.permute.xlu0 %1452
        %v1455 = vmul.f32 %v1448, %v1453
        %1457 = vrot.lane.b32.xlu0 %v1455, 64
        %v1458 = vpop.permute.xlu0 %1457
        %v1460 = vadd.f32 %v1449, %v1458
        %v1461 = vtanh.pop %v1460
        %v1462 = vsub.f32 1.0, %v1448
        %1464 = vrot.lane.b32.xlu0 %v1461, 96
        %v1465 = vpop.permute.xlu0 %1464
        %v1467 = vmul.f32 %v1462, %v1465
        %v1468 = vmul.f32 %v1448, %v1053
        %v1469 = vadd.f32 %v1467, %v1468
        %v1470 = vpack.c.bf16 %v1469, %v1469
        %s1471 = scalar_lea.vmem %s668, 1 [#allocation10]
        %v1472 = vld [vmem:[%s1471] sm:$0x1]
        %v1473 = vunpack.c.l.bf16 %v1472
        %1475 = vrot.lane.b32.xlu0 %v1470, 96
        %v1476 = vpop.permute.xlu0 %1475
        %v1478 = vsel %vm915, %v1476, 0
        %1480 = vmatprep.subr.bf16.mxu0 0
        %1481 = vmatpush1.bf16.msra.mxu0 %v1068
        %1482 = vmatprep.subr.bf16.mxu0 0
        %1483 = vmatpush1.bf16.msra.mxu0 %v1069
        %1484 = vmatprep.subr.bf16.mxu0 0
        %1485 = vmatpush1.bf16.msra.mxu0 0
        %1486 = vmatprep.subr.bf16.mxu0 0
        %1487 = vmatpush1.bf16.msra.mxu0 0
        %1488 = vmatprep.subr.bf16.mxu0 0
        %1489 = vmatpush1.bf16.msra.mxu0 0
        %1490 = vmatprep.subr.bf16.mxu0 0
        %1491 = vmatpush1.bf16.msra.mxu0 0
        %1492 = vmatprep.subr.bf16.mxu0 0
        %1493 = vmatpush1.bf16.msra.mxu0 0
        %1494 = vmatprep.subr.bf16.mxu0 0
        %1495 = vmatpush1.bf16.msra.mxu0 0
        %1496 = vmatprep.subr.bf16.mxu0 0
        %1497 = vmatpush1.bf16.msra.mxu0 0
        %1498 = vmatprep.subr.bf16.mxu0 0
        %1499 = vmatpush1.bf16.msra.mxu0 0
        %1500 = vmatprep.subr.bf16.mxu0 0
        %1501 = vmatpush1.bf16.msra.mxu0 0
        %1502 = vmatprep.subr.bf16.mxu0 0
        %1503 = vmatpush1.bf16.msra.mxu0 0
        %1504 = vmatprep.subr.bf16.mxu0 0
        %1505 = vmatpush1.bf16.msra.mxu0 0
        %1506 = vmatprep.subr.bf16.mxu0 0
        %1507 = vmatpush1.bf16.msra.mxu0 0
        %1508 = vmatprep.subr.bf16.mxu0 0
        %1509 = vmatpush1.bf16.msra.mxu0 0
        %1510 = vmatprep.subr.bf16.mxu0 0
        %1511 = vmatpush1.bf16.msra.mxu0 0
        %1512 = vmatprep.mubr.bf16.mxu0 0
        %1513 = vmatmul.mubr.bf16.gmra.mrb[0].mxu0 %v1478
        %v1514 = vpop.f32.mrb[0].mxu0
        %v1515 = vadd.f32 %v1473, %v1514
        %v1516 = vpop.f32.mrb[0].mxu0
        %v1517 = vpop.f32.mrb[0].mxu0
        %v1518 = vpop.f32.mrb[0].mxu0
        %1519 = vdwg.mxu0
        %v1520 = vxor.u32 %v1515, 2147483648
        %v1521 = vmul.f32 %v1520, 1.442695
        %v1522 = vpow.pop %v1521
        %v1523 = vadd.f32 %v1522, 1.0
        %v1524 = vrcp.pop %v1523
        %v1525 = vmul.f32 1.0, %v1524
        %v1526 = vmul.f32 %v1515, %v1525
        %v1527 = vpack.c.bf16 %v1526, %v1526
        %v1529 = vsel %vm915, %v1527, 0
        %1531 = vmatprep.subr.bf16.mxu0 0
        %1532 = vmatpush1.bf16.msra.mxu0 %v1131
        %1533 = vmatprep.subr.bf16.mxu0 0
        %1534 = vmatpush1.bf16.msra.mxu0 %v1132
        %1535 = vmatprep.subr.bf16.mxu0 0
        %1536 = vmatpush1.bf16.msra.mxu0 0
        %1537 = vmatprep.subr.bf16.mxu0 0
        %1538 = vmatpush1.bf16.msra.mxu0 0
        %1539 = vmatprep.subr.bf16.mxu0 0
        %1540 = vmatpush1.bf16.msra.mxu0 0
        %1541 = vmatprep.subr.bf16.mxu0 0
        %1542 = vmatpush1.bf16.msra.mxu0 0
        %1543 = vmatprep.subr.bf16.mxu0 0
        %1544 = vmatpush1.bf16.msra.mxu0 0
        %1545 = vmatprep.subr.bf16.mxu0 0
        %1546 = vmatpush1.bf16.msra.mxu0 0
        %1547 = vmatprep.subr.bf16.mxu0 0
        %1548 = vmatpush1.bf16.msra.mxu0 0
        %1549 = vmatprep.subr.bf16.mxu0 0
        %1550 = vmatpush1.bf16.msra.mxu0 0
        %1551 = vmatprep.subr.bf16.mxu0 0
        %1552 = vmatpush1.bf16.msra.mxu0 0
        %1553 = vmatprep.subr.bf16.mxu0 0
        %1554 = vmatpush1.bf16.msra.mxu0 0
        %1555 = vmatprep.subr.bf16.mxu0 0
        %1556 = vmatpush1.bf16.msra.mxu0 0
        %1557 = vmatprep.subr.bf16.mxu0 0
        %1558 = vmatpush1.bf16.msra.mxu0 0
        %1559 = vmatprep.subr.bf16.mxu0 0
        %1560 = vmatpush1.bf16.msra.mxu0 0
        %1561 = vmatprep.subr.bf16.mxu0 0
        %1562 = vmatpush1.bf16.msra.mxu0 0
        %1563 = vmatprep.mubr.bf16.mxu0 0
        %1564 = vmatmul.mubr.bf16.gmra.mrb[0].mxu0 %v1529
        %v1565 = vpop.f32.mrb[0].mxu0
        %v1566 = vadd.f32 %v801, %v1565
        %v1567 = vpop.f32.mrb[0].mxu0
        %v1568 = vpop.f32.mrb[0].mxu0
        %v1569 = vpop.f32.mrb[0].mxu0
        %1570 = vdwg.mxu0
        %1572 = vrot.lane.b32.xlu0 %v1527, 96
        %v1573 = vpop.permute.xlu0 %1572
        %v1575 = vsel %vm915, %v1573, 0
        %1577 = vmatprep.subr.bf16.mxu0 0
        %1578 = vmatpush1.bf16.msra.mxu0 %v1189
        %1579 = vmatprep.subr.bf16.mxu0 0
        %1580 = vmatpush1.bf16.msra.mxu0 %v1190
        %1581 = vmatprep.subr.bf16.mxu0 0
        %1582 = vmatpush1.bf16.msra.mxu0 0
        %1583 = vmatprep.subr.bf16.mxu0 0
        %1584 = vmatpush1.bf16.msra.mxu0 0
        %1585 = vmatprep.subr.bf16.mxu0 0
        %1586 = vmatpush1.bf16.msra.mxu0 0
        %1587 = vmatprep.subr.bf16.mxu0 0
        %1588 = vmatpush1.bf16.msra.mxu0 0
        %1589 = vmatprep.subr.bf16.mxu0 0
        %1590 = vmatpush1.bf16.msra.mxu0 0
        %1591 = vmatprep.subr.bf16.mxu0 0
        %1592 = vmatpush1.bf16.msra.mxu0 0
        %1593 = vmatprep.subr.bf16.mxu0 0
        %1594 = vmatpush1.bf16.msra.mxu0 0
        %1595 = vmatprep.subr.bf16.mxu0 0
        %1596 = vmatpush1.bf16.msra.mxu0 0
        %1597 = vmatprep.subr.bf16.mxu0 0
        %1598 = vmatpush1.bf16.msra.mxu0 0
        %1599 = vmatprep.subr.bf16.mxu0 0
        %1600 = vmatpush1.bf16.msra.mxu0 0
        %1601 = vmatprep.subr.bf16.mxu0 0
        %1602 = vmatpush1.bf16.msra.mxu0 0
        %1603 = vmatprep.subr.bf16.mxu0 0
        %1604 = vmatpush1.bf16.msra.mxu0 0
        %1605 = vmatprep.subr.bf16.mxu0 0
        %1606 = vmatpush1.bf16.msra.mxu0 0
        %1607 = vmatprep.subr.bf16.mxu0 0
        %1608 = vmatpush1.bf16.msra.mxu0 0
        %1609 = vmatprep.mubr.bf16.mxu0 0
        %1610 = vmatmul.mubr.bf16.gmra.mrb[0].mxu0 %v1575
        %v1611 = vpop.f32.mrb[0].mxu0
        %v1612 = vadd.f32 %v808, %v1611
        %v1613 = vpop.f32.mrb[0].mxu0
        %v1614 = vpop.f32.mrb[0].mxu0
        %v1615 = vpop.f32.mrb[0].mxu0
        %1616 = vdwg.mxu0
        %s1617 = scalar_lea.vmem %s677, 1 [#allocation11]
        %v1618 = vld [vmem:[%s1617] sm:$0x1]
        %v1619 = vmul.f32 %v1566, 1.442695
        %v1620 = vpow.pop %v1619
        %v1621 = vadd.f32 %v1620, 1.0
        %v1622 = vunpack.c.l.bf16 %v1618
        %v1625 = vunpack.c.l.s4 1983009808
        %v1626 = vunpack.c.0.s8 %v1625
        %v1627 = vlaneseq
        %v1628 = vshrl.u32 %v1627, 7
        %v1629 = vsub.s32 %v1626, %v1628
        %v1630 = vrot.slane %v1622, %v1629
        %1631 = vrot.lane.b32.xlu0 %v1630, 16
        %v1632 = vpop.permute.xlu0 %1631
        %v1634 = vmul.f32 %v1621, %v1632
        %1636 = vrot.lane.b32.xlu0 %v1634, 112
        %v1637 = vpop.permute.xlu0 %1636
        %v1639 = vadd.f32 %v1566, %v1637
        %v1640 = vmul.f32 %v1612, 1.442695
        %v1641 = vpow.pop %v1640
        %v1642 = vadd.f32 %v1641, 1.0
        %v1643 = vmul.f32 %v1642, %v1622
        %1645 = vrot.lane.b32.xlu0 %v1643, 112
        %v1646 = vpop.permute.xlu0 %1645
        %v1648 = vadd.f32 %v1612, %v1646
        %1650 = vrot.lane.b32.xlu0 %v1469, 96
        %v1651 = vpop.permute.xlu0 %1650
        %1654 = vrot.lane.b32.xlu0 %v1566, 32
        %v1655 = vpop.permute.xlu0 %1654
        %1658 = vrot.lane.b32.xlu0 %v1612, 64
        %v1659 = vpop.permute.xlu0 %1658
        %1662 = vrot.lane.b32.xlu0 %v1639, 96
        %v1663 = vpop.permute.xlu0 %1662
        %1666 = vrot.lane.b32.xlu0 %v1648, 112
        %v1667 = vpop.permute.xlu0 %1666
        %v1669 = vsel %vm915, %v1651, %v1655
        %v1670 = vsel %vm1288, %v1669, %v1659
        %v1671 = vsel %vm1290, %v1670, %v1663
        %v1672 = vsel %vm1292, %v1671, %v1667
        %s1673 = scalar_lea.vmem %s753, 2 [#allocation15]
        %1674 = vst [vmem:[%s1673] sm:$0x3] %v1672
        %s1675 = scalar_lea.vmem %s763, 4
        %v1676 = vld [vmem:[%s1675] sm:$0x3]
        %1678 = vset.pattern.permute.xlu0 0
        %1679 = vperm.xlu0 %1678, %v1676
        %v1680 = vpop.permute.xlu0 %1679
        %v1682 = vmul.f32 %v1648, %v1680
        %v1683 = vpack.c.bf16 %v1682, %v1682
        %s1684 = scalar_lea.vmem %s659, 2 [#allocation9]
        %v1685 = vld [vmem:[%s1684] sm:$0x1]
        %v1686 = vunpack.c.l.bf16 %v1685
        %v1688 = vsel %vm851, %v1683, 0
        %1690 = vmatprep.subr.bf16.mxu0 0
        %1691 = vmatpush1.bf16.msra.mxu0 %v849
        %1692 = vmatprep.subr.bf16.mxu0 0
        %1693 = vmatpush1.bf16.msra.mxu0 0
        %1694 = vmatprep.subr.bf16.mxu0 0
        %1695 = vmatpush1.bf16.msra.mxu0 0
        %1696 = vmatprep.subr.bf16.mxu0 0
        %1697 = vmatpush1.bf16.msra.mxu0 0
        %1698 = vmatprep.subr.bf16.mxu0 0
        %1699 = vmatpush1.bf16.msra.mxu0 0
        %1700 = vmatprep.subr.bf16.mxu0 0
        %1701 = vmatpush1.bf16.msra.mxu0 0
        %1702 = vmatprep.subr.bf16.mxu0 0
        %1703 = vmatpush1.bf16.msra.mxu0 0
        %1704 = vmatprep.subr.bf16.mxu0 0
        %1705 = vmatpush1.bf16.msra.mxu0 0
        %1706 = vmatprep.subr.bf16.mxu0 0
        %1707 = vmatpush1.bf16.msra.mxu0 0
        %1708 = vmatprep.subr.bf16.mxu0 0
        %1709 = vmatpush1.bf16.msra.mxu0 0
        %1710 = vmatprep.subr.bf16.mxu0 0
        %1711 = vmatpush1.bf16.msra.mxu0 0
        %1712 = vmatprep.subr.bf16.mxu0 0
        %1713 = vmatpush1.bf16.msra.mxu0 0
        %1714 = vmatprep.subr.bf16.mxu0 0
        %1715 = vmatpush1.bf16.msra.mxu0 0
        %1716 = vmatprep.subr.bf16.mxu0 0
        %1717 = vmatpush1.bf16.msra.mxu0 0
        %1718 = vmatprep.subr.bf16.mxu0 0
        %1719 = vmatpush1.bf16.msra.mxu0 0
        %1720 = vmatprep.subr.bf16.mxu0 0
        %1721 = vmatpush1.bf16.msra.mxu0 0
        %1722 = vmatprep.mubr.bf16.mxu0 0
        %1723 = vmatmul.mubr.bf16.gmra.mrb[0].mxu0 %v1688
        %v1724 = vpop.f32.mrb[0].mxu0
        %v1725 = vadd.f32 %v1686, %v1724
        %v1726 = vpop.f32.mrb[0].mxu0
        %v1727 = vpop.f32.mrb[0].mxu0
        %v1728 = vpop.f32.mrb[0].mxu0
        %1729 = vdwg.mxu0
        %v1730 = vxor.u32 %v1725, 2147483648
        %v1731 = vmul.f32 %v1730, 1.442695
        %v1732 = vpow.pop %v1731
        %v1733 = vadd.f32 %v1732, 1.0
        %v1734 = vrcp.pop %v1733
        %v1735 = vmul.f32 1.0, %v1734
        %v1736 = vmul.f32 %v1725, %v1735
        %v1737 = vpack.c.bf16 %v1736, %v1736
        %v1739 = vsel %vm915, %v1737, 0
        %1741 = vmatprep.subr.bf16.mxu0 0
        %1742 = vmatpush1.bf16.msra.mxu0 %v911
        %1743 = vmatprep.subr.bf16.mxu0 0
        %1744 = vmatpush1.bf16.msra.mxu0 %v912
        %1745 = vmatprep.subr.bf16.mxu0 0
        %1746 = vmatpush1.bf16.msra.mxu0 0
        %1747 = vmatprep.subr.bf16.mxu0 0
        %1748 = vmatpush1.bf16.msra.mxu0 0
        %1749 = vmatprep.subr.bf16.mxu0 0
        %1750 = vmatpush1.bf16.msra.mxu0 0
        %1751 = vmatprep.subr.bf16.mxu0 0
        %1752 = vmatpush1.bf16.msra.mxu0 0
        %1753 = vmatprep.subr.bf16.mxu0 0
        %1754 = vmatpush1.bf16.msra.mxu0 0
        %1755 = vmatprep.subr.bf16.mxu0 0
        %1756 = vmatpush1.bf16.msra.mxu0 0
        %1757 = vmatprep.subr.bf16.mxu0 0
        %1758 = vmatpush1.bf16.msra.mxu0 0
        %1759 = vmatprep.subr.bf16.mxu0 0
        %1760 = vmatpush1.bf16.msra.mxu0 0
        %1761 = vmatprep.subr.bf16.mxu0 0
        %1762 = vmatpush1.bf16.msra.mxu0 0
        %1763 = vmatprep.subr.bf16.mxu0 0
        %1764 = vmatpush1.bf16.msra.mxu0 0
        %1765 = vmatprep.subr.bf16.mxu0 0
        %1766 = vmatpush1.bf16.msra.mxu0 0
        %1767 = vmatprep.subr.bf16.mxu0 0
        %1768 = vmatpush1.bf16.msra.mxu0 0
        %1769 = vmatprep.subr.bf16.mxu0 0
        %1770 = vmatpush1.bf16.msra.mxu0 0
        %1771 = vmatprep.subr.bf16.mxu0 0
        %1772 = vmatpush1.bf16.msra.mxu0 0
        %1773 = vmatprep.mubr.bf16.mxu0 0
        %1774 = vmatmul.mubr.bf16.gmra.mrb[0].mxu0 %v1739
        %v1775 = vpop.f32.mrb[0].mxu0
        %v1776 = vadd.f32 0.0, %v1775
        %v1777 = vpop.f32.mrb[0].mxu0
        %v1778 = vpop.f32.mrb[0].mxu0
        %v1779 = vpop.f32.mrb[0].mxu0
        %1780 = vdwg.mxu0
        %1781 = vmatprep.subr.bf16.mxu0 0
        %1782 = vmatpush1.bf16.msra.mxu0 %v968
        %1783 = vmatprep.subr.bf16.mxu0 0
        %1784 = vmatpush1.bf16.msra.mxu0 %v969
        %1785 = vmatprep.subr.bf16.mxu0 0
        %1786 = vmatpush1.bf16.msra.mxu0 0
        %1787 = vmatprep.subr.bf16.mxu0 0
        %1788 = vmatpush1.bf16.msra.mxu0 0
        %1789 = vmatprep.subr.bf16.mxu0 0
        %1790 = vmatpush1.bf16.msra.mxu0 0
        %1791 = vmatprep.subr.bf16.mxu0 0
        %1792 = vmatpush1.bf16.msra.mxu0 0
        %1793 = vmatprep.subr.bf16.mxu0 0
        %1794 = vmatpush1.bf16.msra.mxu0 0
        %1795 = vmatprep.subr.bf16.mxu0 0
        %1796 = vmatpush1.bf16.msra.mxu0 0
        %1797 = vmatprep.subr.bf16.mxu0 0
        %1798 = vmatpush1.bf16.msra.mxu0 0
        %1799 = vmatprep.subr.bf16.mxu0 0
        %1800 = vmatpush1.bf16.msra.mxu0 0
        %1801 = vmatprep.subr.bf16.mxu0 0
        %1802 = vmatpush1.bf16.msra.mxu0 0
        %1803 = vmatprep.subr.bf16.mxu0 0
        %1804 = vmatpush1.bf16.msra.mxu0 0
        %1805 = vmatprep.subr.bf16.mxu0 0
        %1806 = vmatpush1.bf16.msra.mxu0 0
        %1807 = vmatprep.subr.bf16.mxu0 0
        %1808 = vmatpush1.bf16.msra.mxu0 0
        %1809 = vmatprep.subr.bf16.mxu0 0
        %1810 = vmatpush1.bf16.msra.mxu0 0
        %1811 = vmatprep.subr.bf16.mxu0 0
        %1812 = vmatpush1.bf16.msra.mxu0 0
        %1813 = vmatprep.mubr.bf16.mxu0 0
        %1814 = vmatmul.mubr.bf16.gmra.mrb[0].mxu0 %v1478
        %v1815 = vpop.f32.mrb[0].mxu0
        %v1816 = vadd.f32 0.0, %v1815
        %v1817 = vpop.f32.mrb[0].mxu0
        %v1818 = vpop.f32.mrb[0].mxu0
        %v1819 = vpop.f32.mrb[0].mxu0
        %1820 = vdwg.mxu0
        %v1821 = vadd.f32 %v1776, %v1816
        %v1822 = vadd.f32 %v1821, %v819
        %v1823 = vxor.u32 %v1822, 2147483648
        %v1824 = vmul.f32 %v1823, 1.442695
        %v1825 = vpow.pop %v1824
        %v1826 = vadd.f32 %v1825, 1.0
        %v1827 = vrcp.pop %v1826
        %v1828 = vmul.f32 1.0, %v1827
        %v1829 = vadd.f32 %v1776, %v1024
        %v1830 = vadd.f32 %v1816, %v1028
        %1832 = vrot.lane.b32.xlu0 %v1830, 64
        %v1833 = vpop.permute.xlu0 %1832
        %v1835 = vmul.f32 %v1828, %v1833
        %1837 = vrot.lane.b32.xlu0 %v1835, 64
        %v1838 = vpop.permute.xlu0 %1837
        %v1840 = vadd.f32 %v1829, %v1838
        %v1841 = vtanh.pop %v1840
        %v1842 = vsub.f32 1.0, %v1828
        %1844 = vrot.lane.b32.xlu0 %v1841, 96
        %v1845 = vpop.permute.xlu0 %1844
        %v1847 = vmul.f32 %v1842, %v1845
        %v1848 = vmul.f32 %v1828, %v1469
        %v1849 = vadd.f32 %v1847, %v1848
        %v1850 = vpack.c.bf16 %v1849, %v1849
        %s1851 = scalar_lea.vmem %s668, 2 [#allocation10]
        %v1852 = vld [vmem:[%s1851] sm:$0x1]
        %v1853 = vunpack.c.l.bf16 %v1852
        %1855 = vrot.lane.b32.xlu0 %v1850, 96
        %v1856 = vpop.permute.xlu0 %1855
        %v1858 = vsel %vm915, %v1856, 0
        %1860 = vmatprep.subr.bf16.mxu0 0
        %1861 = vmatpush1.bf16.msra.mxu0 %v1068
        %1862 = vmatprep.subr.bf16.mxu0 0
        %1863 = vmatpush1.bf16.msra.mxu0 %v1069
        %1864 = vmatprep.subr.bf16.mxu0 0
        %1865 = vmatpush1.bf16.msra.mxu0 0
        %1866 = vmatprep.subr.bf16.mxu0 0
        %1867 = vmatpush1.bf16.msra.mxu0 0
        %1868 = vmatprep.subr.bf16.mxu0 0
        %1869 = vmatpush1.bf16.msra.mxu0 0
        %1870 = vmatprep.subr.bf16.mxu0 0
        %1871 = vmatpush1.bf16.msra.mxu0 0
        %1872 = vmatprep.subr.bf16.mxu0 0
        %1873 = vmatpush1.bf16.msra.mxu0 0
        %1874 = vmatprep.subr.bf16.mxu0 0
        %1875 = vmatpush1.bf16.msra.mxu0 0
        %1876 = vmatprep.subr.bf16.mxu0 0
        %1877 = vmatpush1.bf16.msra.mxu0 0
        %1878 = vmatprep.subr.bf16.mxu0 0
        %1879 = vmatpush1.bf16.msra.mxu0 0
        %1880 = vmatprep.subr.bf16.mxu0 0
        %1881 = vmatpush1.bf16.msra.mxu0 0
        %1882 = vmatprep.subr.bf16.mxu0 0
        %1883 = vmatpush1.bf16.msra.mxu0 0
        %1884 = vmatprep.subr.bf16.mxu0 0
        %1885 = vmatpush1.bf16.msra.mxu0 0
        %1886 = vmatprep.subr.bf16.mxu0 0
        %1887 = vmatpush1.bf16.msra.mxu0 0
        %1888 = vmatprep.subr.bf16.mxu0 0
        %1889 = vmatpush1.bf16.msra.mxu0 0
        %1890 = vmatprep.subr.bf16.mxu0 0
        %1891 = vmatpush1.bf16.msra.mxu0 0
        %1892 = vmatprep.mubr.bf16.mxu0 0
        %1893 = vmatmul.mubr.bf16.gmra.mrb[0].mxu0 %v1858
        %v1894 = vpop.f32.mrb[0].mxu0
        %v1895 = vadd.f32 %v1853, %v1894
        %v1896 = vpop.f32.mrb[0].mxu0
        %v1897 = vpop.f32.mrb[0].mxu0
        %v1898 = vpop.f32.mrb[0].mxu0
        %1899 = vdwg.mxu0
        %v1900 = vxor.u32 %v1895, 2147483648
        %v1901 = vmul.f32 %v1900, 1.442695
        %v1902 = vpow.pop %v1901
        %v1903 = vadd.f32 %v1902, 1.0
        %v1904 = vrcp.pop %v1903
        %v1905 = vmul.f32 1.0, %v1904
        %v1906 = vmul.f32 %v1895, %v1905
        %v1907 = vpack.c.bf16 %v1906, %v1906
        %v1909 = vsel %vm915, %v1907, 0
        %1911 = vmatprep.subr.bf16.mxu0 0
        %1912 = vmatpush1.bf16.msra.mxu0 %v1131
        %1913 = vmatprep.subr.bf16.mxu0 0
        %1914 = vmatpush1.bf16.msra.mxu0 %v1132
        %1915 = vmatprep.subr.bf16.mxu0 0
        %1916 = vmatpush1.bf16.msra.mxu0 0
        %1917 = vmatprep.subr.bf16.mxu0 0
        %1918 = vmatpush1.bf16.msra.mxu0 0
        %1919 = vmatprep.subr.bf16.mxu0 0
        %1920 = vmatpush1.bf16.msra.mxu0 0
        %1921 = vmatprep.subr.bf16.mxu0 0
        %1922 = vmatpush1.bf16.msra.mxu0 0
        %1923 = vmatprep.subr.bf16.mxu0 0
        %1924 = vmatpush1.bf16.msra.mxu0 0
        %1925 = vmatprep.subr.bf16.mxu0 0
        %1926 = vmatpush1.bf16.msra.mxu0 0
        %1927 = vmatprep.subr.bf16.mxu0 0
        %1928 = vmatpush1.bf16.msra.mxu0 0
        %1929 = vmatprep.subr.bf16.mxu0 0
        %1930 = vmatpush1.bf16.msra.mxu0 0
        %1931 = vmatprep.subr.bf16.mxu0 0
        %1932 = vmatpush1.bf16.msra.mxu0 0
        %1933 = vmatprep.subr.bf16.mxu0 0
        %1934 = vmatpush1.bf16.msra.mxu0 0
        %1935 = vmatprep.subr.bf16.mxu0 0
        %1936 = vmatpush1.bf16.msra.mxu0 0
        %1937 = vmatprep.subr.bf16.mxu0 0
        %1938 = vmatpush1.bf16.msra.mxu0 0
        %1939 = vmatprep.subr.bf16.mxu0 0
        %1940 = vmatpush1.bf16.msra.mxu0 0
        %1941 = vmatprep.subr.bf16.mxu0 0
        %1942 = vmatpush1.bf16.msra.mxu0 0
        %1943 = vmatprep.mubr.bf16.mxu0 0
        %1944 = vmatmul.mubr.bf16.gmra.mrb[0].mxu0 %v1909
        %v1945 = vpop.f32.mrb[0].mxu0
        %v1946 = vadd.f32 %v801, %v1945
        %v1947 = vpop.f32.mrb[0].mxu0
        %v1948 = vpop.f32.mrb[0].mxu0
        %v1949 = vpop.f32.mrb[0].mxu0
        %1950 = vdwg.mxu0
        %1952 = vrot.lane.b32.xlu0 %v1907, 96
        %v1953 = vpop.permute.xlu0 %1952
        %v1955 = vsel %vm915, %v1953, 0
        %1957 = vmatprep.subr.bf16.mxu0 0
        %1958 = vmatpush1.bf16.msra.mxu0 %v1189
        %1959 = vmatprep.subr.bf16.mxu0 0
        %1960 = vmatpush1.bf16.msra.mxu0 %v1190
        %1961 = vmatprep.subr.bf16.mxu0 0
        %1962 = vmatpush1.bf16.msra.mxu0 0
        %1963 = vmatprep.subr.bf16.mxu0 0
        %1964 = vmatpush1.bf16.msra.mxu0 0
        %1965 = vmatprep.subr.bf16.mxu0 0
        %1966 = vmatpush1.bf16.msra.mxu0 0
        %1967 = vmatprep.subr.bf16.mxu0 0
        %1968 = vmatpush1.bf16.msra.mxu0 0
        %1969 = vmatprep.subr.bf16.mxu0 0
        %1970 = vmatpush1.bf16.msra.mxu0 0
        %1971 = vmatprep.subr.bf16.mxu0 0
        %1972 = vmatpush1.bf16.msra.mxu0 0
        %1973 = vmatprep.subr.bf16.mxu0 0
        %1974 = vmatpush1.bf16.msra.mxu0 0
        %1975 = vmatprep.subr.bf16.mxu0 0
        %1976 = vmatpush1.bf16.msra.mxu0 0
        %1977 = vmatprep.subr.bf16.mxu0 0
        %1978 = vmatpush1.bf16.msra.mxu0 0
        %1979 = vmatprep.subr.bf16.mxu0 0
        %1980 = vmatpush1.bf16.msra.mxu0 0
        %1981 = vmatprep.subr.bf16.mxu0 0
        %1982 = vmatpush1.bf16.msra.mxu0 0
        %1983 = vmatprep.subr.bf16.mxu0 0
        %1984 = vmatpush1.bf16.msra.mxu0 0
        %1985 = vmatprep.subr.bf16.mxu0 0
        %1986 = vmatpush1.bf16.msra.mxu0 0
        %1987 = vmatprep.subr.bf16.mxu0 0
        %1988 = vmatpush1.bf16.msra.mxu0 0
        %1989 = vmatprep.mubr.bf16.mxu0 0
        %1990 = vmatmul.mubr.bf16.gmra.mrb[0].mxu0 %v1955
        %v1991 = vpop.f32.mrb[0].mxu0
        %v1992 = vadd.f32 %v808, %v1991
        %v1993 = vpop.f32.mrb[0].mxu0
        %v1994 = vpop.f32.mrb[0].mxu0
        %v1995 = vpop.f32.mrb[0].mxu0
        %1996 = vdwg.mxu0
        %s1997 = scalar_lea.vmem %s677, 2 [#allocation11]
        %v1998 = vld [vmem:[%s1997] sm:$0x1]
        %v1999 = vmul.f32 %v1946, 1.442695
        %v2000 = vpow.pop %v1999
        %v2001 = vadd.f32 %v2000, 1.0
        %v2002 = vunpack.c.l.bf16 %v1998
        %v2005 = vunpack.c.l.s4 1983009808
        %v2006 = vunpack.c.0.s8 %v2005
        %v2007 = vlaneseq
        %v2008 = vshrl.u32 %v2007, 7
        %v2009 = vsub.s32 %v2006, %v2008
        %v2010 = vrot.slane %v2002, %v2009
        %2011 = vrot.lane.b32.xlu0 %v2010, 16
        %v2012 = vpop.permute.xlu0 %2011
        %v2014 = vmul.f32 %v2001, %v2012
        %2016 = vrot.lane.b32.xlu0 %v2014, 112
        %v2017 = vpop.permute.xlu0 %2016
        %v2019 = vadd.f32 %v1946, %v2017
        %v2020 = vmul.f32 %v1992, 1.442695
        %v2021 = vpow.pop %v2020
        %v2022 = vadd.f32 %v2021, 1.0
        %v2023 = vmul.f32 %v2022, %v2002
        %2025 = vrot.lane.b32.xlu0 %v2023, 112
        %v2026 = vpop.permute.xlu0 %2025
        %v2028 = vadd.f32 %v1992, %v2026
        %2030 = vrot.lane.b32.xlu0 %v1849, 96
        %v2031 = vpop.permute.xlu0 %2030
        %2034 = vrot.lane.b32.xlu0 %v1946, 32
        %v2035 = vpop.permute.xlu0 %2034
        %2038 = vrot.lane.b32.xlu0 %v1992, 64
        %v2039 = vpop.permute.xlu0 %2038
        %2042 = vrot.lane.b32.xlu0 %v2019, 96
        %v2043 = vpop.permute.xlu0 %2042
        %2046 = vrot.lane.b32.xlu0 %v2028, 112
        %v2047 = vpop.permute.xlu0 %2046
        %v2049 = vsel %vm915, %v2031, %v2035
        %v2050 = vsel %vm1288, %v2049, %v2039
        %v2051 = vsel %vm1290, %v2050, %v2043
        %v2052 = vsel %vm1292, %v2051, %v2047
        %s2053 = scalar_lea.vmem %s753, 4 [#allocation15]
        %2054 = vst [vmem:[%s2053] sm:$0x3] %v2052
        %s2055 = scalar_lea.vmem %s763, 6
        %v2056 = vld [vmem:[%s2055] sm:$0x3]
        %2058 = vset.pattern.permute.xlu0 0
        %2059 = vperm.xlu0 %2058, %v2056
        %v2060 = vpop.permute.xlu0 %2059
        %v2062 = vmul.f32 %v2028, %v2060
        %v2063 = vpack.c.bf16 %v2062, %v2062
        %s2064 = scalar_lea.vmem %s659, 3 [#allocation9]
        %v2065 = vld [vmem:[%s2064] sm:$0x1]
        %v2066 = vunpack.c.l.bf16 %v2065
        %v2068 = vsel %vm851, %v2063, 0
        %2070 = vmatprep.subr.bf16.mxu0 0
        %2071 = vmatpush1.bf16.msra.mxu0 %v849
        %2072 = vmatprep.subr.bf16.mxu0 0
        %2073 = vmatpush1.bf16.msra.mxu0 0
        %2074 = vmatprep.subr.bf16.mxu0 0
        %2075 = vmatpush1.bf16.msra.mxu0 0
        %2076 = vmatprep.subr.bf16.mxu0 0
        %2077 = vmatpush1.bf16.msra.mxu0 0
        %2078 = vmatprep.subr.bf16.mxu0 0
        %2079 = vmatpush1.bf16.msra.mxu0 0
        %2080 = vmatprep.subr.bf16.mxu0 0
        %2081 = vmatpush1.bf16.msra.mxu0 0
        %2082 = vmatprep.subr.bf16.mxu0 0
        %2083 = vmatpush1.bf16.msra.mxu0 0
        %2084 = vmatprep.subr.bf16.mxu0 0
        %2085 = vmatpush1.bf16.msra.mxu0 0
        %2086 = vmatprep.subr.bf16.mxu0 0
        %2087 = vmatpush1.bf16.msra.mxu0 0
        %2088 = vmatprep.subr.bf16.mxu0 0
        %2089 = vmatpush1.bf16.msra.mxu0 0
        %2090 = vmatprep.subr.bf16.mxu0 0
        %2091 = vmatpush1.bf16.msra.mxu0 0
        %2092 = vmatprep.subr.bf16.mxu0 0
        %2093 = vmatpush1.bf16.msra.mxu0 0
        %2094 = vmatprep.subr.bf16.mxu0 0
        %2095 = vmatpush1.bf16.msra.mxu0 0
        %2096 = vmatprep.subr.bf16.mxu0 0
        %2097 = vmatpush1.bf16.msra.mxu0 0
        %2098 = vmatprep.subr.bf16.mxu0 0
        %2099 = vmatpush1.bf16.msra.mxu0 0
        %2100 = vmatprep.subr.bf16.mxu0 0
        %2101 = vmatpush1.bf16.msra.mxu0 0
        %2102 = vmatprep.mubr.bf16.mxu0 0
        %2103 = vmatmul.mubr.bf16.gmra.mrb[0].mxu0 %v2068
        %v2104 = vpop.f32.mrb[0].mxu0
        %v2105 = vadd.f32 %v2066, %v2104
        %v2106 = vpop.f32.mrb[0].mxu0
        %v2107 = vpop.f32.mrb[0].mxu0
        %v2108 = vpop.f32.mrb[0].mxu0
        %2109 = vdwg.mxu0
        %v2110 = vxor.u32 %v2105, 2147483648
        %v2111 = vmul.f32 %v2110, 1.442695
        %v2112 = vpow.pop %v2111
        %v2113 = vadd.f32 %v2112, 1.0
        %v2114 = vrcp.pop %v2113
        %v2115 = vmul.f32 1.0, %v2114
        %v2116 = vmul.f32 %v2105, %v2115
        %v2117 = vpack.c.bf16 %v2116, %v2116
        %v2119 = vsel %vm915, %v2117, 0
        %2121 = vmatprep.subr.bf16.mxu0 0
        %2122 = vmatpush1.bf16.msra.mxu0 %v911
        %2123 = vmatprep.subr.bf16.mxu0 0
        %2124 = vmatpush1.bf16.msra.mxu0 %v912
        %2125 = vmatprep.subr.bf16.mxu0 0
        %2126 = vmatpush1.bf16.msra.mxu0 0
        %2127 = vmatprep.subr.bf16.mxu0 0
        %2128 = vmatpush1.bf16.msra.mxu0 0
        %2129 = vmatprep.subr.bf16.mxu0 0
        %2130 = vmatpush1.bf16.msra.mxu0 0
        %2131 = vmatprep.subr.bf16.mxu0 0
        %2132 = vmatpush1.bf16.msra.mxu0 0
        %2133 = vmatprep.subr.bf16.mxu0 0
        %2134 = vmatpush1.bf16.msra.mxu0 0
        %2135 = vmatprep.subr.bf16.mxu0 0
        %2136 = vmatpush1.bf16.msra.mxu0 0
        %2137 = vmatprep.subr.bf16.mxu0 0
        %2138 = vmatpush1.bf16.msra.mxu0 0
        %2139 = vmatprep.subr.bf16.mxu0 0
        %2140 = vmatpush1.bf16.msra.mxu0 0
        %2141 = vmatprep.subr.bf16.mxu0 0
        %2142 = vmatpush1.bf16.msra.mxu0 0
        %2143 = vmatprep.subr.bf16.mxu0 0
        %2144 = vmatpush1.bf16.msra.mxu0 0
        %2145 = vmatprep.subr.bf16.mxu0 0
        %2146 = vmatpush1.bf16.msra.mxu0 0
        %2147 = vmatprep.subr.bf16.mxu0 0
        %2148 = vmatpush1.bf16.msra.mxu0 0
        %2149 = vmatprep.subr.bf16.mxu0 0
        %2150 = vmatpush1.bf16.msra.mxu0 0
        %2151 = vmatprep.subr.bf16.mxu0 0
        %2152 = vmatpush1.bf16.msra.mxu0 0
        %2153 = vmatprep.mubr.bf16.mxu0 0
        %2154 = vmatmul.mubr.bf16.gmra.mrb[0].mxu0 %v2119
        %v2155 = vpop.f32.mrb[0].mxu0
        %v2156 = vadd.f32 0.0, %v2155
        %v2157 = vpop.f32.mrb[0].mxu0
        %v2158 = vpop.f32.mrb[0].mxu0
        %v2159 = vpop.f32.mrb[0].mxu0
        %2160 = vdwg.mxu0
        %2161 = vmatprep.subr.bf16.mxu0 0
        %2162 = vmatpush1.bf16.msra.mxu0 %v968
        %2163 = vmatprep.subr.bf16.mxu0 0
        %2164 = vmatpush1.bf16.msra.mxu0 %v969
        %2165 = vmatprep.subr.bf16.mxu0 0
        %2166 = vmatpush1.bf16.msra.mxu0 0
        %2167 = vmatprep.subr.bf16.mxu0 0
        %2168 = vmatpush1.bf16.msra.mxu0 0
        %2169 = vmatprep.subr.bf16.mxu0 0
        %2170 = vmatpush1.bf16.msra.mxu0 0
        %2171 = vmatprep.subr.bf16.mxu0 0
        %2172 = vmatpush1.bf16.msra.mxu0 0
        %2173 = vmatprep.subr.bf16.mxu0 0
        %2174 = vmatpush1.bf16.msra.mxu0 0
        %2175 = vmatprep.subr.bf16.mxu0 0
        %2176 = vmatpush1.bf16.msra.mxu0 0
        %2177 = vmatprep.subr.bf16.mxu0 0
        %2178 = vmatpush1.bf16.msra.mxu0 0
        %2179 = vmatprep.subr.bf16.mxu0 0
        %2180 = vmatpush1.bf16.msra.mxu0 0
        %2181 = vmatprep.subr.bf16.mxu0 0
        %2182 = vmatpush1.bf16.msra.mxu0 0
        %2183 = vmatprep.subr.bf16.mxu0 0
        %2184 = vmatpush1.bf16.msra.mxu0 0
        %2185 = vmatprep.subr.bf16.mxu0 0
        %2186 = vmatpush1.bf16.msra.mxu0 0
        %2187 = vmatprep.subr.bf16.mxu0 0
        %2188 = vmatpush1.bf16.msra.mxu0 0
        %2189 = vmatprep.subr.bf16.mxu0 0
        %2190 = vmatpush1.bf16.msra.mxu0 0
        %2191 = vmatprep.subr.bf16.mxu0 0
        %2192 = vmatpush1.bf16.msra.mxu0 0
        %2193 = vmatprep.mubr.bf16.mxu0 0
        %2194 = vmatmul.mubr.bf16.gmra.mrb[0].mxu0 %v1858
        %v2195 = vpop.f32.mrb[0].mxu0
        %v2196 = vadd.f32 0.0, %v2195
        %v2197 = vpop.f32.mrb[0].mxu0
        %v2198 = vpop.f32.mrb[0].mxu0
        %v2199 = vpop.f32.mrb[0].mxu0
        %2200 = vdwg.mxu0
        %v2201 = vadd.f32 %v2156, %v2196
        %v2202 = vadd.f32 %v2201, %v819
        %v2203 = vxor.u32 %v2202, 2147483648
        %v2204 = vmul.f32 %v2203, 1.442695
        %v2205 = vpow.pop %v2204
        %v2206 = vadd.f32 %v2205, 1.0
        %v2207 = vrcp.pop %v2206
        %v2208 = vmul.f32 1.0, %v2207
        %v2209 = vadd.f32 %v2156, %v1024
        %v2210 = vadd.f32 %v2196, %v1028
        %2212 = vrot.lane.b32.xlu0 %v2210, 64
        %v2213 = vpop.permute.xlu0 %2212
        %v2215 = vmul.f32 %v2208, %v2213
        %2217 = vrot.lane.b32.xlu0 %v2215, 64
        %v2218 = vpop.permute.xlu0 %2217
        %v2220 = vadd.f32 %v2209, %v2218
        %v2221 = vtanh.pop %v2220
        %v2222 = vsub.f32 1.0, %v2208
        %2224 = vrot.lane.b32.xlu0 %v2221, 96
        %v2225 = vpop.permute.xlu0 %2224
        %v2227 = vmul.f32 %v2222, %v2225
        %v2228 = vmul.f32 %v2208, %v1849
        %v2229 = vadd.f32 %v2227, %v2228
        %v2230 = vpack.c.bf16 %v2229, %v2229
        %s2231 = scalar_lea.vmem %s668, 3 [#allocation10]
        %v2232 = vld [vmem:[%s2231] sm:$0x1]
        %v2233 = vunpack.c.l.bf16 %v2232
        %2235 = vrot.lane.b32.xlu0 %v2230, 96
        %v2236 = vpop.permute.xlu0 %2235
        %v2238 = vsel %vm915, %v2236, 0
        %2240 = vmatprep.subr.bf16.mxu0 0
        %2241 = vmatpush1.bf16.msra.mxu0 %v1068
        %2242 = vmatprep.subr.bf16.mxu0 0
        %2243 = vmatpush1.bf16.msra.mxu0 %v1069
        %2244 = vmatprep.subr.bf16.mxu0 0
        %2245 = vmatpush1.bf16.msra.mxu0 0
        %2246 = vmatprep.subr.bf16.mxu0 0
        %2247 = vmatpush1.bf16.msra.mxu0 0
        %2248 = vmatprep.subr.bf16.mxu0 0
        %2249 = vmatpush1.bf16.msra.mxu0 0
        %2250 = vmatprep.subr.bf16.mxu0 0
        %2251 = vmatpush1.bf16.msra.mxu0 0
        %2252 = vmatprep.subr.bf16.mxu0 0
        %2253 = vmatpush1.bf16.msra.mxu0 0
        %2254 = vmatprep.subr.bf16.mxu0 0
        %2255 = vmatpush1.bf16.msra.mxu0 0
        %2256 = vmatprep.subr.bf16.mxu0 0
        %2257 = vmatpush1.bf16.msra.mxu0 0
        %2258 = vmatprep.subr.bf16.mxu0 0
        %2259 = vmatpush1.bf16.msra.mxu0 0
        %2260 = vmatprep.subr.bf16.mxu0 0
        %2261 = vmatpush1.bf16.msra.mxu0 0
        %2262 = vmatprep.subr.bf16.mxu0 0
        %2263 = vmatpush1.bf16.msra.mxu0 0
        %2264 = vmatprep.subr.bf16.mxu0 0
        %2265 = vmatpush1.bf16.msra.mxu0 0
        %2266 = vmatprep.subr.bf16.mxu0 0
        %2267 = vmatpush1.bf16.msra.mxu0 0
        %2268 = vmatprep.subr.bf16.mxu0 0
        %2269 = vmatpush1.bf16.msra.mxu0 0
        %2270 = vmatprep.subr.bf16.mxu0 0
        %2271 = vmatpush1.bf16.msra.mxu0 0
        %2272 = vmatprep.mubr.bf16.mxu0 0
        %2273 = vmatmul.mubr.bf16.gmra.mrb[0].mxu0 %v2238
        %v2274 = vpop.f32.mrb[0].mxu0
        %v2275 = vadd.f32 %v2233, %v2274
        %v2276 = vpop.f32.mrb[0].mxu0
        %v2277 = vpop.f32.mrb[0].mxu0
        %v2278 = vpop.f32.mrb[0].mxu0
        %2279 = vdwg.mxu0
        %v2280 = vxor.u32 %v2275, 2147483648
        %v2281 = vmul.f32 %v2280, 1.442695
        %v2282 = vpow.pop %v2281
        %v2283 = vadd.f32 %v2282, 1.0
        %v2284 = vrcp.pop %v2283
        %v2285 = vmul.f32 1.0, %v2284
        %v2286 = vmul.f32 %v2275, %v2285
        %v2287 = vpack.c.bf16 %v2286, %v2286
        %v2289 = vsel %vm915, %v2287, 0
        %2291 = vmatprep.subr.bf16.mxu0 0
        %2292 = vmatpush1.bf16.msra.mxu0 %v1131
        %2293 = vmatprep.subr.bf16.mxu0 0
        %2294 = vmatpush1.bf16.msra.mxu0 %v1132
        %2295 = vmatprep.subr.bf16.mxu0 0
        %2296 = vmatpush1.bf16.msra.mxu0 0
        %2297 = vmatprep.subr.bf16.mxu0 0
        %2298 = vmatpush1.bf16.msra.mxu0 0
        %2299 = vmatprep.subr.bf16.mxu0 0
        %2300 = vmatpush1.bf16.msra.mxu0 0
        %2301 = vmatprep.subr.bf16.mxu0 0
        %2302 = vmatpush1.bf16.msra.mxu0 0
        %2303 = vmatprep.subr.bf16.mxu0 0
        %2304 = vmatpush1.bf16.msra.mxu0 0
        %2305 = vmatprep.subr.bf16.mxu0 0
        %2306 = vmatpush1.bf16.msra.mxu0 0
        %2307 = vmatprep.subr.bf16.mxu0 0
        %2308 = vmatpush1.bf16.msra.mxu0 0
        %2309 = vmatprep.subr.bf16.mxu0 0
        %2310 = vmatpush1.bf16.msra.mxu0 0
        %2311 = vmatprep.subr.bf16.mxu0 0
        %2312 = vmatpush1.bf16.msra.mxu0 0
        %2313 = vmatprep.subr.bf16.mxu0 0
        %2314 = vmatpush1.bf16.msra.mxu0 0
        %2315 = vmatprep.subr.bf16.mxu0 0
        %2316 = vmatpush1.bf16.msra.mxu0 0
        %2317 = vmatprep.subr.bf16.mxu0 0
        %2318 = vmatpush1.bf16.msra.mxu0 0
        %2319 = vmatprep.subr.bf16.mxu0 0
        %2320 = vmatpush1.bf16.msra.mxu0 0
        %2321 = vmatprep.subr.bf16.mxu0 0
        %2322 = vmatpush1.bf16.msra.mxu0 0
        %2323 = vmatprep.mubr.bf16.mxu0 0
        %2324 = vmatmul.mubr.bf16.gmra.mrb[0].mxu0 %v2289
        %v2325 = vpop.f32.mrb[0].mxu0
        %v2326 = vadd.f32 %v801, %v2325
        %v2327 = vpop.f32.mrb[0].mxu0
        %v2328 = vpop.f32.mrb[0].mxu0
        %v2329 = vpop.f32.mrb[0].mxu0
        %2330 = vdwg.mxu0
        %2332 = vrot.lane.b32.xlu0 %v2287, 96
        %v2333 = vpop.permute.xlu0 %2332
        %v2335 = vsel %vm915, %v2333, 0
        %2337 = vmatprep.subr.bf16.mxu0 0
        %2338 = vmatpush1.bf16.msra.mxu0 %v1189
        %2339 = vmatprep.subr.bf16.mxu0 0
        %2340 = vmatpush1.bf16.msra.mxu0 %v1190
        %2341 = vmatprep.subr.bf16.mxu0 0
        %2342 = vmatpush1.bf16.msra.mxu0 0
        %2343 = vmatprep.subr.bf16.mxu0 0
        %2344 = vmatpush1.bf16.msra.mxu0 0
        %2345 = vmatprep.subr.bf16.mxu0 0
        %2346 = vmatpush1.bf16.msra.mxu0 0
        %2347 = vmatprep.subr.bf16.mxu0 0
        %2348 = vmatpush1.bf16.msra.mxu0 0
        %2349 = vmatprep.subr.bf16.mxu0 0
        %2350 = vmatpush1.bf16.msra.mxu0 0
        %2351 = vmatprep.subr.bf16.mxu0 0
        %2352 = vmatpush1.bf16.msra.mxu0 0
        %2353 = vmatprep.subr.bf16.mxu0 0
        %2354 = vmatpush1.bf16.msra.mxu0 0
        %2355 = vmatprep.subr.bf16.mxu0 0
        %2356 = vmatpush1.bf16.msra.mxu0 0
        %2357 = vmatprep.subr.bf16.mxu0 0
        %2358 = vmatpush1.bf16.msra.mxu0 0
        %2359 = vmatprep.subr.bf16.mxu0 0
        %2360 = vmatpush1.bf16.msra.mxu0 0
        %2361 = vmatprep.subr.bf16.mxu0 0
        %2362 = vmatpush1.bf16.msra.mxu0 0
        %2363 = vmatprep.subr.bf16.mxu0 0
        %2364 = vmatpush1.bf16.msra.mxu0 0
        %2365 = vmatprep.subr.bf16.mxu0 0
        %2366 = vmatpush1.bf16.msra.mxu0 0
        %2367 = vmatprep.subr.bf16.mxu0 0
        %2368 = vmatpush1.bf16.msra.mxu0 0
        %2369 = vmatprep.mubr.bf16.mxu0 0
        %2370 = vmatmul.mubr.bf16.gmra.mrb[0].mxu0 %v2335
        %v2371 = vpop.f32.mrb[0].mxu0
        %v2372 = vadd.f32 %v808, %v2371
        %v2373 = vpop.f32.mrb[0].mxu0
        %v2374 = vpop.f32.mrb[0].mxu0
        %v2375 = vpop.f32.mrb[0].mxu0
        %2376 = vdwg.mxu0
        %s2377 = scalar_lea.vmem %s677, 3 [#allocation11]
        %v2378 = vld [vmem:[%s2377] sm:$0x1]
        %v2379 = vmul.f32 %v2326, 1.442695
        %v2380 = vpow.pop %v2379
        %v2381 = vadd.f32 %v2380, 1.0
        %v2382 = vunpack.c.l.bf16 %v2378
        %v2385 = vunpack.c.l.s4 1983009808
        %v2386 = vunpack.c.0.s8 %v2385
        %v2387 = vlaneseq
        %v2388 = vshrl.u32 %v2387, 7
        %v2389 = vsub.s32 %v2386, %v2388
        %v2390 = vrot.slane %v2382, %v2389
        %2391 = vrot.lane.b32.xlu0 %v2390, 16
        %v2392 = vpop.permute.xlu0 %2391
        %v2394 = vmul.f32 %v2381, %v2392
        %2396 = vrot.lane.b32.xlu0 %v2394, 112
        %v2397 = vpop.permute.xlu0 %2396
        %v2399 = vadd.f32 %v2326, %v2397
        %v2400 = vmul.f32 %v2372, 1.442695
        %v2401 = vpow.pop %v2400
        %v2402 = vadd.f32 %v2401, 1.0
        %v2403 = vmul.f32 %v2402, %v2382
        %2405 = vrot.lane.b32.xlu0 %v2403, 112
        %v2406 = vpop.permute.xlu0 %2405
        %v2408 = vadd.f32 %v2372, %v2406
        %2410 = vrot.lane.b32.xlu0 %v2229, 96
        %v2411 = vpop.permute.xlu0 %2410
        %2414 = vrot.lane.b32.xlu0 %v2326, 32
        %v2415 = vpop.permute.xlu0 %2414
        %2418 = vrot.lane.b32.xlu0 %v2372, 64
        %v2419 = vpop.permute.xlu0 %2418
        %2422 = vrot.lane.b32.xlu0 %v2399, 96
        %v2423 = vpop.permute.xlu0 %2422
        %2426 = vrot.lane.b32.xlu0 %v2408, 112
        %v2427 = vpop.permute.xlu0 %2426
        %v2429 = vsel %vm915, %v2411, %v2415
        %v2430 = vsel %vm1288, %v2429, %v2419
        %v2431 = vsel %vm1290, %v2430, %v2423
        %v2432 = vsel %vm1292, %v2431, %v2427
        %s2433 = scalar_lea.vmem %s753, 6 [#allocation15]
        %2434 = vst [vmem:[%s2433] sm:$0x3] %v2432
        %vm2435 = vcmask 254976
        %2436 = vst.msk [vmem:[#allocation2] sm:$0x3] %vm2435, %v2411
        %vm2437 = vcmask 123904
        %2438 = vst.msk [vmem:[#allocation3] sm:$0x3] %vm2437, %v2408
        %s2439 = sand.u32 %s451, 1
        %s2440 = scalar_lea.sflag [#allocation6], %s2439
        %s2441 = sand.u32 %s451, 1
        %s2442 = smul.addr %s2441, 8
        %s2443 = scalar_lea.vmem [#allocation15], %s2442
        // Predicated region
        $region121: #{tpu_custom_call.1} parent=87 // pred_check
          %p2444 = pneg %p461
        $region122: #{tpu_custom_call.1} parent=87 // pred_check_branch
          %2446 = sbr.rel (%p2444) target = $region124
        $region123: #{tpu_custom_call.1} parent=87 // pred_region
          %s2447 = smul.u32 4, %s39
          %s2449 = ssub.s32 128, 128
          %2450 = vsyncadd %s2440, %s2449
          %s2451 = sadd.s32 %s38, %s2447
          %s2452 = smul.addr %s2451, 32
          %s2453 = scalar_lea.hbm %s17, %s2452
          %s2454 = sshll.u32 %s2443, 4
          %s2455 = int_to_ptr.vmem [resolvable:$true] %s2454
          %2460 = dma.vmem_to_hbm [thread:$0]  %s2455, 128, %s2453, %s2440, 32, 32, 2
        $region124: #{tpu_custom_call.1} parent=87 // pred_fallthru
          _
      $region88: #{tpu_custom_call.1} parent=5 // pred_fallthru
        _
      %p2461 = scmp.le.s32.totalorder 2, %s29
      // Predicated region
      $region125: #{tpu_custom_call.1} parent=5 // pred_check
        %p2462 = pneg %p2461
      $region126: #{tpu_custom_call.1} parent=5 // pred_check_branch
        %2464 = sbr.rel (%p2462) target = $region128
      $region127: #{tpu_custom_call.1} parent=5 // pred_region
        %s2465 = ssub.s32 %s29, 2
        // Predicated region
        $region129: #{tpu_custom_call.1} parent=127 // pred_check
          %p2466 = pneg %p467
        $region130: #{tpu_custom_call.1} parent=127 // pred_check_branch
          %2468 = sbr.rel (%p2466) target = $region132
        $region131: #{tpu_custom_call.1} parent=127 // pred_region
          %s2469 = sand.u32 %s452, 1
          %s2470 = scalar_lea.sflag [#allocation6], %s2469
          %s2471 = sand.u32 %s452, 1
          %s2472 = smul.addr %s2471, 8
          %s2473 = scalar_lea.vmem [#allocation15], %s2472
          %2474 = dma.done %s2470, 128
        $region132: #{tpu_custom_call.1} parent=127 // pred_fallthru
          _
      $region128: #{tpu_custom_call.1} parent=5 // pred_fallthru
        _
    $region6: #{tpu_custom_call.1} parent=1 // loop_footer
      %s33 = sadd.s32 1, %s29
    $region7: #{tpu_custom_call.1} parent=1 // loop_footer_branch
      %28 = sbr.rel target = $region3
    $region8: #{tpu_custom_call.1} parent=1 // loop_exit
      _
    %2475 = vsyncpa [#allocation5], 1
    %s2476 = scalar_lea.sflag [#allocation5], 1
    %2477 = vsyncpa %s2476, 1
    %2478 = vsyncpa [#allocation8], 1
    %2479 = vsyncpa [#allocation14], 1
    %2480 = vsyncpa [#allocation6], 1
    %s2481 = scalar_lea.sflag [#allocation6], 1
    %2482 = vsyncpa %s2481, 1

</llo_original>
